<compile_context>
chip_gen: v7x
topology: tpu7x:2x2x1
jax: 0.10.0
libtpu: 0.0.40
codegen_flags: <defaults>
</compile_context>

<pallas_src>
import random

import jax
import jax.numpy as jnp
from jax.experimental import pallas as pl
from jax.experimental.pallas import tpu as pltpu

# ----------------------------- model dimensions ------------------------------
INPUT_DIM = 32    # src vocab
OUTPUT_DIM = 32   # trg vocab  (decoder.output_dim)
ENC_EMB = 16
DEC_EMB = 16
ENC_HID = 32
DEC_HID = 32
SRC_LEN = 8
TRG_LEN = 8
BATCH = 2
E2 = 2 * ENC_HID  # bidirectional encoder output width


# --------------------------------- helpers -----------------------------------
def _gru_gates(gi, h, whh, bhh):
    """PyTorch-semantics GRU gates given the precomputed input projection gi."""
    H = h.shape[-1]
    gh = jnp.dot(h, whh, preferred_element_type=jnp.float32) + bhh
    r = jax.nn.sigmoid(gi[:, 0:H] + gh[:, 0:H])
    z = jax.nn.sigmoid(gi[:, H:2 * H] + gh[:, H:2 * H])
    n = jnp.tanh(gi[:, 2 * H:3 * H] + r * gh[:, 2 * H:3 * H])
    return (1.0 - z) * n + z * h


def _pinned(shape):
    """Whole-array BlockSpec with a constant index_map (block fetched once)."""
    nd = len(shape)

    def idx(*_):
        return (0,) * nd

    return pl.BlockSpec(shape, idx)


# ------------------------------ encoder kernel --------------------------------
def encoder_kernel(emb_ref, wihf_ref, bihf_ref, wihb_ref, bihb_ref,
                   whhf_ref, bhhf_ref, whhb_ref, bhhb_ref,
                   fcwf_ref, fcwb_ref, fcb_ref, waef_ref, waeb_ref,
                   encf_ref, encb_ref, keys_ref, hid_ref):
    S, B = SRC_LEN, BATCH
    H = ENC_HID
    emb = emb_ref[...]                                              # (S*B, ENC_EMB)

    # hoisted GRU input projection for all timesteps, both directions (2 matmuls)
    gi_f = (jnp.dot(emb, wihf_ref[...], preferred_element_type=jnp.float32)
            + bihf_ref[...])                                        # (S*B, 3H)
    gi_b = (jnp.dot(emb, wihb_ref[...], preferred_element_type=jnp.float32)
            + bihb_ref[...])

    whh_f = whhf_ref[...]; bhh_f = bhhf_ref[...]
    whh_b = whhb_ref[...]; bhh_b = bhhb_ref[...]

    # forward recurrence; per-step hidden stored straight into the output ref
    h_f = jnp.zeros((B, H), jnp.float32)
    for t in range(S):
        h_f = _gru_gates(gi_f[t * B:(t + 1) * B, :], h_f, whh_f, bhh_f)
        encf_ref[t * B:(t + 1) * B, :] = h_f

    # backward recurrence
    h_b = jnp.zeros((B, H), jnp.float32)
    for t in range(S - 1, -1, -1):
        h_b = _gru_gates(gi_b[t * B:(t + 1) * B, :], h_b, whh_b, bhh_b)
        encb_ref[t * B:(t + 1) * B, :] = h_b

    # attention keys enc @ Wa_e: ONE stacked matmul per direction, full-slab store
    keys_ref[...] = (
        jnp.dot(encf_ref[...], waef_ref[...], preferred_element_type=jnp.float32)
        + jnp.dot(encb_ref[...], waeb_ref[...], preferred_element_type=jnp.float32))

    # initial decoder hidden = tanh(cat(h_fwd, h_bwd) @ fc_w + b), fc_w pre-split
    hid_ref[...] = jnp.tanh(
        jnp.dot(h_f, fcwf_ref[...], preferred_element_type=jnp.float32)
        + jnp.dot(h_b, fcwb_ref[...], preferred_element_type=jnp.float32)
        + fcb_ref[...])


def encoder_forward(emb2, params):
    SB = SRC_LEN * BATCH
    out_shape = (
        jax.ShapeDtypeStruct((SB, ENC_HID), jnp.float32),   # enc fwd outputs
        jax.ShapeDtypeStruct((SB, ENC_HID), jnp.float32),   # enc bwd outputs
        jax.ShapeDtypeStruct((SB, DEC_HID), jnp.float32),   # attention keys
        jax.ShapeDtypeStruct((BATCH, DEC_HID), jnp.float32))  # initial dec hidden
    return pl.pallas_call(encoder_kernel, out_shape=out_shape)(
        emb2,
        params["enc_wih_f"], params["enc_bih_f"],
        params["enc_wih_b"], params["enc_bih_b"],
        params["enc_whh_f"], params["enc_bhh_f"],
        params["enc_whh_b"], params["enc_bhh_b"],
        params["enc_fc_w"][:ENC_HID], params["enc_fc_w"][ENC_HID:], params["enc_fc_b"],
        params["attn_we"][:ENC_HID], params["attn_we"][ENC_HID:])


# --------------------------- fused decoder-loop kernel ------------------------
def decoder_kernel(tf_ref,                                  # SMEM: teacher-force mask
                   hid0_ref, encf_ref, encb_ref, keys_ref, trgoh_ref, tbl_ref,
                   wah_ref, ba_ref, v_ref,
                   wihe_ref, wihcf_ref, wihcb_ref, whh_ref, bih_ref, bhh_ref,
                   fch_ref, fccf_ref, fccb_ref, fce_ref, fcb_ref,
                   pred_ref,
                   hid_sc, emb_sc):
    i = pl.program_id(0)                     # step i computes decoder timestep t = i+1
    S = keys_ref.shape[0]
    B, DH = hid_sc.shape
    OUT = pred_ref.shape[-1]

    @pl.when(i == 0)
    def _init():
        hid_sc[...] = hid0_ref[...]
        # first decoder input token is trg[0]
        emb_sc[...] = jnp.dot(trgoh_ref[0], tbl_ref[...],
                              preferred_element_type=jnp.float32)

    h = hid_sc[...]                          # (B, DEC_HID)
    emb = emb_sc[...]                        # (B, DEC_EMB)

    # ---- additive attention, batched over (S, B); keys = enc @ Wa_e precomputed ----
    e_h = jnp.dot(h, wah_ref[...], preferred_element_type=jnp.float32) + ba_ref[...]
    energy = jnp.tanh(keys_ref[...] + e_h)                           # (S, B, DH)
    score = jnp.sum(energy * v_ref[...], axis=-1, keepdims=True)     # (S, B, 1)
    m = jnp.max(score, axis=0, keepdims=True)                        # (1, B, 1)
    ex = jnp.exp(score - m)
    den = jnp.sum(ex, axis=0, keepdims=True)
    a = ex / den                              # exact softmax (matches torch reference)
    ctx_f = jnp.sum(a * encf_ref[...], axis=0)                       # (B, ENC_HID)
    ctx_b = jnp.sum(a * encb_ref[...], axis=0)                       # (B, ENC_HID)

    # ---- decoder GRU cell (cat(embedded, weighted) removed via weight split) ----
    gi = (jnp.dot(emb, wihe_ref[...], preferred_element_type=jnp.float32)
          + jnp.dot(ctx_f, wihcf_ref[...], preferred_element_type=jnp.float32)
          + jnp.dot(ctx_b, wihcb_ref[...], preferred_element_type=jnp.float32)
          + bih_ref[...])
    gh = jnp.dot(h, whh_ref[...], preferred_element_type=jnp.float32) + bhh_ref[...]
    r = jax.nn.sigmoid(gi[:, 0:DH] + gh[:, 0:DH])
    z = jax.nn.sigmoid(gi[:, DH:2 * DH] + gh[:, DH:2 * DH])
    n = jnp.tanh(gi[:, 2 * DH:3 * DH] + r * gh[:, 2 * DH:3 * DH])
    h_new = (1.0 - z) * n + z * h

    # ---- fc_out over cat(gru_out, weighted, embedded), concat removed likewise ----
    pred = (jnp.dot(h_new, fch_ref[...], preferred_element_type=jnp.float32)
            + jnp.dot(ctx_f, fccf_ref[...], preferred_element_type=jnp.float32)
            + jnp.dot(ctx_b, fccb_ref[...], preferred_element_type=jnp.float32)
            + jnp.dot(emb, fce_ref[...], preferred_element_type=jnp.float32)
            + fcb_ref[...])                                           # (B, OUT)

    pred_ref[0] = pred                        # per-step output block
    hid_sc[...] = h_new                       # hidden carried in VMEM scratch

    # ---- next input token: teacher forcing vs argmax(pred), fully in-kernel ----
    t = i + 1
    lane = jax.lax.broadcasted_iota(jnp.int32, (B, OUT), 1)
    mx = jnp.max(pred, axis=1, keepdims=True)
    cand = jnp.where(pred == mx, lane, OUT)
    amax = jnp.min(cand, axis=1, keepdims=True)          # first-max index (torch argmax)
    pred_oh = (lane == amax).astype(jnp.float32)         # (B, OUT) one-hot of top1
    tf = (tf_ref[t] != 0).astype(jnp.float32)            # scalar from SMEM
    tok_oh = tf * trgoh_ref[t] + (1.0 - tf) * pred_oh
    emb_sc[...] = jnp.dot(tok_oh, tbl_ref[...], preferred_element_type=jnp.float32)


def decoder_forward(tf_i32, hidden0, enc_f, enc_b, keys, trg_oh, dw):
    T, B, OUT = trg_oh.shape
    DH = hidden0.shape[1]
    nsteps = T - 1

    operands = (hidden0, enc_f, enc_b, keys, trg_oh, dw["emb_tbl"],
                dw["attn_wh"], dw["attn_b"], dw["attn_v"],
                dw["wih_e"], dw["wih_cf"], dw["wih_cb"],
                dw["whh"], dw["bih"], dw["bhh"],
                dw["fc_h"], dw["fc_cf"], dw["fc_cb"], dw["fc_e"], dw["fc_b"])
    in_specs = [_pinned(op.shape) for op in operands]

    grid_spec = pltpu.PrefetchScalarGridSpec(
        num_scalar_prefetch=1,
        grid=(nsteps,),
        in_specs=in_specs,
        out_specs=pl.BlockSpec((1, B, OUT), lambda i, tf: (i, 0, 0)),
        scratch_shapes=[pltpu.VMEM((B, DH), jnp.float32),       # hidden state
                        pltpu.VMEM((B, DEC_EMB), jnp.float32)])  # next-token embedding

    return pl.pallas_call(
        decoder_kernel,
        out_shape=jax.ShapeDtypeStruct((nsteps, B, OUT), jnp.float32),
        grid_spec=grid_spec,
        compiler_params=pltpu.CompilerParams(dimension_semantics=("arbitrary",)),
    )(tf_i32, *operands)


# ------------------------------ parameter init -------------------------------
def init_params(key):
    ks = iter(jax.random.split(key, 32))

    def u(shape, fan_in):
        s = 1.0 / jnp.sqrt(jnp.float32(fan_in))
        return jax.random.uniform(next(ks), shape, jnp.float32, -s, s)

    return {
        "enc_emb": jax.random.normal(next(ks), (INPUT_DIM, ENC_EMB), jnp.float32),
        "dec_emb": jax.random.normal(next(ks), (OUTPUT_DIM, DEC_EMB), jnp.float32),
        "enc_wih_f": u((ENC_EMB, 3 * ENC_HID), ENC_HID),
        "enc_whh_f": u((ENC_HID, 3 * ENC_HID), ENC_HID),
        "enc_bih_f": u((1, 3 * ENC_HID), ENC_HID),
        "enc_bhh_f": u((1, 3 * ENC_HID), ENC_HID),
        "enc_wih_b": u((ENC_EMB, 3 * ENC_HID), ENC_HID),
        "enc_whh_b": u((ENC_HID, 3 * ENC_HID), ENC_HID),
        "enc_bih_b": u((1, 3 * ENC_HID), ENC_HID),
        "enc_bhh_b": u((1, 3 * ENC_HID), ENC_HID),
        "enc_fc_w": u((E2, DEC_HID), E2),
        "enc_fc_b": u((1, DEC_HID), E2),
        "attn_wh": u((DEC_HID, DEC_HID), E2 + DEC_HID),
        "attn_we": u((E2, DEC_HID), E2 + DEC_HID),
        "attn_b": u((1, DEC_HID), E2 + DEC_HID),
        "attn_v": u((1, DEC_HID), DEC_HID),
        "dec_wih": u((DEC_EMB + E2, 3 * DEC_HID), DEC_HID),
        "dec_whh": u((DEC_HID, 3 * DEC_HID), DEC_HID),
        "dec_bih": u((1, 3 * DEC_HID), DEC_HID),
        "dec_bhh": u((1, 3 * DEC_HID), DEC_HID),
        "dec_fc_w": u((DEC_HID + E2 + DEC_EMB, OUTPUT_DIM), DEC_HID + E2 + DEC_EMB),
        "dec_fc_b": u((1, OUTPUT_DIM), DEC_HID + E2 + DEC_EMB),
    }


# ------------------------------- forward pass --------------------------------
@jax.jit
def _seq2seq_forward(params, src, trg, tf_mask):
    S, B = src.shape
    T = trg.shape[0]

    # ------------------------------- encoder ---------------------------------
    emb2 = params["enc_emb"][src.reshape(-1)]                 # (S*B, ENC_EMB) gather
    encf2, encb2, keys2, hidden0 = encoder_forward(emb2, params)
    enc_f = encf2.reshape(S, B, ENC_HID)
    enc_b = encb2.reshape(S, B, ENC_HID)
    keys = keys2.reshape(S, B, DEC_HID)

    # split decoder weights ONCE so every per-step concatenation disappears
    dw = {
        "emb_tbl": params["dec_emb"],
        "attn_wh": params["attn_wh"], "attn_b": params["attn_b"], "attn_v": params["attn_v"],
        "wih_e": params["dec_wih"][:DEC_EMB],
        "wih_cf": params["dec_wih"][DEC_EMB:DEC_EMB + ENC_HID],
        "wih_cb": params["dec_wih"][DEC_EMB + ENC_HID:],
        "whh": params["dec_whh"], "bih": params["dec_bih"], "bhh": params["dec_bhh"],
        "fc_h": params["dec_fc_w"][:DEC_HID],
        "fc_cf": params["dec_fc_w"][DEC_HID:DEC_HID + ENC_HID],
        "fc_cb": params["dec_fc_w"][DEC_HID + ENC_HID:DEC_HID + E2],
        "fc_e": params["dec_fc_w"][DEC_HID + E2:],
        "fc_b": params["dec_fc_b"],
    }

    # ------------------------- decoder (one fused kernel) --------------------
    trg_oh = jax.nn.one_hot(trg, OUTPUT_DIM, dtype=jnp.float32)   # (T, B, OUT)
    preds = decoder_forward(tf_mask.astype(jnp.int32), hidden0,
                            enc_f, enc_b, keys, trg_oh, dw)       # (T-1, B, OUT)
    zeros0 = jnp.zeros((1, B, OUTPUT_DIM), jnp.float32)           # outputs[0] stays zero
    return jnp.concatenate([zeros0, preds], axis=0)               # (T, B, OUT)


def seq2seq_forward(params, src, trg, teacher_forcing_ratio=0.5, seed=0):
    """Mirrors Seq2Seq.forward; per-step teacher forcing drawn host-side per call."""
    rng = random.Random(seed)  # deterministic stand-in for torch's global random state
    tf_mask = jnp.asarray(
        [False] + [rng.random() < teacher_forcing_ratio for _ in range(trg.shape[0] - 1)],
        dtype=jnp.bool_)
    return _seq2seq_forward(params, src, trg, tf_mask)


# ------------------------------------ main ------------------------------------
if __name__ == "__main__":
    key = jax.random.PRNGKey(0)
    pkey, skey, tkey = jax.random.split(key, 3)
    params = init_params(pkey)

    src = jax.random.randint(skey, (SRC_LEN, BATCH), 0, INPUT_DIM, dtype=jnp.int32)
    trg = jax.random.randint(tkey, (TRG_LEN, BATCH), 0, OUTPUT_DIM, dtype=jnp.int32)

    outputs = seq2seq_forward(params, src, trg, teacher_forcing_ratio=0.5, seed=0)
    outputs = jax.block_until_ready(outputs)

    assert outputs.shape == (TRG_LEN, BATCH, OUTPUT_DIM)
    assert bool(jnp.all(jnp.isfinite(outputs)))
    assert bool(jnp.all(outputs[0] == 0.0))
    # TODO(synk): embedding dropout is omitted (eval-mode identity); teacher forcing
    # uses a seeded host-side RNG (bool mask passed into SMEM) instead of torch's
    # global random state.
    print("KERNEL_OK")
</pallas_src>

<mosaic_0001>
module attributes {stable_mosaic.version = 11 : i64} {
  func.func @encoder_kernel(%arg0: memref<16x16xf32, #tpu.memory_space<vmem>>, %arg1: memref<16x96xf32, #tpu.memory_space<vmem>>, %arg2: memref<1x96xf32, #tpu.memory_space<vmem>>, %arg3: memref<16x96xf32, #tpu.memory_space<vmem>>, %arg4: memref<1x96xf32, #tpu.memory_space<vmem>>, %arg5: memref<32x96xf32, #tpu.memory_space<vmem>>, %arg6: memref<1x96xf32, #tpu.memory_space<vmem>>, %arg7: memref<32x96xf32, #tpu.memory_space<vmem>>, %arg8: memref<1x96xf32, #tpu.memory_space<vmem>>, %arg9: memref<32x32xf32, #tpu.memory_space<vmem>>, %arg10: memref<32x32xf32, #tpu.memory_space<vmem>>, %arg11: memref<1x32xf32, #tpu.memory_space<vmem>>, %arg12: memref<32x32xf32, #tpu.memory_space<vmem>>, %arg13: memref<32x32xf32, #tpu.memory_space<vmem>>, %arg14: memref<16x32xf32, #tpu.memory_space<vmem>>, %arg15: memref<16x32xf32, #tpu.memory_space<vmem>>, %arg16: memref<16x32xf32, #tpu.memory_space<vmem>>, %arg17: memref<2x32xf32, #tpu.memory_space<vmem>>) attributes {dimension_semantics = [], scalar_prefetch = 0 : i64, scratch_operands = 0 : i64, tpu.core_type = #tpu.core_type<tc>} {
    %c0 = arith.constant 0 : index
    %c0_0 = arith.constant 0 : index
    %0 = vector.load %arg0[%c0, %c0_0] : memref<16x16xf32, #tpu.memory_space<vmem>>, vector<16x16xf32>
    %c0_1 = arith.constant 0 : index
    %c0_2 = arith.constant 0 : index
    %1 = vector.load %arg1[%c0_1, %c0_2] : memref<16x96xf32, #tpu.memory_space<vmem>>, vector<16x96xf32>
    %cst = arith.constant dense<0.000000e+00> : vector<16x96xf32>
    %2 = tpu.matmul %0, %1, %cst {dimension_numbers = #tpu.dot_dimension_numbers<[1], [0], [0], [1], [0, 0, 1, 1], [], []>} : vector<16x16xf32>, vector<16x96xf32>, vector<16x96xf32> -> vector<16x96xf32>
    %c0_3 = arith.constant 0 : index
    %c0_4 = arith.constant 0 : index
    %3 = vector.load %arg2[%c0_3, %c0_4] : memref<1x96xf32, #tpu.memory_space<vmem>>, vector<1x96xf32>
    %4 = vector.broadcast %3 : vector<1x96xf32> to vector<16x96xf32>
    %5 = arith.addf %2, %4 : vector<16x96xf32>
    %c0_5 = arith.constant 0 : index
    %c0_6 = arith.constant 0 : index
    %6 = vector.load %arg3[%c0_5, %c0_6] : memref<16x96xf32, #tpu.memory_space<vmem>>, vector<16x96xf32>
    %cst_7 = arith.constant dense<0.000000e+00> : vector<16x96xf32>
    %7 = tpu.matmul %0, %6, %cst_7 {dimension_numbers = #tpu.dot_dimension_numbers<[1], [0], [0], [1], [0, 0, 1, 1], [], []>} : vector<16x16xf32>, vector<16x96xf32>, vector<16x96xf32> -> vector<16x96xf32>
    %c0_8 = arith.constant 0 : index
    %c0_9 = arith.constant 0 : index
    %8 = vector.load %arg4[%c0_8, %c0_9] : memref<1x96xf32, #tpu.memory_space<vmem>>, vector<1x96xf32>
    %9 = vector.broadcast %8 : vector<1x96xf32> to vector<16x96xf32>
    %10 = arith.addf %7, %9 : vector<16x96xf32>
    %c0_10 = arith.constant 0 : index
    %c0_11 = arith.constant 0 : index
    %11 = vector.load %arg5[%c0_10, %c0_11] : memref<32x96xf32, #tpu.memory_space<vmem>>, vector<32x96xf32>
    %c0_12 = arith.constant 0 : index
    %c0_13 = arith.constant 0 : index
    %12 = vector.load %arg6[%c0_12, %c0_13] : memref<1x96xf32, #tpu.memory_space<vmem>>, vector<1x96xf32>
    %c0_14 = arith.constant 0 : index
    %c0_15 = arith.constant 0 : index
    %13 = vector.load %arg7[%c0_14, %c0_15] : memref<32x96xf32, #tpu.memory_space<vmem>>, vector<32x96xf32>
    %c0_16 = arith.constant 0 : index
    %c0_17 = arith.constant 0 : index
    %14 = vector.load %arg8[%c0_16, %c0_17] : memref<1x96xf32, #tpu.memory_space<vmem>>, vector<1x96xf32>
    %cst_18 = arith.constant 0.000000e+00 : f32
    %15 = vector.broadcast %cst_18 : f32 to vector<2x32xf32>
    %16 = vector.extract_strided_slice %5 {offsets = [0, 0], sizes = [2, 96], strides = [1, 1]} : vector<16x96xf32> to vector<2x96xf32>
    %cst_19 = arith.constant dense<0.000000e+00> : vector<2x96xf32>
    %17 = tpu.matmul %15, %11, %cst_19 {dimension_numbers = #tpu.dot_dimension_numbers<[1], [0], [0], [1], [0, 0, 1, 1], [], []>} : vector<2x32xf32>, vector<32x96xf32>, vector<2x96xf32> -> vector<2x96xf32>
    %18 = vector.broadcast %12 : vector<1x96xf32> to vector<2x96xf32>
    %19 = arith.addf %17, %18 : vector<2x96xf32>
    %20 = vector.extract_strided_slice %16 {offsets = [0, 0], sizes = [2, 32], strides = [1, 1]} : vector<2x96xf32> to vector<2x32xf32>
    %21 = vector.extract_strided_slice %19 {offsets = [0, 0], sizes = [2, 32], strides = [1, 1]} : vector<2x96xf32> to vector<2x32xf32>
    %22 = arith.addf %20, %21 : vector<2x32xf32>
    %23 = arith.negf %22 : vector<2x32xf32>
    %24 = math.exp %23 : vector<2x32xf32>
    %cst_20 = arith.constant 1.000000e+00 : f32
    %25 = vector.broadcast %cst_20 : f32 to vector<2x32xf32>
    %26 = arith.addf %25, %24 : vector<2x32xf32>
    %27 = arith.divf %25, %26 : vector<2x32xf32>
    %28 = vector.extract_strided_slice %16 {offsets = [0, 32], sizes = [2, 32], strides = [1, 1]} : vector<2x96xf32> to vector<2x32xf32>
    %29 = vector.extract_strided_slice %19 {offsets = [0, 32], sizes = [2, 32], strides = [1, 1]} : vector<2x96xf32> to vector<2x32xf32>
    %30 = arith.addf %28, %29 : vector<2x32xf32>
    %31 = arith.negf %30 : vector<2x32xf32>
    %32 = math.exp %31 : vector<2x32xf32>
    %cst_21 = arith.constant 1.000000e+00 : f32
    %33 = vector.broadcast %cst_21 : f32 to vector<2x32xf32>
    %34 = arith.addf %33, %32 : vector<2x32xf32>
    %35 = arith.divf %33, %34 : vector<2x32xf32>
    %36 = vector.extract_strided_slice %16 {offsets = [0, 64], sizes = [2, 32], strides = [1, 1]} : vector<2x96xf32> to vector<2x32xf32>
    %37 = vector.extract_strided_slice %19 {offsets = [0, 64], sizes = [2, 32], strides = [1, 1]} : vector<2x96xf32> to vector<2x32xf32>
    %38 = arith.mulf %27, %37 : vector<2x32xf32>
    %39 = arith.addf %36, %38 : vector<2x32xf32>
    %40 = math.tanh %39 : vector<2x32xf32>
    %cst_22 = arith.constant 1.000000e+00 : f32
    %41 = vector.broadcast %cst_22 : f32 to vector<2x32xf32>
    %42 = arith.subf %41, %35 : vector<2x32xf32>
    %43 = arith.mulf %42, %40 : vector<2x32xf32>
    %44 = arith.mulf %35, %15 : vector<2x32xf32>
    %45 = arith.addf %43, %44 : vector<2x32xf32>
    %c0_23 = arith.constant 0 : index
    %c0_24 = arith.constant 0 : index
    %46 = vector.load %arg14[%c0_23, %c0_24] : memref<16x32xf32, #tpu.memory_space<vmem>>, vector<2x32xf32>
    tpu.vector_store %arg14[%c0_23, %c0_24], %45 {strides = array<i32>} : memref<16x32xf32, #tpu.memory_space<vmem>>, vector<2x32xf32>,
    %47 = vector.extract_strided_slice %5 {offsets = [2, 0], sizes = [2, 96], strides = [1, 1]} : vector<16x96xf32> to vector<2x96xf32>
    %cst_25 = arith.constant dense<0.000000e+00> : vector<2x96xf32>
    %48 = tpu.matmul %45, %11, %cst_25 {dimension_numbers = #tpu.dot_dimension_numbers<[1], [0], [0], [1], [0, 0, 1, 1], [], []>} : vector<2x32xf32>, vector<32x96xf32>, vector<2x96xf32> -> vector<2x96xf32>
    %49 = vector.broadcast %12 : vector<1x96xf32> to vector<2x96xf32>
    %50 = arith.addf %48, %49 : vector<2x96xf32>
    %51 = vector.extract_strided_slice %47 {offsets = [0, 0], sizes = [2, 32], strides = [1, 1]} : vector<2x96xf32> to vector<2x32xf32>
    %52 = vector.extract_strided_slice %50 {offsets = [0, 0], sizes = [2, 32], strides = [1, 1]} : vector<2x96xf32> to vector<2x32xf32>
    %53 = arith.addf %51, %52 : vector<2x32xf32>
    %54 = arith.negf %53 : vector<2x32xf32>
    %55 = math.exp %54 : vector<2x32xf32>
    %cst_26 = arith.constant 1.000000e+00 : f32
    %56 = vector.broadcast %cst_26 : f32 to vector<2x32xf32>
    %57 = arith.addf %56, %55 : vector<2x32xf32>
    %58 = arith.divf %56, %57 : vector<2x32xf32>
    %59 = vector.extract_strided_slice %47 {offsets = [0, 32], sizes = [2, 32], strides = [1, 1]} : vector<2x96xf32> to vector<2x32xf32>
    %60 = vector.extract_strided_slice %50 {offsets = [0, 32], sizes = [2, 32], strides = [1, 1]} : vector<2x96xf32> to vector<2x32xf32>
    %61 = arith.addf %59, %60 : vector<2x32xf32>
    %62 = arith.negf %61 : vector<2x32xf32>
    %63 = math.exp %62 : vector<2x32xf32>
    %cst_27 = arith.constant 1.000000e+00 : f32
    %64 = vector.broadcast %cst_27 : f32 to vector<2x32xf32>
    %65 = arith.addf %64, %63 : vector<2x32xf32>
    %66 = arith.divf %64, %65 : vector<2x32xf32>
    %67 = vector.extract_strided_slice %47 {offsets = [0, 64], sizes = [2, 32], strides = [1, 1]} : vector<2x96xf32> to vector<2x32xf32>
    %68 = vector.extract_strided_slice %50 {offsets = [0, 64], sizes = [2, 32], strides = [1, 1]} : vector<2x96xf32> to vector<2x32xf32>
    %69 = arith.mulf %58, %68 : vector<2x32xf32>
    %70 = arith.addf %67, %69 : vector<2x32xf32>
    %71 = math.tanh %70 : vector<2x32xf32>
    %cst_28 = arith.constant 1.000000e+00 : f32
    %72 = vector.broadcast %cst_28 : f32 to vector<2x32xf32>
    %73 = arith.subf %72, %66 : vector<2x32xf32>
    %74 = arith.mulf %73, %71 : vector<2x32xf32>
    %75 = arith.mulf %66, %45 : vector<2x32xf32>
    %76 = arith.addf %74, %75 : vector<2x32xf32>
    %c2 = arith.constant 2 : index
    %c0_29 = arith.constant 0 : index
    %77 = vector.load %arg14[%c2, %c0_29] : memref<16x32xf32, #tpu.memory_space<vmem>>, vector<2x32xf32>
    tpu.vector_store %arg14[%c2, %c0_29], %76 {strides = array<i32>} : memref<16x32xf32, #tpu.memory_space<vmem>>, vector<2x32xf32>,
    %78 = vector.extract_strided_slice %5 {offsets = [4, 0], sizes = [2, 96], strides = [1, 1]} : vector<16x96xf32> to vector<2x96xf32>
    %cst_30 = arith.constant dense<0.000000e+00> : vector<2x96xf32>
    %79 = tpu.matmul %76, %11, %cst_30 {dimension_numbers = #tpu.dot_dimension_numbers<[1], [0], [0], [1], [0, 0, 1, 1], [], []>} : vector<2x32xf32>, vector<32x96xf32>, vector<2x96xf32> -> vector<2x96xf32>
    %80 = vector.broadcast %12 : vector<1x96xf32> to vector<2x96xf32>
    %81 = arith.addf %79, %80 : vector<2x96xf32>
    %82 = vector.extract_strided_slice %78 {offsets = [0, 0], sizes = [2, 32], strides = [1, 1]} : vector<2x96xf32> to vector<2x32xf32>
    %83 = vector.extract_strided_slice %81 {offsets = [0, 0], sizes = [2, 32], strides = [1, 1]} : vector<2x96xf32> to vector<2x32xf32>
    %84 = arith.addf %82, %83 : vector<2x32xf32>
    %85 = arith.negf %84 : vector<2x32xf32>
    %86 = math.exp %85 : vector<2x32xf32>
    %cst_31 = arith.constant 1.000000e+00 : f32
    %87 = vector.broadcast %cst_31 : f32 to vector<2x32xf32>
    %88 = arith.addf %87, %86 : vector<2x32xf32>
    %89 = arith.divf %87, %88 : vector<2x32xf32>
    %90 = vector.extract_strided_slice %78 {offsets = [0, 32], sizes = [2, 32], strides = [1, 1]} : vector<2x96xf32> to vector<2x32xf32>
    %91 = vector.extract_strided_slice %81 {offsets = [0, 32], sizes = [2, 32], strides = [1, 1]} : vector<2x96xf32> to vector<2x32xf32>
    %92 = arith.addf %90, %91 : vector<2x32xf32>
    %93 = arith.negf %92 : vector<2x32xf32>
    %94 = math.exp %93 : vector<2x32xf32>
    %cst_32 = arith.constant 1.000000e+00 : f32
    %95 = vector.broadcast %cst_32 : f32 to vector<2x32xf32>
    %96 = arith.addf %95, %94 : vector<2x32xf32>
    %97 = arith.divf %95, %96 : vector<2x32xf32>
    %98 = vector.extract_strided_slice %78 {offsets = [0, 64], sizes = [2, 32], strides = [1, 1]} : vector<2x96xf32> to vector<2x32xf32>
    %99 = vector.extract_strided_slice %81 {offsets = [0, 64], sizes = [2, 32], strides = [1, 1]} : vector<2x96xf32> to vector<2x32xf32>
    %100 = arith.mulf %89, %99 : vector<2x32xf32>
    %101 = arith.addf %98, %100 : vector<2x32xf32>
    %102 = math.tanh %101 : vector<2x32xf32>
    %cst_33 = arith.constant 1.000000e+00 : f32
    %103 = vector.broadcast %cst_33 : f32 to vector<2x32xf32>
    %104 = arith.subf %103, %97 : vector<2x32xf32>
    %105 = arith.mulf %104, %102 : vector<2x32xf32>
    %106 = arith.mulf %97, %76 : vector<2x32xf32>
    %107 = arith.addf %105, %106 : vector<2x32xf32>
    %c4 = arith.constant 4 : index
    %c0_34 = arith.constant 0 : index
    %108 = vector.load %arg14[%c4, %c0_34] : memref<16x32xf32, #tpu.memory_space<vmem>>, vector<2x32xf32>
    tpu.vector_store %arg14[%c4, %c0_34], %107 {strides = array<i32>} : memref<16x32xf32, #tpu.memory_space<vmem>>, vector<2x32xf32>,
    %109 = vector.extract_strided_slice %5 {offsets = [6, 0], sizes = [2, 96], strides = [1, 1]} : vector<16x96xf32> to vector<2x96xf32>
    %cst_35 = arith.constant dense<0.000000e+00> : vector<2x96xf32>
    %110 = tpu.matmul %107, %11, %cst_35 {dimension_numbers = #tpu.dot_dimension_numbers<[1], [0], [0], [1], [0, 0, 1, 1], [], []>} : vector<2x32xf32>, vector<32x96xf32>, vector<2x96xf32> -> vector<2x96xf32>
    %111 = vector.broadcast %12 : vector<1x96xf32> to vector<2x96xf32>
    %112 = arith.addf %110, %111 : vector<2x96xf32>
    %113 = vector.extract_strided_slice %109 {offsets = [0, 0], sizes = [2, 32], strides = [1, 1]} : vector<2x96xf32> to vector<2x32xf32>
    %114 = vector.extract_strided_slice %112 {offsets = [0, 0], sizes = [2, 32], strides = [1, 1]} : vector<2x96xf32> to vector<2x32xf32>
    %115 = arith.addf %113, %114 : vector<2x32xf32>
    %116 = arith.negf %115 : vector<2x32xf32>
    %117 = math.exp %116 : vector<2x32xf32>
    %cst_36 = arith.constant 1.000000e+00 : f32
    %118 = vector.broadcast %cst_36 : f32 to vector<2x32xf32>
    %119 = arith.addf %118, %117 : vector<2x32xf32>
    %120 = arith.divf %118, %119 : vector<2x32xf32>
    %121 = vector.extract_strided_slice %109 {offsets = [0, 32], sizes = [2, 32], strides = [1, 1]} : vector<2x96xf32> to vector<2x32xf32>
    %122 = vector.extract_strided_slice %112 {offsets = [0, 32], sizes = [2, 32], strides = [1, 1]} : vector<2x96xf32> to vector<2x32xf32>
    %123 = arith.addf %121, %122 : vector<2x32xf32>
    %124 = arith.negf %123 : vector<2x32xf32>
    %125 = math.exp %124 : vector<2x32xf32>
    %cst_37 = arith.constant 1.000000e+00 : f32
    %126 = vector.broadcast %cst_37 : f32 to vector<2x32xf32>
    %127 = arith.addf %126, %125 : vector<2x32xf32>
    %128 = arith.divf %126, %127 : vector<2x32xf32>
    %129 = vector.extract_strided_slice %109 {offsets = [0, 64], sizes = [2, 32], strides = [1, 1]} : vector<2x96xf32> to vector<2x32xf32>
    %130 = vector.extract_strided_slice %112 {offsets = [0, 64], sizes = [2, 32], strides = [1, 1]} : vector<2x96xf32> to vector<2x32xf32>
    %131 = arith.mulf %120, %130 : vector<2x32xf32>
    %132 = arith.addf %129, %131 : vector<2x32xf32>
    %133 = math.tanh %132 : vector<2x32xf32>
    %cst_38 = arith.constant 1.000000e+00 : f32
    %134 = vector.broadcast %cst_38 : f32 to vector<2x32xf32>
    %135 = arith.subf %134, %128 : vector<2x32xf32>
    %136 = arith.mulf %135, %133 : vector<2x32xf32>
    %137 = arith.mulf %128, %107 : vector<2x32xf32>
    %138 = arith.addf %136, %137 : vector<2x32xf32>
    %c6 = arith.constant 6 : index
    %c0_39 = arith.constant 0 : index
    %139 = vector.load %arg14[%c6, %c0_39] : memref<16x32xf32, #tpu.memory_space<vmem>>, vector<2x32xf32>
    tpu.vector_store %arg14[%c6, %c0_39], %138 {strides = array<i32>} : memref<16x32xf32, #tpu.memory_space<vmem>>, vector<2x32xf32>,
    %140 = vector.extract_strided_slice %5 {offsets = [8, 0], sizes = [2, 96], strides = [1, 1]} : vector<16x96xf32> to vector<2x96xf32>
    %cst_40 = arith.constant dense<0.000000e+00> : vector<2x96xf32>
    %141 = tpu.matmul %138, %11, %cst_40 {dimension_numbers = #tpu.dot_dimension_numbers<[1], [0], [0], [1], [0, 0, 1, 1], [], []>} : vector<2x32xf32>, vector<32x96xf32>, vector<2x96xf32> -> vector<2x96xf32>
    %142 = vector.broadcast %12 : vector<1x96xf32> to vector<2x96xf32>
    %143 = arith.addf %141, %142 : vector<2x96xf32>
    %144 = vector.extract_strided_slice %140 {offsets = [0, 0], sizes = [2, 32], strides = [1, 1]} : vector<2x96xf32> to vector<2x32xf32>
    %145 = vector.extract_strided_slice %143 {offsets = [0, 0], sizes = [2, 32], strides = [1, 1]} : vector<2x96xf32> to vector<2x32xf32>
    %146 = arith.addf %144, %145 : vector<2x32xf32>
    %147 = arith.negf %146 : vector<2x32xf32>
    %148 = math.exp %147 : vector<2x32xf32>
    %cst_41 = arith.constant 1.000000e+00 : f32
    %149 = vector.broadcast %cst_41 : f32 to vector<2x32xf32>
    %150 = arith.addf %149, %148 : vector<2x32xf32>
    %151 = arith.divf %149, %150 : vector<2x32xf32>
    %152 = vector.extract_strided_slice %140 {offsets = [0, 32], sizes = [2, 32], strides = [1, 1]} : vector<2x96xf32> to vector<2x32xf32>
    %153 = vector.extract_strided_slice %143 {offsets = [0, 32], sizes = [2, 32], strides = [1, 1]} : vector<2x96xf32> to vector<2x32xf32>
    %154 = arith.addf %152, %153 : vector<2x32xf32>
    %155 = arith.negf %154 : vector<2x32xf32>
    %156 = math.exp %155 : vector<2x32xf32>
    %cst_42 = arith.constant 1.000000e+00 : f32
    %157 = vector.broadcast %cst_42 : f32 to vector<2x32xf32>
    %158 = arith.addf %157, %156 : vector<2x32xf32>
    %159 = arith.divf %157, %158 : vector<2x32xf32>
    %160 = vector.extract_strided_slice %140 {offsets = [0, 64], sizes = [2, 32], strides = [1, 1]} : vector<2x96xf32> to vector<2x32xf32>
    %161 = vector.extract_strided_slice %143 {offsets = [0, 64], sizes = [2, 32], strides = [1, 1]} : vector<2x96xf32> to vector<2x32xf32>
    %162 = arith.mulf %151, %161 : vector<2x32xf32>
    %163 = arith.addf %160, %162 : vector<2x32xf32>
    %164 = math.tanh %163 : vector<2x32xf32>
    %cst_43 = arith.constant 1.000000e+00 : f32
    %165 = vector.broadcast %cst_43 : f32 to vector<2x32xf32>
    %166 = arith.subf %165, %159 : vector<2x32xf32>
    %167 = arith.mulf %166, %164 : vector<2x32xf32>
    %168 = arith.mulf %159, %138 : vector<2x32xf32>
    %169 = arith.addf %167, %168 : vector<2x32xf32>
    %c8 = arith.constant 8 : index
    %c0_44 = arith.constant 0 : index
    %170 = vector.load %arg14[%c8, %c0_44] : memref<16x32xf32, #tpu.memory_space<vmem>>, vector<2x32xf32>
    tpu.vector_store %arg14[%c8, %c0_44], %169 {strides = array<i32>} : memref<16x32xf32, #tpu.memory_space<vmem>>, vector<2x32xf32>,
    %171 = vector.extract_strided_slice %5 {offsets = [10, 0], sizes = [2, 96], strides = [1, 1]} : vector<16x96xf32> to vector<2x96xf32>
    %cst_45 = arith.constant dense<0.000000e+00> : vector<2x96xf32>
    %172 = tpu.matmul %169, %11, %cst_45 {dimension_numbers = #tpu.dot_dimension_numbers<[1], [0], [0], [1], [0, 0, 1, 1], [], []>} : vector<2x32xf32>, vector<32x96xf32>, vector<2x96xf32> -> vector<2x96xf32>
    %173 = vector.broadcast %12 : vector<1x96xf32> to vector<2x96xf32>
    %174 = arith.addf %172, %173 : vector<2x96xf32>
    %175 = vector.extract_strided_slice %171 {offsets = [0, 0], sizes = [2, 32], strides = [1, 1]} : vector<2x96xf32> to vector<2x32xf32>
    %176 = vector.extract_strided_slice %174 {offsets = [0, 0], sizes = [2, 32], strides = [1, 1]} : vector<2x96xf32> to vector<2x32xf32>
    %177 = arith.addf %175, %176 : vector<2x32xf32>
    %178 = arith.negf %177 : vector<2x32xf32>
    %179 = math.exp %178 : vector<2x32xf32>
    %cst_46 = arith.constant 1.000000e+00 : f32
    %180 = vector.broadcast %cst_46 : f32 to vector<2x32xf32>
    %181 = arith.addf %180, %179 : vector<2x32xf32>
    %182 = arith.divf %180, %181 : vector<2x32xf32>
    %183 = vector.extract_strided_slice %171 {offsets = [0, 32], sizes = [2, 32], strides = [1, 1]} : vector<2x96xf32> to vector<2x32xf32>
    %184 = vector.extract_strided_slice %174 {offsets = [0, 32], sizes = [2, 32], strides = [1, 1]} : vector<2x96xf32> to vector<2x32xf32>
    %185 = arith.addf %183, %184 : vector<2x32xf32>
    %186 = arith.negf %185 : vector<2x32xf32>
    %187 = math.exp %186 : vector<2x32xf32>
    %cst_47 = arith.constant 1.000000e+00 : f32
    %188 = vector.broadcast %cst_47 : f32 to vector<2x32xf32>
    %189 = arith.addf %188, %187 : vector<2x32xf32>
    %190 = arith.divf %188, %189 : vector<2x32xf32>
    %191 = vector.extract_strided_slice %171 {offsets = [0, 64], sizes = [2, 32], strides = [1, 1]} : vector<2x96xf32> to vector<2x32xf32>
    %192 = vector.extract_strided_slice %174 {offsets = [0, 64], sizes = [2, 32], strides = [1, 1]} : vector<2x96xf32> to vector<2x32xf32>
    %193 = arith.mulf %182, %192 : vector<2x32xf32>
    %194 = arith.addf %191, %193 : vector<2x32xf32>
    %195 = math.tanh %194 : vector<2x32xf32>
    %cst_48 = arith.constant 1.000000e+00 : f32
    %196 = vector.broadcast %cst_48 : f32 to vector<2x32xf32>
    %197 = arith.subf %196, %190 : vector<2x32xf32>
    %198 = arith.mulf %197, %195 : vector<2x32xf32>
    %199 = arith.mulf %190, %169 : vector<2x32xf32>
    %200 = arith.addf %198, %199 : vector<2x32xf32>
    %c10 = arith.constant 10 : index
    %c0_49 = arith.constant 0 : index
    %201 = vector.load %arg14[%c10, %c0_49] : memref<16x32xf32, #tpu.memory_space<vmem>>, vector<2x32xf32>
    tpu.vector_store %arg14[%c10, %c0_49], %200 {strides = array<i32>} : memref<16x32xf32, #tpu.memory_space<vmem>>, vector<2x32xf32>,
    %202 = vector.extract_strided_slice %5 {offsets = [12, 0], sizes = [2, 96], strides = [1, 1]} : vector<16x96xf32> to vector<2x96xf32>
    %cst_50 = arith.constant dense<0.000000e+00> : vector<2x96xf32>
    %203 = tpu.matmul %200, %11, %cst_50 {dimension_numbers = #tpu.dot_dimension_numbers<[1], [0], [0], [1], [0, 0, 1, 1], [], []>} : vector<2x32xf32>, vector<32x96xf32>, vector<2x96xf32> -> vector<2x96xf32>
    %204 = vector.broadcast %12 : vector<1x96xf32> to vector<2x96xf32>
    %205 = arith.addf %203, %204 : vector<2x96xf32>
    %206 = vector.extract_strided_slice %202 {offsets = [0, 0], sizes = [2, 32], strides = [1, 1]} : vector<2x96xf32> to vector<2x32xf32>
    %207 = vector.extract_strided_slice %205 {offsets = [0, 0], sizes = [2, 32], strides = [1, 1]} : vector<2x96xf32> to vector<2x32xf32>
    %208 = arith.addf %206, %207 : vector<2x32xf32>
    %209 = arith.negf %208 : vector<2x32xf32>
    %210 = math.exp %209 : vector<2x32xf32>
    %cst_51 = arith.constant 1.000000e+00 : f32
    %211 = vector.broadcast %cst_51 : f32 to vector<2x32xf32>
    %212 = arith.addf %211, %210 : vector<2x32xf32>
    %213 = arith.divf %211, %212 : vector<2x32xf32>
    %214 = vector.extract_strided_slice %202 {offsets = [0, 32], sizes = [2, 32], strides = [1, 1]} : vector<2x96xf32> to vector<2x32xf32>
    %215 = vector.extract_strided_slice %205 {offsets = [0, 32], sizes = [2, 32], strides = [1, 1]} : vector<2x96xf32> to vector<2x32xf32>
    %216 = arith.addf %214, %215 : vector<2x32xf32>
    %217 = arith.negf %216 : vector<2x32xf32>
    %218 = math.exp %217 : vector<2x32xf32>
    %cst_52 = arith.constant 1.000000e+00 : f32
    %219 = vector.broadcast %cst_52 : f32 to vector<2x32xf32>
    %220 = arith.addf %219, %218 : vector<2x32xf32>
    %221 = arith.divf %219, %220 : vector<2x32xf32>
    %222 = vector.extract_strided_slice %202 {offsets = [0, 64], sizes = [2, 32], strides = [1, 1]} : vector<2x96xf32> to vector<2x32xf32>
    %223 = vector.extract_strided_slice %205 {offsets = [0, 64], sizes = [2, 32], strides = [1, 1]} : vector<2x96xf32> to vector<2x32xf32>
    %224 = arith.mulf %213, %223 : vector<2x32xf32>
    %225 = arith.addf %222, %224 : vector<2x32xf32>
    %226 = math.tanh %225 : vector<2x32xf32>
    %cst_53 = arith.constant 1.000000e+00 : f32
    %227 = vector.broadcast %cst_53 : f32 to vector<2x32xf32>
    %228 = arith.subf %227, %221 : vector<2x32xf32>
    %229 = arith.mulf %228, %226 : vector<2x32xf32>
    %230 = arith.mulf %221, %200 : vector<2x32xf32>
    %231 = arith.addf %229, %230 : vector<2x32xf32>
    %c12 = arith.constant 12 : index
    %c0_54 = arith.constant 0 : index
    %232 = vector.load %arg14[%c12, %c0_54] : memref<16x32xf32, #tpu.memory_space<vmem>>, vector<2x32xf32>
    tpu.vector_store %arg14[%c12, %c0_54], %231 {strides = array<i32>} : memref<16x32xf32, #tpu.memory_space<vmem>>, vector<2x32xf32>,
    %233 = vector.extract_strided_slice %5 {offsets = [14, 0], sizes = [2, 96], strides = [1, 1]} : vector<16x96xf32> to vector<2x96xf32>
    %cst_55 = arith.constant dense<0.000000e+00> : vector<2x96xf32>
    %234 = tpu.matmul %231, %11, %cst_55 {dimension_numbers = #tpu.dot_dimension_numbers<[1], [0], [0], [1], [0, 0, 1, 1], [], []>} : vector<2x32xf32>, vector<32x96xf32>, vector<2x96xf32> -> vector<2x96xf32>
    %235 = vector.broadcast %12 : vector<1x96xf32> to vector<2x96xf32>
    %236 = arith.addf %234, %235 : vector<2x96xf32>
    %237 = vector.extract_strided_slice %233 {offsets = [0, 0], sizes = [2, 32], strides = [1, 1]} : vector<2x96xf32> to vector<2x32xf32>
    %238 = vector.extract_strided_slice %236 {offsets = [0, 0], sizes = [2, 32], strides = [1, 1]} : vector<2x96xf32> to vector<2x32xf32>
    %239 = arith.addf %237, %238 : vector<2x32xf32>
    %240 = arith.negf %239 : vector<2x32xf32>
    %241 = math.exp %240 : vector<2x32xf32>
    %cst_56 = arith.constant 1.000000e+00 : f32
    %242 = vector.broadcast %cst_56 : f32 to vector<2x32xf32>
    %243 = arith.addf %242, %241 : vector<2x32xf32>
    %244 = arith.divf %242, %243 : vector<2x32xf32>
    %245 = vector.extract_strided_slice %233 {offsets = [0, 32], sizes = [2, 32], strides = [1, 1]} : vector<2x96xf32> to vector<2x32xf32>
    %246 = vector.extract_strided_slice %236 {offsets = [0, 32], sizes = [2, 32], strides = [1, 1]} : vector<2x96xf32> to vector<2x32xf32>
    %247 = arith.addf %245, %246 : vector<2x32xf32>
    %248 = arith.negf %247 : vector<2x32xf32>
    %249 = math.exp %248 : vector<2x32xf32>
    %cst_57 = arith.constant 1.000000e+00 : f32
    %250 = vector.broadcast %cst_57 : f32 to vector<2x32xf32>
    %251 = arith.addf %250, %249 : vector<2x32xf32>
    %252 = arith.divf %250, %251 : vector<2x32xf32>
    %253 = vector.extract_strided_slice %233 {offsets = [0, 64], sizes = [2, 32], strides = [1, 1]} : vector<2x96xf32> to vector<2x32xf32>
    %254 = vector.extract_strided_slice %236 {offsets = [0, 64], sizes = [2, 32], strides = [1, 1]} : vector<2x96xf32> to vector<2x32xf32>
    %255 = arith.mulf %244, %254 : vector<2x32xf32>
    %256 = arith.addf %253, %255 : vector<2x32xf32>
    %257 = math.tanh %256 : vector<2x32xf32>
    %cst_58 = arith.constant 1.000000e+00 : f32
    %258 = vector.broadcast %cst_58 : f32 to vector<2x32xf32>
    %259 = arith.subf %258, %252 : vector<2x32xf32>
    %260 = arith.mulf %259, %257 : vector<2x32xf32>
    %261 = arith.mulf %252, %231 : vector<2x32xf32>
    %262 = arith.addf %260, %261 : vector<2x32xf32>
    %c14 = arith.constant 14 : index
    %c0_59 = arith.constant 0 : index
    %263 = vector.load %arg14[%c14, %c0_59] : memref<16x32xf32, #tpu.memory_space<vmem>>, vector<2x32xf32>
    tpu.vector_store %arg14[%c14, %c0_59], %262 {strides = array<i32>} : memref<16x32xf32, #tpu.memory_space<vmem>>, vector<2x32xf32>,
    %cst_60 = arith.constant 0.000000e+00 : f32
    %264 = vector.broadcast %cst_60 : f32 to vector<2x32xf32>
    %265 = vector.extract_strided_slice %10 {offsets = [14, 0], sizes = [2, 96], strides = [1, 1]} : vector<16x96xf32> to vector<2x96xf32>
    %cst_61 = arith.constant dense<0.000000e+00> : vector<2x96xf32>
    %266 = tpu.matmul %264, %13, %cst_61 {dimension_numbers = #tpu.dot_dimension_numbers<[1], [0], [0], [1], [0, 0, 1, 1], [], []>} : vector<2x32xf32>, vector<32x96xf32>, vector<2x96xf32> -> vector<2x96xf32>
    %267 = vector.broadcast %14 : vector<1x96xf32> to vector<2x96xf32>
    %268 = arith.addf %266, %267 : vector<2x96xf32>
    %269 = vector.extract_strided_slice %265 {offsets = [0, 0], sizes = [2, 32], strides = [1, 1]} : vector<2x96xf32> to vector<2x32xf32>
    %270 = vector.extract_strided_slice %268 {offsets = [0, 0], sizes = [2, 32], strides = [1, 1]} : vector<2x96xf32> to vector<2x32xf32>
    %271 = arith.addf %269, %270 : vector<2x32xf32>
    %272 = arith.negf %271 : vector<2x32xf32>
    %273 = math.exp %272 : vector<2x32xf32>
    %cst_62 = arith.constant 1.000000e+00 : f32
    %274 = vector.broadcast %cst_62 : f32 to vector<2x32xf32>
    %275 = arith.addf %274, %273 : vector<2x32xf32>
    %276 = arith.divf %274, %275 : vector<2x32xf32>
    %277 = vector.extract_strided_slice %265 {offsets = [0, 32], sizes = [2, 32], strides = [1, 1]} : vector<2x96xf32> to vector<2x32xf32>
    %278 = vector.extract_strided_slice %268 {offsets = [0, 32], sizes = [2, 32], strides = [1, 1]} : vector<2x96xf32> to vector<2x32xf32>
    %279 = arith.addf %277, %278 : vector<2x32xf32>
    %280 = arith.negf %279 : vector<2x32xf32>
    %281 = math.exp %280 : vector<2x32xf32>
    %cst_63 = arith.constant 1.000000e+00 : f32
    %282 = vector.broadcast %cst_63 : f32 to vector<2x32xf32>
    %283 = arith.addf %282, %281 : vector<2x32xf32>
    %284 = arith.divf %282, %283 : vector<2x32xf32>
    %285 = vector.extract_strided_slice %265 {offsets = [0, 64], sizes = [2, 32], strides = [1, 1]} : vector<2x96xf32> to vector<2x32xf32>
    %286 = vector.extract_strided_slice %268 {offsets = [0, 64], sizes = [2, 32], strides = [1, 1]} : vector<2x96xf32> to vector<2x32xf32>
    %287 = arith.mulf %276, %286 : vector<2x32xf32>
    %288 = arith.addf %285, %287 : vector<2x32xf32>
    %289 = math.tanh %288 : vector<2x32xf32>
    %cst_64 = arith.constant 1.000000e+00 : f32
    %290 = vector.broadcast %cst_64 : f32 to vector<2x32xf32>
    %291 = arith.subf %290, %284 : vector<2x32xf32>
    %292 = arith.mulf %291, %289 : vector<2x32xf32>
    %293 = arith.mulf %284, %264 : vector<2x32xf32>
    %294 = arith.addf %292, %293 : vector<2x32xf32>
    %c14_65 = arith.constant 14 : index
    %c0_66 = arith.constant 0 : index
    %295 = vector.load %arg15[%c14_65, %c0_66] : memref<16x32xf32, #tpu.memory_space<vmem>>, vector<2x32xf32>
    tpu.vector_store %arg15[%c14_65, %c0_66], %294 {strides = array<i32>} : memref<16x32xf32, #tpu.memory_space<vmem>>, vector<2x32xf32>,
    %296 = vector.extract_strided_slice %10 {offsets = [12, 0], sizes = [2, 96], strides = [1, 1]} : vector<16x96xf32> to vector<2x96xf32>
    %cst_67 = arith.constant dense<0.000000e+00> : vector<2x96xf32>
    %297 = tpu.matmul %294, %13, %cst_67 {dimension_numbers = #tpu.dot_dimension_numbers<[1], [0], [0], [1], [0, 0, 1, 1], [], []>} : vector<2x32xf32>, vector<32x96xf32>, vector<2x96xf32> -> vector<2x96xf32>
    %298 = vector.broadcast %14 : vector<1x96xf32> to vector<2x96xf32>
    %299 = arith.addf %297, %298 : vector<2x96xf32>
    %300 = vector.extract_strided_slice %296 {offsets = [0, 0], sizes = [2, 32], strides = [1, 1]} : vector<2x96xf32> to vector<2x32xf32>
    %301 = vector.extract_strided_slice %299 {offsets = [0, 0], sizes = [2, 32], strides = [1, 1]} : vector<2x96xf32> to vector<2x32xf32>
    %302 = arith.addf %300, %301 : vector<2x32xf32>
    %303 = arith.negf %302 : vector<2x32xf32>
    %304 = math.exp %303 : vector<2x32xf32>
    %cst_68 = arith.constant 1.000000e+00 : f32
    %305 = vector.broadcast %cst_68 : f32 to vector<2x32xf32>
    %306 = arith.addf %305, %304 : vector<2x32xf32>
    %307 = arith.divf %305, %306 : vector<2x32xf32>
    %308 = vector.extract_strided_slice %296 {offsets = [0, 32], sizes = [2, 32], strides = [1, 1]} : vector<2x96xf32> to vector<2x32xf32>
    %309 = vector.extract_strided_slice %299 {offsets = [0, 32], sizes = [2, 32], strides = [1, 1]} : vector<2x96xf32> to vector<2x32xf32>
    %310 = arith.addf %308, %309 : vector<2x32xf32>
    %311 = arith.negf %310 : vector<2x32xf32>
    %312 = math.exp %311 : vector<2x32xf32>
    %cst_69 = arith.constant 1.000000e+00 : f32
    %313 = vector.broadcast %cst_69 : f32 to vector<2x32xf32>
    %314 = arith.addf %313, %312 : vector<2x32xf32>
    %315 = arith.divf %313, %314 : vector<2x32xf32>
    %316 = vector.extract_strided_slice %296 {offsets = [0, 64], sizes = [2, 32], strides = [1, 1]} : vector<2x96xf32> to vector<2x32xf32>
    %317 = vector.extract_strided_slice %299 {offsets = [0, 64], sizes = [2, 32], strides = [1, 1]} : vector<2x96xf32> to vector<2x32xf32>
    %318 = arith.mulf %307, %317 : vector<2x32xf32>
    %319 = arith.addf %316, %318 : vector<2x32xf32>
    %320 = math.tanh %319 : vector<2x32xf32>
    %cst_70 = arith.constant 1.000000e+00 : f32
    %321 = vector.broadcast %cst_70 : f32 to vector<2x32xf32>
    %322 = arith.subf %321, %315 : vector<2x32xf32>
    %323 = arith.mulf %322, %320 : vector<2x32xf32>
    %324 = arith.mulf %315, %294 : vector<2x32xf32>
    %325 = arith.addf %323, %324 : vector<2x32xf32>
    %c12_71 = arith.constant 12 : index
    %c0_72 = arith.constant 0 : index
    %326 = vector.load %arg15[%c12_71, %c0_72] : memref<16x32xf32, #tpu.memory_space<vmem>>, vector<2x32xf32>
    tpu.vector_store %arg15[%c12_71, %c0_72], %325 {strides = array<i32>} : memref<16x32xf32, #tpu.memory_space<vmem>>, vector<2x32xf32>,
    %327 = vector.extract_strided_slice %10 {offsets = [10, 0], sizes = [2, 96], strides = [1, 1]} : vector<16x96xf32> to vector<2x96xf32>
    %cst_73 = arith.constant dense<0.000000e+00> : vector<2x96xf32>
    %328 = tpu.matmul %325, %13, %cst_73 {dimension_numbers = #tpu.dot_dimension_numbers<[1], [0], [0], [1], [0, 0, 1, 1], [], []>} : vector<2x32xf32>, vector<32x96xf32>, vector<2x96xf32> -> vector<2x96xf32>
    %329 = vector.broadcast %14 : vector<1x96xf32> to vector<2x96xf32>
    %330 = arith.addf %328, %329 : vector<2x96xf32>
    %331 = vector.extract_strided_slice %327 {offsets = [0, 0], sizes = [2, 32], strides = [1, 1]} : vector<2x96xf32> to vector<2x32xf32>
    %332 = vector.extract_strided_slice %330 {offsets = [0, 0], sizes = [2, 32], strides = [1, 1]} : vector<2x96xf32> to vector<2x32xf32>
    %333 = arith.addf %331, %332 : vector<2x32xf32>
    %334 = arith.negf %333 : vector<2x32xf32>
    %335 = math.exp %334 : vector<2x32xf32>
    %cst_74 = arith.constant 1.000000e+00 : f32
    %336 = vector.broadcast %cst_74 : f32 to vector<2x32xf32>
    %337 = arith.addf %336, %335 : vector<2x32xf32>
    %338 = arith.divf %336, %337 : vector<2x32xf32>
    %339 = vector.extract_strided_slice %327 {offsets = [0, 32], sizes = [2, 32], strides = [1, 1]} : vector<2x96xf32> to vector<2x32xf32>
    %340 = vector.extract_strided_slice %330 {offsets = [0, 32], sizes = [2, 32], strides = [1, 1]} : vector<2x96xf32> to vector<2x32xf32>
    %341 = arith.addf %339, %340 : vector<2x32xf32>
    %342 = arith.negf %341 : vector<2x32xf32>
    %343 = math.exp %342 : vector<2x32xf32>
    %cst_75 = arith.constant 1.000000e+00 : f32
    %344 = vector.broadcast %cst_75 : f32 to vector<2x32xf32>
    %345 = arith.addf %344, %343 : vector<2x32xf32>
    %346 = arith.divf %344, %345 : vector<2x32xf32>
    %347 = vector.extract_strided_slice %327 {offsets = [0, 64], sizes = [2, 32], strides = [1, 1]} : vector<2x96xf32> to vector<2x32xf32>
    %348 = vector.extract_strided_slice %330 {offsets = [0, 64], sizes = [2, 32], strides = [1, 1]} : vector<2x96xf32> to vector<2x32xf32>
    %349 = arith.mulf %338, %348 : vector<2x32xf32>
    %350 = arith.addf %347, %349 : vector<2x32xf32>
    %351 = math.tanh %350 : vector<2x32xf32>
    %cst_76 = arith.constant 1.000000e+00 : f32
    %352 = vector.broadcast %cst_76 : f32 to vector<2x32xf32>
    %353 = arith.subf %352, %346 : vector<2x32xf32>
    %354 = arith.mulf %353, %351 : vector<2x32xf32>
    %355 = arith.mulf %346, %325 : vector<2x32xf32>
    %356 = arith.addf %354, %355 : vector<2x32xf32>
    %c10_77 = arith.constant 10 : index
    %c0_78 = arith.constant 0 : index
    %357 = vector.load %arg15[%c10_77, %c0_78] : memref<16x32xf32, #tpu.memory_space<vmem>>, vector<2x32xf32>
    tpu.vector_store %arg15[%c10_77, %c0_78], %356 {strides = array<i32>} : memref<16x32xf32, #tpu.memory_space<vmem>>, vector<2x32xf32>,
    %358 = vector.extract_strided_slice %10 {offsets = [8, 0], sizes = [2, 96], strides = [1, 1]} : vector<16x96xf32> to vector<2x96xf32>
    %cst_79 = arith.constant dense<0.000000e+00> : vector<2x96xf32>
    %359 = tpu.matmul %356, %13, %cst_79 {dimension_numbers = #tpu.dot_dimension_numbers<[1], [0], [0], [1], [0, 0, 1, 1], [], []>} : vector<2x32xf32>, vector<32x96xf32>, vector<2x96xf32> -> vector<2x96xf32>
    %360 = vector.broadcast %14 : vector<1x96xf32> to vector<2x96xf32>
    %361 = arith.addf %359, %360 : vector<2x96xf32>
    %362 = vector.extract_strided_slice %358 {offsets = [0, 0], sizes = [2, 32], strides = [1, 1]} : vector<2x96xf32> to vector<2x32xf32>
    %363 = vector.extract_strided_slice %361 {offsets = [0, 0], sizes = [2, 32], strides = [1, 1]} : vector<2x96xf32> to vector<2x32xf32>
    %364 = arith.addf %362, %363 : vector<2x32xf32>
    %365 = arith.negf %364 : vector<2x32xf32>
    %366 = math.exp %365 : vector<2x32xf32>
    %cst_80 = arith.constant 1.000000e+00 : f32
    %367 = vector.broadcast %cst_80 : f32 to vector<2x32xf32>
    %368 = arith.addf %367, %366 : vector<2x32xf32>
    %369 = arith.divf %367, %368 : vector<2x32xf32>
    %370 = vector.extract_strided_slice %358 {offsets = [0, 32], sizes = [2, 32], strides = [1, 1]} : vector<2x96xf32> to vector<2x32xf32>
    %371 = vector.extract_strided_slice %361 {offsets = [0, 32], sizes = [2, 32], strides = [1, 1]} : vector<2x96xf32> to vector<2x32xf32>
    %372 = arith.addf %370, %371 : vector<2x32xf32>
    %373 = arith.negf %372 : vector<2x32xf32>
    %374 = math.exp %373 : vector<2x32xf32>
    %cst_81 = arith.constant 1.000000e+00 : f32
    %375 = vector.broadcast %cst_81 : f32 to vector<2x32xf32>
    %376 = arith.addf %375, %374 : vector<2x32xf32>
    %377 = arith.divf %375, %376 : vector<2x32xf32>
    %378 = vector.extract_strided_slice %358 {offsets = [0, 64], sizes = [2, 32], strides = [1, 1]} : vector<2x96xf32> to vector<2x32xf32>
    %379 = vector.extract_strided_slice %361 {offsets = [0, 64], sizes = [2, 32], strides = [1, 1]} : vector<2x96xf32> to vector<2x32xf32>
    %380 = arith.mulf %369, %379 : vector<2x32xf32>
    %381 = arith.addf %378, %380 : vector<2x32xf32>
    %382 = math.tanh %381 : vector<2x32xf32>
    %cst_82 = arith.constant 1.000000e+00 : f32
    %383 = vector.broadcast %cst_82 : f32 to vector<2x32xf32>
    %384 = arith.subf %383, %377 : vector<2x32xf32>
    %385 = arith.mulf %384, %382 : vector<2x32xf32>
    %386 = arith.mulf %377, %356 : vector<2x32xf32>
    %387 = arith.addf %385, %386 : vector<2x32xf32>
    %c8_83 = arith.constant 8 : index
    %c0_84 = arith.constant 0 : index
    %388 = vector.load %arg15[%c8_83, %c0_84] : memref<16x32xf32, #tpu.memory_space<vmem>>, vector<2x32xf32>
    tpu.vector_store %arg15[%c8_83, %c0_84], %387 {strides = array<i32>} : memref<16x32xf32, #tpu.memory_space<vmem>>, vector<2x32xf32>,
    %389 = vector.extract_strided_slice %10 {offsets = [6, 0], sizes = [2, 96], strides = [1, 1]} : vector<16x96xf32> to vector<2x96xf32>
    %cst_85 = arith.constant dense<0.000000e+00> : vector<2x96xf32>
    %390 = tpu.matmul %387, %13, %cst_85 {dimension_numbers = #tpu.dot_dimension_numbers<[1], [0], [0], [1], [0, 0, 1, 1], [], []>} : vector<2x32xf32>, vector<32x96xf32>, vector<2x96xf32> -> vector<2x96xf32>
    %391 = vector.broadcast %14 : vector<1x96xf32> to vector<2x96xf32>
    %392 = arith.addf %390, %391 : vector<2x96xf32>
    %393 = vector.extract_strided_slice %389 {offsets = [0, 0], sizes = [2, 32], strides = [1, 1]} : vector<2x96xf32> to vector<2x32xf32>
    %394 = vector.extract_strided_slice %392 {offsets = [0, 0], sizes = [2, 32], strides = [1, 1]} : vector<2x96xf32> to vector<2x32xf32>
    %395 = arith.addf %393, %394 : vector<2x32xf32>
    %396 = arith.negf %395 : vector<2x32xf32>
    %397 = math.exp %396 : vector<2x32xf32>
    %cst_86 = arith.constant 1.000000e+00 : f32
    %398 = vector.broadcast %cst_86 : f32 to vector<2x32xf32>
    %399 = arith.addf %398, %397 : vector<2x32xf32>
    %400 = arith.divf %398, %399 : vector<2x32xf32>
    %401 = vector.extract_strided_slice %389 {offsets = [0, 32], sizes = [2, 32], strides = [1, 1]} : vector<2x96xf32> to vector<2x32xf32>
    %402 = vector.extract_strided_slice %392 {offsets = [0, 32], sizes = [2, 32], strides = [1, 1]} : vector<2x96xf32> to vector<2x32xf32>
    %403 = arith.addf %401, %402 : vector<2x32xf32>
    %404 = arith.negf %403 : vector<2x32xf32>
    %405 = math.exp %404 : vector<2x32xf32>
    %cst_87 = arith.constant 1.000000e+00 : f32
    %406 = vector.broadcast %cst_87 : f32 to vector<2x32xf32>
    %407 = arith.addf %406, %405 : vector<2x32xf32>
    %408 = arith.divf %406, %407 : vector<2x32xf32>
    %409 = vector.extract_strided_slice %389 {offsets = [0, 64], sizes = [2, 32], strides = [1, 1]} : vector<2x96xf32> to vector<2x32xf32>
    %410 = vector.extract_strided_slice %392 {offsets = [0, 64], sizes = [2, 32], strides = [1, 1]} : vector<2x96xf32> to vector<2x32xf32>
    %411 = arith.mulf %400, %410 : vector<2x32xf32>
    %412 = arith.addf %409, %411 : vector<2x32xf32>
    %413 = math.tanh %412 : vector<2x32xf32>
    %cst_88 = arith.constant 1.000000e+00 : f32
    %414 = vector.broadcast %cst_88 : f32 to vector<2x32xf32>
    %415 = arith.subf %414, %408 : vector<2x32xf32>
    %416 = arith.mulf %415, %413 : vector<2x32xf32>
    %417 = arith.mulf %408, %387 : vector<2x32xf32>
    %418 = arith.addf %416, %417 : vector<2x32xf32>
    %c6_89 = arith.constant 6 : index
    %c0_90 = arith.constant 0 : index
    %419 = vector.load %arg15[%c6_89, %c0_90] : memref<16x32xf32, #tpu.memory_space<vmem>>, vector<2x32xf32>
    tpu.vector_store %arg15[%c6_89, %c0_90], %418 {strides = array<i32>} : memref<16x32xf32, #tpu.memory_space<vmem>>, vector<2x32xf32>,
    %420 = vector.extract_strided_slice %10 {offsets = [4, 0], sizes = [2, 96], strides = [1, 1]} : vector<16x96xf32> to vector<2x96xf32>
    %cst_91 = arith.constant dense<0.000000e+00> : vector<2x96xf32>
    %421 = tpu.matmul %418, %13, %cst_91 {dimension_numbers = #tpu.dot_dimension_numbers<[1], [0], [0], [1], [0, 0, 1, 1], [], []>} : vector<2x32xf32>, vector<32x96xf32>, vector<2x96xf32> -> vector<2x96xf32>
    %422 = vector.broadcast %14 : vector<1x96xf32> to vector<2x96xf32>
    %423 = arith.addf %421, %422 : vector<2x96xf32>
    %424 = vector.extract_strided_slice %420 {offsets = [0, 0], sizes = [2, 32], strides = [1, 1]} : vector<2x96xf32> to vector<2x32xf32>
    %425 = vector.extract_strided_slice %423 {offsets = [0, 0], sizes = [2, 32], strides = [1, 1]} : vector<2x96xf32> to vector<2x32xf32>
    %426 = arith.addf %424, %425 : vector<2x32xf32>
    %427 = arith.negf %426 : vector<2x32xf32>
    %428 = math.exp %427 : vector<2x32xf32>
    %cst_92 = arith.constant 1.000000e+00 : f32
    %429 = vector.broadcast %cst_92 : f32 to vector<2x32xf32>
    %430 = arith.addf %429, %428 : vector<2x32xf32>
    %431 = arith.divf %429, %430 : vector<2x32xf32>
    %432 = vector.extract_strided_slice %420 {offsets = [0, 32], sizes = [2, 32], strides = [1, 1]} : vector<2x96xf32> to vector<2x32xf32>
    %433 = vector.extract_strided_slice %423 {offsets = [0, 32], sizes = [2, 32], strides = [1, 1]} : vector<2x96xf32> to vector<2x32xf32>
    %434 = arith.addf %432, %433 : vector<2x32xf32>
    %435 = arith.negf %434 : vector<2x32xf32>
    %436 = math.exp %435 : vector<2x32xf32>
    %cst_93 = arith.constant 1.000000e+00 : f32
    %437 = vector.broadcast %cst_93 : f32 to vector<2x32xf32>
    %438 = arith.addf %437, %436 : vector<2x32xf32>
    %439 = arith.divf %437, %438 : vector<2x32xf32>
    %440 = vector.extract_strided_slice %420 {offsets = [0, 64], sizes = [2, 32], strides = [1, 1]} : vector<2x96xf32> to vector<2x32xf32>
    %441 = vector.extract_strided_slice %423 {offsets = [0, 64], sizes = [2, 32], strides = [1, 1]} : vector<2x96xf32> to vector<2x32xf32>
    %442 = arith.mulf %431, %441 : vector<2x32xf32>
    %443 = arith.addf %440, %442 : vector<2x32xf32>
    %444 = math.tanh %443 : vector<2x32xf32>
    %cst_94 = arith.constant 1.000000e+00 : f32
    %445 = vector.broadcast %cst_94 : f32 to vector<2x32xf32>
    %446 = arith.subf %445, %439 : vector<2x32xf32>
    %447 = arith.mulf %446, %444 : vector<2x32xf32>
    %448 = arith.mulf %439, %418 : vector<2x32xf32>
    %449 = arith.addf %447, %448 : vector<2x32xf32>
    %c4_95 = arith.constant 4 : index
    %c0_96 = arith.constant 0 : index
    %450 = vector.load %arg15[%c4_95, %c0_96] : memref<16x32xf32, #tpu.memory_space<vmem>>, vector<2x32xf32>
    tpu.vector_store %arg15[%c4_95, %c0_96], %449 {strides = array<i32>} : memref<16x32xf32, #tpu.memory_space<vmem>>, vector<2x32xf32>,
    %451 = vector.extract_strided_slice %10 {offsets = [2, 0], sizes = [2, 96], strides = [1, 1]} : vector<16x96xf32> to vector<2x96xf32>
    %cst_97 = arith.constant dense<0.000000e+00> : vector<2x96xf32>
    %452 = tpu.matmul %449, %13, %cst_97 {dimension_numbers = #tpu.dot_dimension_numbers<[1], [0], [0], [1], [0, 0, 1, 1], [], []>} : vector<2x32xf32>, vector<32x96xf32>, vector<2x96xf32> -> vector<2x96xf32>
    %453 = vector.broadcast %14 : vector<1x96xf32> to vector<2x96xf32>
    %454 = arith.addf %452, %453 : vector<2x96xf32>
    %455 = vector.extract_strided_slice %451 {offsets = [0, 0], sizes = [2, 32], strides = [1, 1]} : vector<2x96xf32> to vector<2x32xf32>
    %456 = vector.extract_strided_slice %454 {offsets = [0, 0], sizes = [2, 32], strides = [1, 1]} : vector<2x96xf32> to vector<2x32xf32>
    %457 = arith.addf %455, %456 : vector<2x32xf32>
    %458 = arith.negf %457 : vector<2x32xf32>
    %459 = math.exp %458 : vector<2x32xf32>
    %cst_98 = arith.constant 1.000000e+00 : f32
    %460 = vector.broadcast %cst_98 : f32 to vector<2x32xf32>
    %461 = arith.addf %460, %459 : vector<2x32xf32>
    %462 = arith.divf %460, %461 : vector<2x32xf32>
    %463 = vector.extract_strided_slice %451 {offsets = [0, 32], sizes = [2, 32], strides = [1, 1]} : vector<2x96xf32> to vector<2x32xf32>
    %464 = vector.extract_strided_slice %454 {offsets = [0, 32], sizes = [2, 32], strides = [1, 1]} : vector<2x96xf32> to vector<2x32xf32>
    %465 = arith.addf %463, %464 : vector<2x32xf32>
    %466 = arith.negf %465 : vector<2x32xf32>
    %467 = math.exp %466 : vector<2x32xf32>
    %cst_99 = arith.constant 1.000000e+00 : f32
    %468 = vector.broadcast %cst_99 : f32 to vector<2x32xf32>
    %469 = arith.addf %468, %467 : vector<2x32xf32>
    %470 = arith.divf %468, %469 : vector<2x32xf32>
    %471 = vector.extract_strided_slice %451 {offsets = [0, 64], sizes = [2, 32], strides = [1, 1]} : vector<2x96xf32> to vector<2x32xf32>
    %472 = vector.extract_strided_slice %454 {offsets = [0, 64], sizes = [2, 32], strides = [1, 1]} : vector<2x96xf32> to vector<2x32xf32>
    %473 = arith.mulf %462, %472 : vector<2x32xf32>
    %474 = arith.addf %471, %473 : vector<2x32xf32>
    %475 = math.tanh %474 : vector<2x32xf32>
    %cst_100 = arith.constant 1.000000e+00 : f32
    %476 = vector.broadcast %cst_100 : f32 to vector<2x32xf32>
    %477 = arith.subf %476, %470 : vector<2x32xf32>
    %478 = arith.mulf %477, %475 : vector<2x32xf32>
    %479 = arith.mulf %470, %449 : vector<2x32xf32>
    %480 = arith.addf %478, %479 : vector<2x32xf32>
    %c2_101 = arith.constant 2 : index
    %c0_102 = arith.constant 0 : index
    %481 = vector.load %arg15[%c2_101, %c0_102] : memref<16x32xf32, #tpu.memory_space<vmem>>, vector<2x32xf32>
    tpu.vector_store %arg15[%c2_101, %c0_102], %480 {strides = array<i32>} : memref<16x32xf32, #tpu.memory_space<vmem>>, vector<2x32xf32>,
    %482 = vector.extract_strided_slice %10 {offsets = [0, 0], sizes = [2, 96], strides = [1, 1]} : vector<16x96xf32> to vector<2x96xf32>
    %cst_103 = arith.constant dense<0.000000e+00> : vector<2x96xf32>
    %483 = tpu.matmul %480, %13, %cst_103 {dimension_numbers = #tpu.dot_dimension_numbers<[1], [0], [0], [1], [0, 0, 1, 1], [], []>} : vector<2x32xf32>, vector<32x96xf32>, vector<2x96xf32> -> vector<2x96xf32>
    %484 = vector.broadcast %14 : vector<1x96xf32> to vector<2x96xf32>
    %485 = arith.addf %483, %484 : vector<2x96xf32>
    %486 = vector.extract_strided_slice %482 {offsets = [0, 0], sizes = [2, 32], strides = [1, 1]} : vector<2x96xf32> to vector<2x32xf32>
    %487 = vector.extract_strided_slice %485 {offsets = [0, 0], sizes = [2, 32], strides = [1, 1]} : vector<2x96xf32> to vector<2x32xf32>
    %488 = arith.addf %486, %487 : vector<2x32xf32>
    %489 = arith.negf %488 : vector<2x32xf32>
    %490 = math.exp %489 : vector<2x32xf32>
    %cst_104 = arith.constant 1.000000e+00 : f32
    %491 = vector.broadcast %cst_104 : f32 to vector<2x32xf32>
    %492 = arith.addf %491, %490 : vector<2x32xf32>
    %493 = arith.divf %491, %492 : vector<2x32xf32>
    %494 = vector.extract_strided_slice %482 {offsets = [0, 32], sizes = [2, 32], strides = [1, 1]} : vector<2x96xf32> to vector<2x32xf32>
    %495 = vector.extract_strided_slice %485 {offsets = [0, 32], sizes = [2, 32], strides = [1, 1]} : vector<2x96xf32> to vector<2x32xf32>
    %496 = arith.addf %494, %495 : vector<2x32xf32>
    %497 = arith.negf %496 : vector<2x32xf32>
    %498 = math.exp %497 : vector<2x32xf32>
    %cst_105 = arith.constant 1.000000e+00 : f32
    %499 = vector.broadcast %cst_105 : f32 to vector<2x32xf32>
    %500 = arith.addf %499, %498 : vector<2x32xf32>
    %501 = arith.divf %499, %500 : vector<2x32xf32>
    %502 = vector.extract_strided_slice %482 {offsets = [0, 64], sizes = [2, 32], strides = [1, 1]} : vector<2x96xf32> to vector<2x32xf32>
    %503 = vector.extract_strided_slice %485 {offsets = [0, 64], sizes = [2, 32], strides = [1, 1]} : vector<2x96xf32> to vector<2x32xf32>
    %504 = arith.mulf %493, %503 : vector<2x32xf32>
    %505 = arith.addf %502, %504 : vector<2x32xf32>
    %506 = math.tanh %505 : vector<2x32xf32>
    %cst_106 = arith.constant 1.000000e+00 : f32
    %507 = vector.broadcast %cst_106 : f32 to vector<2x32xf32>
    %508 = arith.subf %507, %501 : vector<2x32xf32>
    %509 = arith.mulf %508, %506 : vector<2x32xf32>
    %510 = arith.mulf %501, %480 : vector<2x32xf32>
    %511 = arith.addf %509, %510 : vector<2x32xf32>
    %c0_107 = arith.constant 0 : index
    %c0_108 = arith.constant 0 : index
    %512 = vector.load %arg15[%c0_107, %c0_108] : memref<16x32xf32, #tpu.memory_space<vmem>>, vector<2x32xf32>
    tpu.vector_store %arg15[%c0_107, %c0_108], %511 {strides = array<i32>} : memref<16x32xf32, #tpu.memory_space<vmem>>, vector<2x32xf32>,
    %c0_109 = arith.constant 0 : index
    %c0_110 = arith.constant 0 : index
    %513 = vector.load %arg14[%c0_109, %c0_110] : memref<16x32xf32, #tpu.memory_space<vmem>>, vector<16x32xf32>
    %c0_111 = arith.constant 0 : index
    %c0_112 = arith.constant 0 : index
    %514 = vector.load %arg12[%c0_111, %c0_112] : memref<32x32xf32, #tpu.memory_space<vmem>>, vector<32x32xf32>
    %cst_113 = arith.constant dense<0.000000e+00> : vector<16x32xf32>
    %515 = tpu.matmul %513, %514, %cst_113 {dimension_numbers = #tpu.dot_dimension_numbers<[1], [0], [0], [1], [0, 0, 1, 1], [], []>} : vector<16x32xf32>, vector<32x32xf32>, vector<16x32xf32> -> vector<16x32xf32>
    %c0_114 = arith.constant 0 : index
    %c0_115 = arith.constant 0 : index
    %516 = vector.load %arg15[%c0_114, %c0_115] : memref<16x32xf32, #tpu.memory_space<vmem>>, vector<16x32xf32>
    %c0_116 = arith.constant 0 : index
    %c0_117 = arith.constant 0 : index
    %517 = vector.load %arg13[%c0_116, %c0_117] : memref<32x32xf32, #tpu.memory_space<vmem>>, vector<32x32xf32>
    %cst_118 = arith.constant dense<0.000000e+00> : vector<16x32xf32>
    %518 = tpu.matmul %516, %517, %cst_118 {dimension_numbers = #tpu.dot_dimension_numbers<[1], [0], [0], [1], [0, 0, 1, 1], [], []>} : vector<16x32xf32>, vector<32x32xf32>, vector<16x32xf32> -> vector<16x32xf32>
    %519 = arith.addf %515, %518 : vector<16x32xf32>
    %c0_119 = arith.constant 0 : index
    %c0_120 = arith.constant 0 : index
    %520 = vector.load %arg16[%c0_119, %c0_120] : memref<16x32xf32, #tpu.memory_space<vmem>>, vector<16x32xf32>
    tpu.vector_store %arg16[%c0_119, %c0_120], %519 {strides = array<i32>} : memref<16x32xf32, #tpu.memory_space<vmem>>, vector<16x32xf32>,
    %c0_121 = arith.constant 0 : index
    %c0_122 = arith.constant 0 : index
    %521 = vector.load %arg9[%c0_121, %c0_122] : memref<32x32xf32, #tpu.memory_space<vmem>>, vector<32x32xf32>
    %cst_123 = arith.constant dense<0.000000e+00> : vector<2x32xf32>
    %522 = tpu.matmul %262, %521, %cst_123 {dimension_numbers = #tpu.dot_dimension_numbers<[1], [0], [0], [1], [0, 0, 1, 1], [], []>} : vector<2x32xf32>, vector<32x32xf32>, vector<2x32xf32> -> vector<2x32xf32>
    %c0_124 = arith.constant 0 : index
    %c0_125 = arith.constant 0 : index
    %523 = vector.load %arg10[%c0_124, %c0_125] : memref<32x32xf32, #tpu.memory_space<vmem>>, vector<32x32xf32>
    %cst_126 = arith.constant dense<0.000000e+00> : vector<2x32xf32>
    %524 = tpu.matmul %511, %523, %cst_126 {dimension_numbers = #tpu.dot_dimension_numbers<[1], [0], [0], [1], [0, 0, 1, 1], [], []>} : vector<2x32xf32>, vector<32x32xf32>, vector<2x32xf32> -> vector<2x32xf32>
    %525 = arith.addf %522, %524 : vector<2x32xf32>
    %c0_127 = arith.constant 0 : index
    %c0_128 = arith.constant 0 : index
    %526 = vector.load %arg11[%c0_127, %c0_128] : memref<1x32xf32, #tpu.memory_space<vmem>>, vector<1x32xf32>
    %527 = vector.broadcast %526 : vector<1x32xf32> to vector<2x32xf32>
    %528 = arith.addf %525, %527 : vector<2x32xf32>
    %529 = math.tanh %528 : vector<2x32xf32>
    %c0_129 = arith.constant 0 : index
    %c0_130 = arith.constant 0 : index
    %530 = vector.load %arg17[%c0_129, %c0_130] : memref<2x32xf32, #tpu.memory_space<vmem>>, vector<2x32xf32>
    tpu.vector_store %arg17[%c0_129, %c0_130], %529 {strides = array<i32>} : memref<2x32xf32, #tpu.memory_space<vmem>>, vector<2x32xf32>,
    return
  }
}

module attributes {stable_mosaic.version = 11 : i64} {
  func.func @decoder_kernel(%arg0: i32, %arg1: memref<8xi32, #tpu.memory_space<smem>>, %arg2: memref<2x32xf32, #tpu.memory_space<vmem>>, %arg3: memref<8x2x32xf32, #tpu.memory_space<vmem>>, %arg4: memref<8x2x32xf32, #tpu.memory_space<vmem>>, %arg5: memref<8x2x32xf32, #tpu.memory_space<vmem>>, %arg6: memref<8x2x32xf32, #tpu.memory_space<vmem>>, %arg7: memref<32x16xf32, #tpu.memory_space<vmem>>, %arg8: memref<32x32xf32, #tpu.memory_space<vmem>>, %arg9: memref<1x32xf32, #tpu.memory_space<vmem>>, %arg10: memref<1x32xf32, #tpu.memory_space<vmem>>, %arg11: memref<16x96xf32, #tpu.memory_space<vmem>>, %arg12: memref<32x96xf32, #tpu.memory_space<vmem>>, %arg13: memref<32x96xf32, #tpu.memory_space<vmem>>, %arg14: memref<32x96xf32, #tpu.memory_space<vmem>>, %arg15: memref<1x96xf32, #tpu.memory_space<vmem>>, %arg16: memref<1x96xf32, #tpu.memory_space<vmem>>, %arg17: memref<32x32xf32, #tpu.memory_space<vmem>>, %arg18: memref<32x32xf32, #tpu.memory_space<vmem>>, %arg19: memref<32x32xf32, #tpu.memory_space<vmem>>, %arg20: memref<16x32xf32, #tpu.memory_space<vmem>>, %arg21: memref<1x32xf32, #tpu.memory_space<vmem>>, %arg22: memref<1x2x32xf32, #tpu.memory_space<vmem>>, %arg23: memref<2x32xf32, #tpu.memory_space<vmem>>, %arg24: memref<2x16xf32, #tpu.memory_space<vmem>>) attributes {dimension_semantics = [#tpu.dimension_semantics<arbitrary>], iteration_bounds = array<i64: 7>, scalar_prefetch = 1 : i64, scratch_operands = 2 : i64, tpu.core_type = #tpu.core_type<tc>, window_params = [{pipeline_mode = #tpu.pipeline_mode<synchronous>, transform_indices = @transform_0, window_bounds = array<i64: 2, 32>}, {pipeline_mode = #tpu.pipeline_mode<synchronous>, transform_indices = @transform_1, window_bounds = array<i64: 8, 2, 32>}, {pipeline_mode = #tpu.pipeline_mode<synchronous>, transform_indices = @transform_2, window_bounds = array<i64: 8, 2, 32>}, {pipeline_mode = #tpu.pipeline_mode<synchronous>, transform_indices = @transform_3, window_bounds = array<i64: 8, 2, 32>}, {pipeline_mode = #tpu.pipeline_mode<synchronous>, transform_indices = @transform_4, window_bounds = array<i64: 8, 2, 32>}, {pipeline_mode = #tpu.pipeline_mode<synchronous>, transform_indices = @transform_5, window_bounds = array<i64: 32, 16>}, {pipeline_mode = #tpu.pipeline_mode<synchronous>, transform_indices = @transform_6, window_bounds = array<i64: 32, 32>}, {pipeline_mode = #tpu.pipeline_mode<synchronous>, transform_indices = @transform_7, window_bounds = array<i64: 1, 32>}, {pipeline_mode = #tpu.pipeline_mode<synchronous>, transform_indices = @transform_8, window_bounds = array<i64: 1, 32>}, {pipeline_mode = #tpu.pipeline_mode<synchronous>, transform_indices = @transform_9, window_bounds = array<i64: 16, 96>}, {pipeline_mode = #tpu.pipeline_mode<synchronous>, transform_indices = @transform_10, window_bounds = array<i64: 32, 96>}, {pipeline_mode = #tpu.pipeline_mode<synchronous>, transform_indices = @transform_11, window_bounds = array<i64: 32, 96>}, {pipeline_mode = #tpu.pipeline_mode<synchronous>, transform_indices = @transform_12, window_bounds = array<i64: 32, 96>}, {pipeline_mode = #tpu.pipeline_mode<synchronous>, transform_indices = @transform_13, window_bounds = array<i64: 1, 96>}, {pipeline_mode = #tpu.pipeline_mode<synchronous>, transform_indices = @transform_14, window_bounds = array<i64: 1, 96>}, {pipeline_mode = #tpu.pipeline_mode<synchronous>, transform_indices = @transform_15, window_bounds = array<i64: 32, 32>}, {pipeline_mode = #tpu.pipeline_mode<synchronous>, transform_indices = @transform_16, window_bounds = array<i64: 32, 32>}, {pipeline_mode = #tpu.pipeline_mode<synchronous>, transform_indices = @transform_17, window_bounds = array<i64: 32, 32>}, {pipeline_mode = #tpu.pipeline_mode<synchronous>, transform_indices = @transform_18, window_bounds = array<i64: 16, 32>}, {pipeline_mode = #tpu.pipeline_mode<synchronous>, transform_indices = @transform_19, window_bounds = array<i64: 1, 32>}, {transform_indices = @transform_20, window_bounds = array<i64: 1, 2, 32>}]} {
    %c0_i32 = arith.constant 0 : i32
    %0 = arith.cmpi eq, %arg0, %c0_i32 : i32
    %1 = arith.extui %0 : i1 to i32
    %c0_i32_0 = arith.constant 0 : i32
    %2 = arith.cmpi ne, %1, %c0_i32_0 : i32
    scf.if %2 {
      %c0_73 = arith.constant 0 : index
      %c0_74 = arith.constant 0 : index
      %129 = vector.load %arg2[%c0_73, %c0_74] : memref<2x32xf32, #tpu.memory_space<vmem>>, vector<2x32xf32>
      %c0_75 = arith.constant 0 : index
      %c0_76 = arith.constant 0 : index
      %130 = vector.load %arg23[%c0_75, %c0_76] : memref<2x32xf32, #tpu.memory_space<vmem>>, vector<2x32xf32>
      tpu.vector_store %arg23[%c0_75, %c0_76], %129 {strides = array<i32>} : memref<2x32xf32, #tpu.memory_space<vmem>>, vector<2x32xf32>,
      %c0_77 = arith.constant 0 : index
      %c0_78 = arith.constant 0 : index
      %c0_79 = arith.constant 0 : index
      %131 = vector.load %arg6[%c0_77, %c0_78, %c0_79] : memref<8x2x32xf32, #tpu.memory_space<vmem>>, vector<1x2x32xf32>
      %132 = vector.shape_cast %131 : vector<1x2x32xf32> to vector<2x32xf32>
      %c0_80 = arith.constant 0 : index
      %c0_81 = arith.constant 0 : index
      %133 = vector.load %arg7[%c0_80, %c0_81] : memref<32x16xf32, #tpu.memory_space<vmem>>, vector<32x16xf32>
      %cst_82 = arith.constant dense<0.000000e+00> : vector<2x16xf32>
      %134 = tpu.matmul %132, %133, %cst_82 {dimension_numbers = #tpu.dot_dimension_numbers<[1], [0], [0], [1], [0, 0, 1, 1], [], []>} : vector<2x32xf32>, vector<32x16xf32>, vector<2x16xf32> -> vector<2x16xf32>
      %c0_83 = arith.constant 0 : index
      %c0_84 = arith.constant 0 : index
      %135 = vector.load %arg24[%c0_83, %c0_84] : memref<2x16xf32, #tpu.memory_space<vmem>>, vector<2x16xf32>
      tpu.vector_store %arg24[%c0_83, %c0_84], %134 {strides = array<i32>} : memref<2x16xf32, #tpu.memory_space<vmem>>, vector<2x16xf32>,
    } else {
    }
    %c0 = arith.constant 0 : index
    %c0_1 = arith.constant 0 : index
    %3 = vector.load %arg23[%c0, %c0_1] : memref<2x32xf32, #tpu.memory_space<vmem>>, vector<2x32xf32>
    %c0_2 = arith.constant 0 : index
    %c0_3 = arith.constant 0 : index
    %4 = vector.load %arg24[%c0_2, %c0_3] : memref<2x16xf32, #tpu.memory_space<vmem>>, vector<2x16xf32>
    %c0_4 = arith.constant 0 : index
    %c0_5 = arith.constant 0 : index
    %5 = vector.load %arg8[%c0_4, %c0_5] : memref<32x32xf32, #tpu.memory_space<vmem>>, vector<32x32xf32>
    %cst = arith.constant dense<0.000000e+00> : vector<2x32xf32>
    %6 = tpu.matmul %3, %5, %cst {dimension_numbers = #tpu.dot_dimension_numbers<[1], [0], [0], [1], [0, 0, 1, 1], [], []>} : vector<2x32xf32>, vector<32x32xf32>, vector<2x32xf32> -> vector<2x32xf32>
    %c0_6 = arith.constant 0 : index
    %c0_7 = arith.constant 0 : index
    %7 = vector.load %arg9[%c0_6, %c0_7] : memref<1x32xf32, #tpu.memory_space<vmem>>, vector<1x32xf32>
    %8 = vector.broadcast %7 : vector<1x32xf32> to vector<2x32xf32>
    %9 = arith.addf %6, %8 : vector<2x32xf32>
    %c0_8 = arith.constant 0 : index
    %c0_9 = arith.constant 0 : index
    %c0_10 = arith.constant 0 : index
    %10 = vector.load %arg5[%c0_8, %c0_9, %c0_10] : memref<8x2x32xf32, #tpu.memory_space<vmem>>, vector<8x2x32xf32>
    %11 = vector.shape_cast %9 : vector<2x32xf32> to vector<1x2x32xf32>
    %12 = vector.broadcast %11 : vector<1x2x32xf32> to vector<8x2x32xf32>
    %13 = arith.addf %10, %12 : vector<8x2x32xf32>
    %14 = math.tanh %13 : vector<8x2x32xf32>
    %c0_11 = arith.constant 0 : index
    %c0_12 = arith.constant 0 : index
    %15 = vector.load %arg10[%c0_11, %c0_12] : memref<1x32xf32, #tpu.memory_space<vmem>>, vector<1x32xf32>
    %16 = vector.shape_cast %15 : vector<1x32xf32> to vector<1x1x32xf32>
    %17 = vector.broadcast %16 : vector<1x1x32xf32> to vector<8x2x32xf32>
    %18 = arith.mulf %14, %17 : vector<8x2x32xf32>
    %cst_13 = arith.constant dense<0.000000e+00> : vector<8x2xf32>
    %19 = vector.multi_reduction <add>, %18, %cst_13 [2] : vector<8x2x32xf32> to vector<8x2xf32>
    %20 = vector.shape_cast %19 : vector<8x2xf32> to vector<8x2x1xf32>
    %cst_14 = arith.constant dense<0xFF800000> : vector<2x1xf32>
    %21 = vector.multi_reduction <maximumf>, %20, %cst_14 [0] : vector<8x2x1xf32> to vector<2x1xf32>
    %22 = vector.shape_cast %21 : vector<2x1xf32> to vector<1x2x1xf32>
    %23 = vector.broadcast %22 : vector<1x2x1xf32> to vector<8x2x1xf32>
    %24 = arith.subf %20, %23 : vector<8x2x1xf32>
    %25 = math.exp %24 : vector<8x2x1xf32>
    %cst_15 = arith.constant dense<0.000000e+00> : vector<2x1xf32>
    %26 = vector.multi_reduction <add>, %25, %cst_15 [0] : vector<8x2x1xf32> to vector<2x1xf32>
    %27 = vector.shape_cast %26 : vector<2x1xf32> to vector<1x2x1xf32>
    %28 = vector.broadcast %27 : vector<1x2x1xf32> to vector<8x2x1xf32>
    %29 = arith.divf %25, %28 : vector<8x2x1xf32>
    %c0_16 = arith.constant 0 : index
    %c0_17 = arith.constant 0 : index
    %c0_18 = arith.constant 0 : index
    %30 = vector.load %arg3[%c0_16, %c0_17, %c0_18] : memref<8x2x32xf32, #tpu.memory_space<vmem>>, vector<8x2x32xf32>
    %31 = vector.broadcast %29 : vector<8x2x1xf32> to vector<8x2x32xf32>
    %32 = arith.mulf %31, %30 : vector<8x2x32xf32>
    %cst_19 = arith.constant dense<0.000000e+00> : vector<2x32xf32>
    %33 = vector.multi_reduction <add>, %32, %cst_19 [0] : vector<8x2x32xf32> to vector<2x32xf32>
    %c0_20 = arith.constant 0 : index
    %c0_21 = arith.constant 0 : index
    %c0_22 = arith.constant 0 : index
    %34 = vector.load %arg4[%c0_20, %c0_21, %c0_22] : memref<8x2x32xf32, #tpu.memory_space<vmem>>, vector<8x2x32xf32>
    %35 = vector.broadcast %29 : vector<8x2x1xf32> to vector<8x2x32xf32>
    %36 = arith.mulf %35, %34 : vector<8x2x32xf32>
    %cst_23 = arith.constant dense<0.000000e+00> : vector<2x32xf32>
    %37 = vector.multi_reduction <add>, %36, %cst_23 [0] : vector<8x2x32xf32> to vector<2x32xf32>
    %c0_24 = arith.constant 0 : index
    %c0_25 = arith.constant 0 : index
    %38 = vector.load %arg11[%c0_24, %c0_25] : memref<16x96xf32, #tpu.memory_space<vmem>>, vector<16x96xf32>
    %cst_26 = arith.constant dense<0.000000e+00> : vector<2x96xf32>
    %39 = tpu.matmul %4, %38, %cst_26 {dimension_numbers = #tpu.dot_dimension_numbers<[1], [0], [0], [1], [0, 0, 1, 1], [], []>} : vector<2x16xf32>, vector<16x96xf32>, vector<2x96xf32> -> vector<2x96xf32>
    %c0_27 = arith.constant 0 : index
    %c0_28 = arith.constant 0 : index
    %40 = vector.load %arg12[%c0_27, %c0_28] : memref<32x96xf32, #tpu.memory_space<vmem>>, vector<32x96xf32>
    %cst_29 = arith.constant dense<0.000000e+00> : vector<2x96xf32>
    %41 = tpu.matmul %33, %40, %cst_29 {dimension_numbers = #tpu.dot_dimension_numbers<[1], [0], [0], [1], [0, 0, 1, 1], [], []>} : vector<2x32xf32>, vector<32x96xf32>, vector<2x96xf32> -> vector<2x96xf32>
    %42 = arith.addf %39, %41 : vector<2x96xf32>
    %c0_30 = arith.constant 0 : index
    %c0_31 = arith.constant 0 : index
    %43 = vector.load %arg13[%c0_30, %c0_31] : memref<32x96xf32, #tpu.memory_space<vmem>>, vector<32x96xf32>
    %cst_32 = arith.constant dense<0.000000e+00> : vector<2x96xf32>
    %44 = tpu.matmul %37, %43, %cst_32 {dimension_numbers = #tpu.dot_dimension_numbers<[1], [0], [0], [1], [0, 0, 1, 1], [], []>} : vector<2x32xf32>, vector<32x96xf32>, vector<2x96xf32> -> vector<2x96xf32>
    %45 = arith.addf %42, %44 : vector<2x96xf32>
    %c0_33 = arith.constant 0 : index
    %c0_34 = arith.constant 0 : index
    %46 = vector.load %arg15[%c0_33, %c0_34] : memref<1x96xf32, #tpu.memory_space<vmem>>, vector<1x96xf32>
    %47 = vector.broadcast %46 : vector<1x96xf32> to vector<2x96xf32>
    %48 = arith.addf %45, %47 : vector<2x96xf32>
    %c0_35 = arith.constant 0 : index
    %c0_36 = arith.constant 0 : index
    %49 = vector.load %arg14[%c0_35, %c0_36] : memref<32x96xf32, #tpu.memory_space<vmem>>, vector<32x96xf32>
    %cst_37 = arith.constant dense<0.000000e+00> : vector<2x96xf32>
    %50 = tpu.matmul %3, %49, %cst_37 {dimension_numbers = #tpu.dot_dimension_numbers<[1], [0], [0], [1], [0, 0, 1, 1], [], []>} : vector<2x32xf32>, vector<32x96xf32>, vector<2x96xf32> -> vector<2x96xf32>
    %c0_38 = arith.constant 0 : index
    %c0_39 = arith.constant 0 : index
    %51 = vector.load %arg16[%c0_38, %c0_39] : memref<1x96xf32, #tpu.memory_space<vmem>>, vector<1x96xf32>
    %52 = vector.broadcast %51 : vector<1x96xf32> to vector<2x96xf32>
    %53 = arith.addf %50, %52 : vector<2x96xf32>
    %54 = vector.extract_strided_slice %48 {offsets = [0, 0], sizes = [2, 32], strides = [1, 1]} : vector<2x96xf32> to vector<2x32xf32>
    %55 = vector.extract_strided_slice %53 {offsets = [0, 0], sizes = [2, 32], strides = [1, 1]} : vector<2x96xf32> to vector<2x32xf32>
    %56 = arith.addf %54, %55 : vector<2x32xf32>
    %57 = arith.negf %56 : vector<2x32xf32>
    %58 = math.exp %57 : vector<2x32xf32>
    %cst_40 = arith.constant 1.000000e+00 : f32
    %59 = vector.broadcast %cst_40 : f32 to vector<2x32xf32>
    %60 = arith.addf %59, %58 : vector<2x32xf32>
    %61 = arith.divf %59, %60 : vector<2x32xf32>
    %62 = vector.extract_strided_slice %48 {offsets = [0, 32], sizes = [2, 32], strides = [1, 1]} : vector<2x96xf32> to vector<2x32xf32>
    %63 = vector.extract_strided_slice %53 {offsets = [0, 32], sizes = [2, 32], strides = [1, 1]} : vector<2x96xf32> to vector<2x32xf32>
    %64 = arith.addf %62, %63 : vector<2x32xf32>
    %65 = arith.negf %64 : vector<2x32xf32>
    %66 = math.exp %65 : vector<2x32xf32>
    %cst_41 = arith.constant 1.000000e+00 : f32
    %67 = vector.broadcast %cst_41 : f32 to vector<2x32xf32>
    %68 = arith.addf %67, %66 : vector<2x32xf32>
    %69 = arith.divf %67, %68 : vector<2x32xf32>
    %70 = vector.extract_strided_slice %48 {offsets = [0, 64], sizes = [2, 32], strides = [1, 1]} : vector<2x96xf32> to vector<2x32xf32>
    %71 = vector.extract_strided_slice %53 {offsets = [0, 64], sizes = [2, 32], strides = [1, 1]} : vector<2x96xf32> to vector<2x32xf32>
    %72 = arith.mulf %61, %71 : vector<2x32xf32>
    %73 = arith.addf %70, %72 : vector<2x32xf32>
    %74 = math.tanh %73 : vector<2x32xf32>
    %cst_42 = arith.constant 1.000000e+00 : f32
    %75 = vector.broadcast %cst_42 : f32 to vector<2x32xf32>
    %76 = arith.subf %75, %69 : vector<2x32xf32>
    %77 = arith.mulf %76, %74 : vector<2x32xf32>
    %78 = arith.mulf %69, %3 : vector<2x32xf32>
    %79 = arith.addf %77, %78 : vector<2x32xf32>
    %c0_43 = arith.constant 0 : index
    %c0_44 = arith.constant 0 : index
    %80 = vector.load %arg17[%c0_43, %c0_44] : memref<32x32xf32, #tpu.memory_space<vmem>>, vector<32x32xf32>
    %cst_45 = arith.constant dense<0.000000e+00> : vector<2x32xf32>
    %81 = tpu.matmul %79, %80, %cst_45 {dimension_numbers = #tpu.dot_dimension_numbers<[1], [0], [0], [1], [0, 0, 1, 1], [], []>} : vector<2x32xf32>, vector<32x32xf32>, vector<2x32xf32> -> vector<2x32xf32>
    %c0_46 = arith.constant 0 : index
    %c0_47 = arith.constant 0 : index
    %82 = vector.load %arg18[%c0_46, %c0_47] : memref<32x32xf32, #tpu.memory_space<vmem>>, vector<32x32xf32>
    %cst_48 = arith.constant dense<0.000000e+00> : vector<2x32xf32>
    %83 = tpu.matmul %33, %82, %cst_48 {dimension_numbers = #tpu.dot_dimension_numbers<[1], [0], [0], [1], [0, 0, 1, 1], [], []>} : vector<2x32xf32>, vector<32x32xf32>, vector<2x32xf32> -> vector<2x32xf32>
    %84 = arith.addf %81, %83 : vector<2x32xf32>
    %c0_49 = arith.constant 0 : index
    %c0_50 = arith.constant 0 : index
    %85 = vector.load %arg19[%c0_49, %c0_50] : memref<32x32xf32, #tpu.memory_space<vmem>>, vector<32x32xf32>
    %cst_51 = arith.constant dense<0.000000e+00> : vector<2x32xf32>
    %86 = tpu.matmul %37, %85, %cst_51 {dimension_numbers = #tpu.dot_dimension_numbers<[1], [0], [0], [1], [0, 0, 1, 1], [], []>} : vector<2x32xf32>, vector<32x32xf32>, vector<2x32xf32> -> vector<2x32xf32>
    %87 = arith.addf %84, %86 : vector<2x32xf32>
    %c0_52 = arith.constant 0 : index
    %c0_53 = arith.constant 0 : index
    %88 = vector.load %arg20[%c0_52, %c0_53] : memref<16x32xf32, #tpu.memory_space<vmem>>, vector<16x32xf32>
    %cst_54 = arith.constant dense<0.000000e+00> : vector<2x32xf32>
    %89 = tpu.matmul %4, %88, %cst_54 {dimension_numbers = #tpu.dot_dimension_numbers<[1], [0], [0], [1], [0, 0, 1, 1], [], []>} : vector<2x16xf32>, vector<16x32xf32>, vector<2x32xf32> -> vector<2x32xf32>
    %90 = arith.addf %87, %89 : vector<2x32xf32>
    %c0_55 = arith.constant 0 : index
    %c0_56 = arith.constant 0 : index
    %91 = vector.load %arg21[%c0_55, %c0_56] : memref<1x32xf32, #tpu.memory_space<vmem>>, vector<1x32xf32>
    %92 = vector.broadcast %91 : vector<1x32xf32> to vector<2x32xf32>
    %93 = arith.addf %90, %92 : vector<2x32xf32>
    %c0_57 = arith.constant 0 : index
    %c0_58 = arith.constant 0 : index
    %c0_59 = arith.constant 0 : index
    %94 = vector.load %arg22[%c0_57, %c0_58, %c0_59] : memref<1x2x32xf32, #tpu.memory_space<vmem>>, vector<1x2x32xf32>
    %95 = vector.shape_cast %94 : vector<1x2x32xf32> to vector<2x32xf32>
    %96 = vector.shape_cast %93 : vector<2x32xf32> to vector<1x2x32xf32>
    tpu.vector_store %arg22[%c0_57, %c0_58, %c0_59], %96 {strides = array<i32>} : memref<1x2x32xf32, #tpu.memory_space<vmem>>, vector<1x2x32xf32>,
    %c0_60 = arith.constant 0 : index
    %c0_61 = arith.constant 0 : index
    %97 = vector.load %arg23[%c0_60, %c0_61] : memref<2x32xf32, #tpu.memory_space<vmem>>, vector<2x32xf32>
    tpu.vector_store %arg23[%c0_60, %c0_61], %79 {strides = array<i32>} : memref<2x32xf32, #tpu.memory_space<vmem>>, vector<2x32xf32>,
    %c1_i32 = arith.constant 1 : i32
    %98 = arith.addi %arg0, %c1_i32 : i32
    %99 = tpu.iota {dimensions = array<i32: 1>} : vector<2x32xi32>
    %cst_62 = arith.constant dense<0xFF800000> : vector<2xf32>
    %100 = vector.multi_reduction <maximumf>, %93, %cst_62 [1] : vector<2x32xf32> to vector<2xf32>
    %101 = vector.shape_cast %100 : vector<2xf32> to vector<2x1xf32>
    %102 = vector.broadcast %101 : vector<2x1xf32> to vector<2x32xf32>
    %103 = arith.cmpf oeq, %93, %102 : vector<2x32xf32>
    %c32_i32 = arith.constant 32 : i32
    %104 = vector.broadcast %c32_i32 : i32 to vector<2x32xi32>
    %105 = arith.select %103, %99, %104 : vector<2x32xi1>, vector<2x32xi32>
    %cst_63 = arith.constant dense<2147483647> : vector<2xi32>
    %106 = vector.multi_reduction <minsi>, %105, %cst_63 [1] : vector<2x32xi32> to vector<2xi32>
    %107 = vector.shape_cast %106 : vector<2xi32> to vector<2x1xi32>
    %108 = vector.broadcast %107 : vector<2x1xi32> to vector<2x32xi32>
    %109 = arith.cmpi eq, %99, %108 : vector<2x32xi32>
    %110 = arith.extui %109 : vector<2x32xi1> to vector<2x32xi32>
    %111 = arith.sitofp %110 : vector<2x32xi32> to vector<2x32xf32>
    %112 = arith.index_cast %98 : i32 to index
    %113 = memref.load %arg1[%112] : memref<8xi32, #tpu.memory_space<smem>>
    %c0_i32_64 = arith.constant 0 : i32
    %114 = arith.cmpi ne, %113, %c0_i32_64 : i32
    %115 = arith.extui %114 : i1 to i32
    %116 = arith.sitofp %115 : i32 to f32
    %117 = arith.index_cast %98 : i32 to index
    %c0_65 = arith.constant 0 : index
    %c0_66 = arith.constant 0 : index
    %118 = vector.load %arg6[%117, %c0_65, %c0_66] : memref<8x2x32xf32, #tpu.memory_space<vmem>>, vector<1x2x32xf32>
    %119 = vector.shape_cast %118 : vector<1x2x32xf32> to vector<2x32xf32>
    %120 = vector.broadcast %116 : f32 to vector<2x32xf32>
    %121 = arith.mulf %120, %119 : vector<2x32xf32>
    %cst_67 = arith.constant 1.000000e+00 : f32
    %122 = arith.subf %cst_67, %116 : f32
    %123 = vector.broadcast %122 : f32 to vector<2x32xf32>
    %124 = arith.mulf %123, %111 : vector<2x32xf32>
    %125 = arith.addf %121, %124 : vector<2x32xf32>
    %c0_68 = arith.constant 0 : index
    %c0_69 = arith.constant 0 : index
    %126 = vector.load %arg7[%c0_68, %c0_69] : memref<32x16xf32, #tpu.memory_space<vmem>>, vector<32x16xf32>
    %cst_70 = arith.constant dense<0.000000e+00> : vector<2x16xf32>
    %127 = tpu.matmul %125, %126, %cst_70 {dimension_numbers = #tpu.dot_dimension_numbers<[1], [0], [0], [1], [0, 0, 1, 1], [], []>} : vector<2x32xf32>, vector<32x16xf32>, vector<2x16xf32> -> vector<2x16xf32>
    %c0_71 = arith.constant 0 : index
    %c0_72 = arith.constant 0 : index
    %128 = vector.load %arg24[%c0_71, %c0_72] : memref<2x16xf32, #tpu.memory_space<vmem>>, vector<2x16xf32>
    tpu.vector_store %arg24[%c0_71, %c0_72], %127 {strides = array<i32>} : memref<2x16xf32, #tpu.memory_space<vmem>>, vector<2x16xf32>,
    return
  }
  func.func @transform_0(%arg0: i32, %arg1: memref<8xi32, #tpu.memory_space<smem>>) -> (i32, i32) {
    %c0_i32 = arith.constant 0 : i32
    %c0_i32_0 = arith.constant 0 : i32
    %c0_i32_1 = arith.constant 0 : i32
    return %c0_i32, %c0_i32_0 : i32, i32
  }
  func.func @transform_1(%arg0: i32, %arg1: memref<8xi32, #tpu.memory_space<smem>>) -> (i32, i32, i32) {
    %c0_i32 = arith.constant 0 : i32
    %c0_i32_0 = arith.constant 0 : i32
    %c0_i32_1 = arith.constant 0 : i32
    %c0_i32_2 = arith.constant 0 : i32
    return %c0_i32, %c0_i32_0, %c0_i32_1 : i32, i32, i32
  }
  func.func @transform_2(%arg0: i32, %arg1: memref<8xi32, #tpu.memory_space<smem>>) -> (i32, i32, i32) {
    %c0_i32 = arith.constant 0 : i32
    %c0_i32_0 = arith.constant 0 : i32
    %c0_i32_1 = arith.constant 0 : i32
    %c0_i32_2 = arith.constant 0 : i32
    return %c0_i32, %c0_i32_0, %c0_i32_1 : i32, i32, i32
  }
  func.func @transform_3(%arg0: i32, %arg1: memref<8xi32, #tpu.memory_space<smem>>) -> (i32, i32, i32) {
    %c0_i32 = arith.constant 0 : i32
    %c0_i32_0 = arith.constant 0 : i32
    %c0_i32_1 = arith.constant 0 : i32
    %c0_i32_2 = arith.constant 0 : i32
    return %c0_i32, %c0_i32_0, %c0_i32_1 : i32, i32, i32
  }
  func.func @transform_4(%arg0: i32, %arg1: memref<8xi32, #tpu.memory_space<smem>>) -> (i32, i32, i32) {
    %c0_i32 = arith.constant 0 : i32
    %c0_i32_0 = arith.constant 0 : i32
    %c0_i32_1 = arith.constant 0 : i32
    %c0_i32_2 = arith.constant 0 : i32
    return %c0_i32, %c0_i32_0, %c0_i32_1 : i32, i32, i32
  }
  func.func @transform_5(%arg0: i32, %arg1: memref<8xi32, #tpu.memory_space<smem>>) -> (i32, i32) {
    %c0_i32 = arith.constant 0 : i32
    %c0_i32_0 = arith.constant 0 : i32
    %c0_i32_1 = arith.constant 0 : i32
    return %c0_i32, %c0_i32_0 : i32, i32
  }
  func.func @transform_6(%arg0: i32, %arg1: memref<8xi32, #tpu.memory_space<smem>>) -> (i32, i32) {
    %c0_i32 = arith.constant 0 : i32
    %c0_i32_0 = arith.constant 0 : i32
    %c0_i32_1 = arith.constant 0 : i32
    return %c0_i32, %c0_i32_0 : i32, i32
  }
  func.func @transform_7(%arg0: i32, %arg1: memref<8xi32, #tpu.memory_space<smem>>) -> (i32, i32) {
    %c0_i32 = arith.constant 0 : i32
    %c0_i32_0 = arith.constant 0 : i32
    %c0_i32_1 = arith.constant 0 : i32
    return %c0_i32, %c0_i32_0 : i32, i32
  }
  func.func @transform_8(%arg0: i32, %arg1: memref<8xi32, #tpu.memory_space<smem>>) -> (i32, i32) {
    %c0_i32 = arith.constant 0 : i32
    %c0_i32_0 = arith.constant 0 : i32
    %c0_i32_1 = arith.constant 0 : i32
    return %c0_i32, %c0_i32_0 : i32, i32
  }
  func.func @transform_9(%arg0: i32, %arg1: memref<8xi32, #tpu.memory_space<smem>>) -> (i32, i32) {
    %c0_i32 = arith.constant 0 : i32
    %c0_i32_0 = arith.constant 0 : i32
    %c0_i32_1 = arith.constant 0 : i32
    return %c0_i32, %c0_i32_0 : i32, i32
  }
  func.func @transform_10(%arg0: i32, %arg1: memref<8xi32, #tpu.memory_space<smem>>) -> (i32, i32) {
    %c0_i32 = arith.constant 0 : i32
    %c0_i32_0 = arith.constant 0 : i32
    %c0_i32_1 = arith.constant 0 : i32
    return %c0_i32, %c0_i32_0 : i32, i32
  }
  func.func @transform_11(%arg0: i32, %arg1: memref<8xi32, #tpu.memory_space<smem>>) -> (i32, i32) {
    %c0_i32 = arith.constant 0 : i32
    %c0_i32_0 = arith.constant 0 : i32
    %c0_i32_1 = arith.constant 0 : i32
    return %c0_i32, %c0_i32_0 : i32, i32
  }
  func.func @transform_12(%arg0: i32, %arg1: memref<8xi32, #tpu.memory_space<smem>>) -> (i32, i32) {
    %c0_i32 = arith.constant 0 : i32
    %c0_i32_0 = arith.constant 0 : i32
    %c0_i32_1 = arith.constant 0 : i32
    return %c0_i32, %c0_i32_0 : i32, i32
  }
  func.func @transform_13(%arg0: i32, %arg1: memref<8xi32, #tpu.memory_space<smem>>) -> (i32, i32) {
    %c0_i32 = arith.constant 0 : i32
    %c0_i32_0 = arith.constant 0 : i32
    %c0_i32_1 = arith.constant 0 : i32
    return %c0_i32, %c0_i32_0 : i32, i32
  }
  func.func @transform_14(%arg0: i32, %arg1: memref<8xi32, #tpu.memory_space<smem>>) -> (i32, i32) {
    %c0_i32 = arith.constant 0 : i32
    %c0_i32_0 = arith.constant 0 : i32
    %c0_i32_1 = arith.constant 0 : i32
    return %c0_i32, %c0_i32_0 : i32, i32
  }
  func.func @transform_15(%arg0: i32, %arg1: memref<8xi32, #tpu.memory_space<smem>>) -> (i32, i32) {
    %c0_i32 = arith.constant 0 : i32
    %c0_i32_0 = arith.constant 0 : i32
    %c0_i32_1 = arith.constant 0 : i32
    return %c0_i32, %c0_i32_0 : i32, i32
  }
  func.func @transform_16(%arg0: i32, %arg1: memref<8xi32, #tpu.memory_space<smem>>) -> (i32, i32) {
    %c0_i32 = arith.constant 0 : i32
    %c0_i32_0 = arith.constant 0 : i32
    %c0_i32_1 = arith.constant 0 : i32
    return %c0_i32, %c0_i32_0 : i32, i32
  }
  func.func @transform_17(%arg0: i32, %arg1: memref<8xi32, #tpu.memory_space<smem>>) -> (i32, i32) {
    %c0_i32 = arith.constant 0 : i32
    %c0_i32_0 = arith.constant 0 : i32
    %c0_i32_1 = arith.constant 0 : i32
    return %c0_i32, %c0_i32_0 : i32, i32
  }
  func.func @transform_18(%arg0: i32, %arg1: memref<8xi32, #tpu.memory_space<smem>>) -> (i32, i32) {
    %c0_i32 = arith.constant 0 : i32
    %c0_i32_0 = arith.constant 0 : i32
    %c0_i32_1 = arith.constant 0 : i32
    return %c0_i32, %c0_i32_0 : i32, i32
  }
  func.func @transform_19(%arg0: i32, %arg1: memref<8xi32, #tpu.memory_space<smem>>) -> (i32, i32) {
    %c0_i32 = arith.constant 0 : i32
    %c0_i32_0 = arith.constant 0 : i32
    %c0_i32_1 = arith.constant 0 : i32
    return %c0_i32, %c0_i32_0 : i32, i32
  }
  func.func @transform_20(%arg0: i32, %arg1: memref<8xi32, #tpu.memory_space<smem>>) -> (i32, i32, i32) {
    %c0_i32 = arith.constant 0 : i32
    %c0_i32_0 = arith.constant 0 : i32
    %c0_i32_1 = arith.constant 0 : i32
    return %arg0, %c0_i32, %c0_i32_0 : i32, i32, i32
  }
}

</mosaic_0001>

<llo_original>
// kernel: _seq2seq_forward.3
$region0: #{_seq2seq_forward.3}
  #allocation0 [shape = 'u32[]', space=smem, size = 0x4, offset = 0x4, fixed_abs, tag = 'smem constant byte address 0x4 - core index']
  #allocation1 [shape = 'u32[144,128]{1,0:T(1,128)}', space=vmem, size = 0x12000, scoped, tag = 'internal scratch']
  #allocation2 [shape = 'f32[2,32]{1,0:T(2,128)}', space=vmem, size = 0x400, scoped, tag = 'scratch operand']
  #allocation3 [shape = 'f32[2,16]{1,0:T(2,128)}', space=vmem, size = 0x400, scoped, tag = 'scratch operand']
  #allocation4 [shape = 's32[1]{0}', space=sflag, size = 0x4, scoped, tag = 'scoped memory for _seq2seq_forward.3']
  #allocation5 [shape = 'u8[512]{0}', space=smem, size = 0x200, scoped, tag = 'prefetched SMEM operand 0']
  %s0 = inlined_call_operand.vmem [shape: s32[8], index: 0, kind: input, shape index: {}]
  %s1 = inlined_call_operand.vmem [shape: f32[2,32], index: 1, kind: input, shape index: {}]
  %s2 = inlined_call_operand.vmem [shape: f32[8,2,32], index: 2, kind: input, shape index: {}]
  %s3 = inlined_call_operand.vmem [shape: f32[8,2,32], index: 3, kind: input, shape index: {}]
  %s4 = inlined_call_operand.vmem [shape: f32[8,2,32], index: 4, kind: input, shape index: {}]
  %s5 = inlined_call_operand.vmem [shape: f32[8,2,32], index: 5, kind: input, shape index: {}]
  %s6 = inlined_call_operand.vmem [shape: f32[32,16], index: 6, kind: input, shape index: {}]
  %s7 = inlined_call_operand.vmem [shape: f32[32,32], index: 7, kind: input, shape index: {}]
  %s8 = inlined_call_operand.vmem [shape: f32[1,32], index: 8, kind: input, shape index: {}]
  %s9 = inlined_call_operand.vmem [shape: f32[1,32], index: 9, kind: input, shape index: {}]
  %s10 = inlined_call_operand.vmem [shape: f32[16,96], index: 10, kind: input, shape index: {}]
  %s11 = inlined_call_operand.vmem [shape: f32[32,96], index: 11, kind: input, shape index: {}]
  %s12 = inlined_call_operand.vmem [shape: f32[32,96], index: 12, kind: input, shape index: {}]
  %s13 = inlined_call_operand.vmem [shape: f32[32,96], index: 13, kind: input, shape index: {}]
  %s14 = inlined_call_operand.vmem [shape: f32[1,96], index: 14, kind: input, shape index: {}]
  %s15 = inlined_call_operand.vmem [shape: f32[1,96], index: 15, kind: input, shape index: {}]
  %s16 = inlined_call_operand.vmem [shape: f32[32,32], index: 16, kind: input, shape index: {}]
  %s17 = inlined_call_operand.vmem [shape: f32[32,32], index: 17, kind: input, shape index: {}]
  %s18 = inlined_call_operand.vmem [shape: f32[32,32], index: 18, kind: input, shape index: {}]
  %s19 = inlined_call_operand.vmem [shape: f32[16,32], index: 19, kind: input, shape index: {}]
  %s20 = inlined_call_operand.vmem [shape: f32[1,32], index: 20, kind: input, shape index: {}]
  %s21 = inlined_call_operand.vmem [shape: f32[7,2,32], index: 21, kind: output, shape index: {}]
  %s22 = sld [smem:[#allocation0]]
  $region117: #{_seq2seq_forward.3} parent=0
    _
  %s24 = ssub.s32 1, %s22
  %s25 = scalar_select 0, %s24, %s22
  %s26 = sshll.u32 %s0, 4
  %s27 = int_to_ptr.vmem [resolvable:$true] %s26
  %29 = dma.vmem_to_smem %s27, 16, [#allocation5], [#allocation4]
  %30 = dma.done [#allocation4], 16
  %31 = sfence
  loop: start=0, step=1, limit=9
  $region2: #{_seq2seq_forward.3} parent=0 // loop_pre_header
    _
  $region3: #{_seq2seq_forward.3} parent=0 // loop_header
    %s33 = sphi 0, %s37
    %p34 = scmp.ge.s32.totalorder %s33, 9
    %s41 = sphi 0, %s41
    %s43 = sphi 0, %s41
    %s44 = sphi 0, %s43
    %s58 = sphi 0, %s44
    %s62 = sphi 0, %s62
    %s64 = sphi 0, %s62
    %s65 = sphi 0, %s64
    %s79 = sphi 0, %s65
    %s83 = sphi 0, %s83
    %s85 = sphi 0, %s83
    %s86 = sphi 0, %s85
    %s100 = sphi 0, %s86
    %s104 = sphi 0, %s104
    %s106 = sphi 0, %s104
    %s107 = sphi 0, %s106
    %s121 = sphi 0, %s107
    %s125 = sphi 0, %s125
    %s127 = sphi 0, %s125
    %s128 = sphi 0, %s127
    %s142 = sphi 0, %s128
    %s146 = sphi 0, %s146
    %s148 = sphi 0, %s146
    %s149 = sphi 0, %s148
    %s163 = sphi 0, %s149
    %s167 = sphi 0, %s167
    %s169 = sphi 0, %s167
    %s170 = sphi 0, %s169
    %s184 = sphi 0, %s170
    %s188 = sphi 0, %s188
    %s190 = sphi 0, %s188
    %s191 = sphi 0, %s190
    %s205 = sphi 0, %s191
    %s209 = sphi 0, %s209
    %s211 = sphi 0, %s209
    %s212 = sphi 0, %s211
    %s226 = sphi 0, %s212
    %s230 = sphi 0, %s230
    %s232 = sphi 0, %s230
    %s233 = sphi 0, %s232
    %s247 = sphi 0, %s233
    %s251 = sphi 0, %s251
    %s253 = sphi 0, %s251
    %s254 = sphi 0, %s253
    %s268 = sphi 0, %s254
    %s272 = sphi 0, %s272
    %s274 = sphi 0, %s272
    %s275 = sphi 0, %s274
    %s289 = sphi 0, %s275
    %s293 = sphi 0, %s293
    %s295 = sphi 0, %s293
    %s296 = sphi 0, %s295
    %s310 = sphi 0, %s296
    %s314 = sphi 0, %s314
    %s316 = sphi 0, %s314
    %s317 = sphi 0, %s316
    %s331 = sphi 0, %s317
    %s335 = sphi 0, %s335
    %s337 = sphi 0, %s335
    %s338 = sphi 0, %s337
    %s352 = sphi 0, %s338
    %s356 = sphi 0, %s356
    %s358 = sphi 0, %s356
    %s359 = sphi 0, %s358
    %s373 = sphi 0, %s359
    %s377 = sphi 0, %s377
    %s379 = sphi 0, %s377
    %s380 = sphi 0, %s379
    %s394 = sphi 0, %s380
    %s398 = sphi 0, %s398
    %s400 = sphi 0, %s398
    %s401 = sphi 0, %s400
    %s415 = sphi 0, %s401
    %s419 = sphi 0, %s419
    %s421 = sphi 0, %s419
    %s422 = sphi 0, %s421
    %s436 = sphi 0, %s422
    %s440 = sphi 0, %s440
    %s442 = sphi 0, %s440
    %s443 = sphi 0, %s442
    %s457 = sphi 0, %s443
    %s463 = sphi 0, %s465
    %s466 = sphi 0, %s463
    %s467 = sphi 0, %s466
    %s483 = sphi 0, %s467
  $region4: #{_seq2seq_forward.3} parent=0 // loop_header_branch
    %36 = sbr.rel (%p34) target = $region8
  $region5: #{_seq2seq_forward.3} parent=0 // loop_body
    %s38 = ssub.s32 %s33, 1
    %s39 = ssub.s32 %s33, 2
    %s40 = sadd.s32 %s33, 1
    %s42 = sadd.s32 %s41, 1
    %p45 = scmp.eq.s32.totalorder %s33, 6
    %p46 = scmp.ne.s32.totalorder %s41, %s43
    %p47 = scmp.eq.s32.totalorder %s33, 0
    %p48 = por %p46, %p47
    %p49 = scmp.ne.s32.totalorder %s41, %s43
    %p50 = scmp.eq.s32.totalorder %s38, 6
    %p51 = por %p49, %p50
    %p52 = scmp.ne.s32.totalorder %s43, %s44
    %p53 = scmp.eq.s32.totalorder %s38, 0
    %p54 = por %p52, %p53
    %p55 = scmp.ne.s32.totalorder %s43, %s44
    %p56 = scmp.eq.s32.totalorder %s39, 6
    %p57 = por %p55, %p56
    %p59 = scmp.ne.s32.totalorder %s44, %s58
    %p60 = scmp.eq.s32.totalorder %s39, 0
    %p61 = por %p59, %p60
    %s63 = sadd.s32 %s62, 1
    %p66 = scmp.eq.s32.totalorder %s33, 6
    %p67 = scmp.ne.s32.totalorder %s62, %s64
    %p68 = scmp.eq.s32.totalorder %s33, 0
    %p69 = por %p67, %p68
    %p70 = scmp.ne.s32.totalorder %s62, %s64
    %p71 = scmp.eq.s32.totalorder %s38, 6
    %p72 = por %p70, %p71
    %p73 = scmp.ne.s32.totalorder %s64, %s65
    %p74 = scmp.eq.s32.totalorder %s38, 0
    %p75 = por %p73, %p74
    %p76 = scmp.ne.s32.totalorder %s64, %s65
    %p77 = scmp.eq.s32.totalorder %s39, 6
    %p78 = por %p76, %p77
    %p80 = scmp.ne.s32.totalorder %s65, %s79
    %p81 = scmp.eq.s32.totalorder %s39, 0
    %p82 = por %p80, %p81
    %s84 = sadd.s32 %s83, 1
    %p87 = scmp.eq.s32.totalorder %s33, 6
    %p88 = scmp.ne.s32.totalorder %s83, %s85
    %p89 = scmp.eq.s32.totalorder %s33, 0
    %p90 = por %p88, %p89
    %p91 = scmp.ne.s32.totalorder %s83, %s85
    %p92 = scmp.eq.s32.totalorder %s38, 6
    %p93 = por %p91, %p92
    %p94 = scmp.ne.s32.totalorder %s85, %s86
    %p95 = scmp.eq.s32.totalorder %s38, 0
    %p96 = por %p94, %p95
    %p97 = scmp.ne.s32.totalorder %s85, %s86
    %p98 = scmp.eq.s32.totalorder %s39, 6
    %p99 = por %p97, %p98
    %p101 = scmp.ne.s32.totalorder %s86, %s100
    %p102 = scmp.eq.s32.totalorder %s39, 0
    %p103 = por %p101, %p102
    %s105 = sadd.s32 %s104, 1
    %p108 = scmp.eq.s32.totalorder %s33, 6
    %p109 = scmp.ne.s32.totalorder %s104, %s106
    %p110 = scmp.eq.s32.totalorder %s33, 0
    %p111 = por %p109, %p110
    %p112 = scmp.ne.s32.totalorder %s104, %s106
    %p113 = scmp.eq.s32.totalorder %s38, 6
    %p114 = por %p112, %p113
    %p115 = scmp.ne.s32.totalorder %s106, %s107
    %p116 = scmp.eq.s32.totalorder %s38, 0
    %p117 = por %p115, %p116
    %p118 = scmp.ne.s32.totalorder %s106, %s107
    %p119 = scmp.eq.s32.totalorder %s39, 6
    %p120 = por %p118, %p119
    %p122 = scmp.ne.s32.totalorder %s107, %s121
    %p123 = scmp.eq.s32.totalorder %s39, 0
    %p124 = por %p122, %p123
    %s126 = sadd.s32 %s125, 1
    %p129 = scmp.eq.s32.totalorder %s33, 6
    %p130 = scmp.ne.s32.totalorder %s125, %s127
    %p131 = scmp.eq.s32.totalorder %s33, 0
    %p132 = por %p130, %p131
    %p133 = scmp.ne.s32.totalorder %s125, %s127
    %p134 = scmp.eq.s32.totalorder %s38, 6
    %p135 = por %p133, %p134
    %p136 = scmp.ne.s32.totalorder %s127, %s128
    %p137 = scmp.eq.s32.totalorder %s38, 0
    %p138 = por %p136, %p137
    %p139 = scmp.ne.s32.totalorder %s127, %s128
    %p140 = scmp.eq.s32.totalorder %s39, 6
    %p141 = por %p139, %p140
    %p143 = scmp.ne.s32.totalorder %s128, %s142
    %p144 = scmp.eq.s32.totalorder %s39, 0
    %p145 = por %p143, %p144
    %s147 = sadd.s32 %s146, 1
    %p150 = scmp.eq.s32.totalorder %s33, 6
    %p151 = scmp.ne.s32.totalorder %s146, %s148
    %p152 = scmp.eq.s32.totalorder %s33, 0
    %p153 = por %p151, %p152
    %p154 = scmp.ne.s32.totalorder %s146, %s148
    %p155 = scmp.eq.s32.totalorder %s38, 6
    %p156 = por %p154, %p155
    %p157 = scmp.ne.s32.totalorder %s148, %s149
    %p158 = scmp.eq.s32.totalorder %s38, 0
    %p159 = por %p157, %p158
    %p160 = scmp.ne.s32.totalorder %s148, %s149
    %p161 = scmp.eq.s32.totalorder %s39, 6
    %p162 = por %p160, %p161
    %p164 = scmp.ne.s32.totalorder %s149, %s163
    %p165 = scmp.eq.s32.totalorder %s39, 0
    %p166 = por %p164, %p165
    %s168 = sadd.s32 %s167, 1
    %p171 = scmp.eq.s32.totalorder %s33, 6
    %p172 = scmp.ne.s32.totalorder %s167, %s169
    %p173 = scmp.eq.s32.totalorder %s33, 0
    %p174 = por %p172, %p173
    %p175 = scmp.ne.s32.totalorder %s167, %s169
    %p176 = scmp.eq.s32.totalorder %s38, 6
    %p177 = por %p175, %p176
    %p178 = scmp.ne.s32.totalorder %s169, %s170
    %p179 = scmp.eq.s32.totalorder %s38, 0
    %p180 = por %p178, %p179
    %p181 = scmp.ne.s32.totalorder %s169, %s170
    %p182 = scmp.eq.s32.totalorder %s39, 6
    %p183 = por %p181, %p182
    %p185 = scmp.ne.s32.totalorder %s170, %s184
    %p186 = scmp.eq.s32.totalorder %s39, 0
    %p187 = por %p185, %p186
    %s189 = sadd.s32 %s188, 1
    %p192 = scmp.eq.s32.totalorder %s33, 6
    %p193 = scmp.ne.s32.totalorder %s188, %s190
    %p194 = scmp.eq.s32.totalorder %s33, 0
    %p195 = por %p193, %p194
    %p196 = scmp.ne.s32.totalorder %s188, %s190
    %p197 = scmp.eq.s32.totalorder %s38, 6
    %p198 = por %p196, %p197
    %p199 = scmp.ne.s32.totalorder %s190, %s191
    %p200 = scmp.eq.s32.totalorder %s38, 0
    %p201 = por %p199, %p200
    %p202 = scmp.ne.s32.totalorder %s190, %s191
    %p203 = scmp.eq.s32.totalorder %s39, 6
    %p204 = por %p202, %p203
    %p206 = scmp.ne.s32.totalorder %s191, %s205
    %p207 = scmp.eq.s32.totalorder %s39, 0
    %p208 = por %p206, %p207
    %s210 = sadd.s32 %s209, 1
    %p213 = scmp.eq.s32.totalorder %s33, 6
    %p214 = scmp.ne.s32.totalorder %s209, %s211
    %p215 = scmp.eq.s32.totalorder %s33, 0
    %p216 = por %p214, %p215
    %p217 = scmp.ne.s32.totalorder %s209, %s211
    %p218 = scmp.eq.s32.totalorder %s38, 6
    %p219 = por %p217, %p218
    %p220 = scmp.ne.s32.totalorder %s211, %s212
    %p221 = scmp.eq.s32.totalorder %s38, 0
    %p222 = por %p220, %p221
    %p223 = scmp.ne.s32.totalorder %s211, %s212
    %p224 = scmp.eq.s32.totalorder %s39, 6
    %p225 = por %p223, %p224
    %p227 = scmp.ne.s32.totalorder %s212, %s226
    %p228 = scmp.eq.s32.totalorder %s39, 0
    %p229 = por %p227, %p228
    %s231 = sadd.s32 %s230, 1
    %p234 = scmp.eq.s32.totalorder %s33, 6
    %p235 = scmp.ne.s32.totalorder %s230, %s232
    %p236 = scmp.eq.s32.totalorder %s33, 0
    %p237 = por %p235, %p236
    %p238 = scmp.ne.s32.totalorder %s230, %s232
    %p239 = scmp.eq.s32.totalorder %s38, 6
    %p240 = por %p238, %p239
    %p241 = scmp.ne.s32.totalorder %s232, %s233
    %p242 = scmp.eq.s32.totalorder %s38, 0
    %p243 = por %p241, %p242
    %p244 = scmp.ne.s32.totalorder %s232, %s233
    %p245 = scmp.eq.s32.totalorder %s39, 6
    %p246 = por %p244, %p245
    %p248 = scmp.ne.s32.totalorder %s233, %s247
    %p249 = scmp.eq.s32.totalorder %s39, 0
    %p250 = por %p248, %p249
    %s252 = sadd.s32 %s251, 1
    %p255 = scmp.eq.s32.totalorder %s33, 6
    %p256 = scmp.ne.s32.totalorder %s251, %s253
    %p257 = scmp.eq.s32.totalorder %s33, 0
    %p258 = por %p256, %p257
    %p259 = scmp.ne.s32.totalorder %s251, %s253
    %p260 = scmp.eq.s32.totalorder %s38, 6
    %p261 = por %p259, %p260
    %p262 = scmp.ne.s32.totalorder %s253, %s254
    %p263 = scmp.eq.s32.totalorder %s38, 0
    %p264 = por %p262, %p263
    %p265 = scmp.ne.s32.totalorder %s253, %s254
    %p266 = scmp.eq.s32.totalorder %s39, 6
    %p267 = por %p265, %p266
    %p269 = scmp.ne.s32.totalorder %s254, %s268
    %p270 = scmp.eq.s32.totalorder %s39, 0
    %p271 = por %p269, %p270
    %s273 = sadd.s32 %s272, 1
    %p276 = scmp.eq.s32.totalorder %s33, 6
    %p277 = scmp.ne.s32.totalorder %s272, %s274
    %p278 = scmp.eq.s32.totalorder %s33, 0
    %p279 = por %p277, %p278
    %p280 = scmp.ne.s32.totalorder %s272, %s274
    %p281 = scmp.eq.s32.totalorder %s38, 6
    %p282 = por %p280, %p281
    %p283 = scmp.ne.s32.totalorder %s274, %s275
    %p284 = scmp.eq.s32.totalorder %s38, 0
    %p285 = por %p283, %p284
    %p286 = scmp.ne.s32.totalorder %s274, %s275
    %p287 = scmp.eq.s32.totalorder %s39, 6
    %p288 = por %p286, %p287
    %p290 = scmp.ne.s32.totalorder %s275, %s289
    %p291 = scmp.eq.s32.totalorder %s39, 0
    %p292 = por %p290, %p291
    %s294 = sadd.s32 %s293, 1
    %p297 = scmp.eq.s32.totalorder %s33, 6
    %p298 = scmp.ne.s32.totalorder %s293, %s295
    %p299 = scmp.eq.s32.totalorder %s33, 0
    %p300 = por %p298, %p299
    %p301 = scmp.ne.s32.totalorder %s293, %s295
    %p302 = scmp.eq.s32.totalorder %s38, 6
    %p303 = por %p301, %p302
    %p304 = scmp.ne.s32.totalorder %s295, %s296
    %p305 = scmp.eq.s32.totalorder %s38, 0
    %p306 = por %p304, %p305
    %p307 = scmp.ne.s32.totalorder %s295, %s296
    %p308 = scmp.eq.s32.totalorder %s39, 6
    %p309 = por %p307, %p308
    %p311 = scmp.ne.s32.totalorder %s296, %s310
    %p312 = scmp.eq.s32.totalorder %s39, 0
    %p313 = por %p311, %p312
    %s315 = sadd.s32 %s314, 1
    %p318 = scmp.eq.s32.totalorder %s33, 6
    %p319 = scmp.ne.s32.totalorder %s314, %s316
    %p320 = scmp.eq.s32.totalorder %s33, 0
    %p321 = por %p319, %p320
    %p322 = scmp.ne.s32.totalorder %s314, %s316
    %p323 = scmp.eq.s32.totalorder %s38, 6
    %p324 = por %p322, %p323
    %p325 = scmp.ne.s32.totalorder %s316, %s317
    %p326 = scmp.eq.s32.totalorder %s38, 0
    %p327 = por %p325, %p326
    %p328 = scmp.ne.s32.totalorder %s316, %s317
    %p329 = scmp.eq.s32.totalorder %s39, 6
    %p330 = por %p328, %p329
    %p332 = scmp.ne.s32.totalorder %s317, %s331
    %p333 = scmp.eq.s32.totalorder %s39, 0
    %p334 = por %p332, %p333
    %s336 = sadd.s32 %s335, 1
    %p339 = scmp.eq.s32.totalorder %s33, 6
    %p340 = scmp.ne.s32.totalorder %s335, %s337
    %p341 = scmp.eq.s32.totalorder %s33, 0
    %p342 = por %p340, %p341
    %p343 = scmp.ne.s32.totalorder %s335, %s337
    %p344 = scmp.eq.s32.totalorder %s38, 6
    %p345 = por %p343, %p344
    %p346 = scmp.ne.s32.totalorder %s337, %s338
    %p347 = scmp.eq.s32.totalorder %s38, 0
    %p348 = por %p346, %p347
    %p349 = scmp.ne.s32.totalorder %s337, %s338
    %p350 = scmp.eq.s32.totalorder %s39, 6
    %p351 = por %p349, %p350
    %p353 = scmp.ne.s32.totalorder %s338, %s352
    %p354 = scmp.eq.s32.totalorder %s39, 0
    %p355 = por %p353, %p354
    %s357 = sadd.s32 %s356, 1
    %p360 = scmp.eq.s32.totalorder %s33, 6
    %p361 = scmp.ne.s32.totalorder %s356, %s358
    %p362 = scmp.eq.s32.totalorder %s33, 0
    %p363 = por %p361, %p362
    %p364 = scmp.ne.s32.totalorder %s356, %s358
    %p365 = scmp.eq.s32.totalorder %s38, 6
    %p366 = por %p364, %p365
    %p367 = scmp.ne.s32.totalorder %s358, %s359
    %p368 = scmp.eq.s32.totalorder %s38, 0
    %p369 = por %p367, %p368
    %p370 = scmp.ne.s32.totalorder %s358, %s359
    %p371 = scmp.eq.s32.totalorder %s39, 6
    %p372 = por %p370, %p371
    %p374 = scmp.ne.s32.totalorder %s359, %s373
    %p375 = scmp.eq.s32.totalorder %s39, 0
    %p376 = por %p374, %p375
    %s378 = sadd.s32 %s377, 1
    %p381 = scmp.eq.s32.totalorder %s33, 6
    %p382 = scmp.ne.s32.totalorder %s377, %s379
    %p383 = scmp.eq.s32.totalorder %s33, 0
    %p384 = por %p382, %p383
    %p385 = scmp.ne.s32.totalorder %s377, %s379
    %p386 = scmp.eq.s32.totalorder %s38, 6
    %p387 = por %p385, %p386
    %p388 = scmp.ne.s32.totalorder %s379, %s380
    %p389 = scmp.eq.s32.totalorder %s38, 0
    %p390 = por %p388, %p389
    %p391 = scmp.ne.s32.totalorder %s379, %s380
    %p392 = scmp.eq.s32.totalorder %s39, 6
    %p393 = por %p391, %p392
    %p395 = scmp.ne.s32.totalorder %s380, %s394
    %p396 = scmp.eq.s32.totalorder %s39, 0
    %p397 = por %p395, %p396
    %s399 = sadd.s32 %s398, 1
    %p402 = scmp.eq.s32.totalorder %s33, 6
    %p403 = scmp.ne.s32.totalorder %s398, %s400
    %p404 = scmp.eq.s32.totalorder %s33, 0
    %p405 = por %p403, %p404
    %p406 = scmp.ne.s32.totalorder %s398, %s400
    %p407 = scmp.eq.s32.totalorder %s38, 6
    %p408 = por %p406, %p407
    %p409 = scmp.ne.s32.totalorder %s400, %s401
    %p410 = scmp.eq.s32.totalorder %s38, 0
    %p411 = por %p409, %p410
    %p412 = scmp.ne.s32.totalorder %s400, %s401
    %p413 = scmp.eq.s32.totalorder %s39, 6
    %p414 = por %p412, %p413
    %p416 = scmp.ne.s32.totalorder %s401, %s415
    %p417 = scmp.eq.s32.totalorder %s39, 0
    %p418 = por %p416, %p417
    %s420 = sadd.s32 %s419, 1
    %p423 = scmp.eq.s32.totalorder %s33, 6
    %p424 = scmp.ne.s32.totalorder %s419, %s421
    %p425 = scmp.eq.s32.totalorder %s33, 0
    %p426 = por %p424, %p425
    %p427 = scmp.ne.s32.totalorder %s419, %s421
    %p428 = scmp.eq.s32.totalorder %s38, 6
    %p429 = por %p427, %p428
    %p430 = scmp.ne.s32.totalorder %s421, %s422
    %p431 = scmp.eq.s32.totalorder %s38, 0
    %p432 = por %p430, %p431
    %p433 = scmp.ne.s32.totalorder %s421, %s422
    %p434 = scmp.eq.s32.totalorder %s39, 6
    %p435 = por %p433, %p434
    %p437 = scmp.ne.s32.totalorder %s422, %s436
    %p438 = scmp.eq.s32.totalorder %s39, 0
    %p439 = por %p437, %p438
    %s441 = sadd.s32 %s440, 1
    %p444 = scmp.eq.s32.totalorder %s33, 6
    %p445 = scmp.ne.s32.totalorder %s440, %s442
    %p446 = scmp.eq.s32.totalorder %s33, 0
    %p447 = por %p445, %p446
    %p448 = scmp.ne.s32.totalorder %s440, %s442
    %p449 = scmp.eq.s32.totalorder %s38, 6
    %p450 = por %p448, %p449
    %p451 = scmp.ne.s32.totalorder %s442, %s443
    %p452 = scmp.eq.s32.totalorder %s38, 0
    %p453 = por %p451, %p452
    %p454 = scmp.ne.s32.totalorder %s442, %s443
    %p455 = scmp.eq.s32.totalorder %s39, 6
    %p456 = por %p454, %p455
    %p458 = scmp.ne.s32.totalorder %s443, %s457
    %p459 = scmp.eq.s32.totalorder %s39, 0
    %p460 = por %p458, %p459
    %s461 = ssub.s32 %s33, %s40
    %p462 = scmp.eq.s32.totalorder %s461, 0
    %s464 = sadd.s32 %s463, 1
    %s465 = scalar_select %p462, %s463, %s464
    %p468 = pneg %p462
    %p469 = scmp.eq.s32.totalorder %s33, 6
    %p470 = por %p468, %p469
    %p471 = scmp.ne.s32.totalorder %s463, %s466
    %p472 = scmp.eq.s32.totalorder %s33, 0
    %p473 = por %p471, %p472
    %p474 = scmp.ne.s32.totalorder %s463, %s466
    %p475 = scmp.eq.s32.totalorder %s38, 6
    %p476 = por %p474, %p475
    %p477 = scmp.ne.s32.totalorder %s466, %s467
    %p478 = scmp.eq.s32.totalorder %s38, 0
    %p479 = por %p477, %p478
    %p480 = scmp.ne.s32.totalorder %s466, %s467
    %p481 = scmp.eq.s32.totalorder %s39, 6
    %p482 = por %p480, %p481
    %p484 = scmp.ne.s32.totalorder %s467, %s483
    %p485 = scmp.eq.s32.totalorder %s39, 0
    %p486 = por %p484, %p485
    %p487 = scmp.le.s32.totalorder 1, %s33
    %p488 = scmp.lt.s32.totalorder %s33, 8
    %p489 = pnand %p487, %p488
    %p490 = pneg %p489
    // Predicated region
    $region9: #{_seq2seq_forward.3} parent=5 // pred_check
      _
    $region10: #{_seq2seq_forward.3} parent=5 // pred_check_branch
      %492 = sbr.rel (%p489) target = $region12
    $region11: #{_seq2seq_forward.3} parent=5 // pred_region
      %s493 = ssub.s32 %s33, 1
      // Predicated region
      $region13: #{_seq2seq_forward.3} parent=11 // pred_check
        %p494 = pneg %p54
      $region14: #{_seq2seq_forward.3} parent=11 // pred_check_branch
        %496 = sbr.rel (%p494) target = $region16
      $region15: #{_seq2seq_forward.3} parent=11 // pred_region
        _
      $region16: #{_seq2seq_forward.3} parent=11 // pred_fallthru
        _
      // Predicated region
      $region17: #{_seq2seq_forward.3} parent=11 // pred_check
        %p497 = pneg %p75
      $region18: #{_seq2seq_forward.3} parent=11 // pred_check_branch
        %499 = sbr.rel (%p497) target = $region20
      $region19: #{_seq2seq_forward.3} parent=11 // pred_region
        _
      $region20: #{_seq2seq_forward.3} parent=11 // pred_fallthru
        _
      // Predicated region
      $region21: #{_seq2seq_forward.3} parent=11 // pred_check
        %p500 = pneg %p96
      $region22: #{_seq2seq_forward.3} parent=11 // pred_check_branch
        %502 = sbr.rel (%p500) target = $region24
      $region23: #{_seq2seq_forward.3} parent=11 // pred_region
        _
      $region24: #{_seq2seq_forward.3} parent=11 // pred_fallthru
        _
      // Predicated region
      $region25: #{_seq2seq_forward.3} parent=11 // pred_check
        %p503 = pneg %p117
      $region26: #{_seq2seq_forward.3} parent=11 // pred_check_branch
        %505 = sbr.rel (%p503) target = $region28
      $region27: #{_seq2seq_forward.3} parent=11 // pred_region
        _
      $region28: #{_seq2seq_forward.3} parent=11 // pred_fallthru
        _
      // Predicated region
      $region29: #{_seq2seq_forward.3} parent=11 // pred_check
        %p506 = pneg %p138
      $region30: #{_seq2seq_forward.3} parent=11 // pred_check_branch
        %508 = sbr.rel (%p506) target = $region32
      $region31: #{_seq2seq_forward.3} parent=11 // pred_region
        _
      $region32: #{_seq2seq_forward.3} parent=11 // pred_fallthru
        _
      // Predicated region
      $region33: #{_seq2seq_forward.3} parent=11 // pred_check
        %p509 = pneg %p159
      $region34: #{_seq2seq_forward.3} parent=11 // pred_check_branch
        %511 = sbr.rel (%p509) target = $region36
      $region35: #{_seq2seq_forward.3} parent=11 // pred_region
        _
      $region36: #{_seq2seq_forward.3} parent=11 // pred_fallthru
        _
      // Predicated region
      $region37: #{_seq2seq_forward.3} parent=11 // pred_check
        %p512 = pneg %p180
      $region38: #{_seq2seq_forward.3} parent=11 // pred_check_branch
        %514 = sbr.rel (%p512) target = $region40
      $region39: #{_seq2seq_forward.3} parent=11 // pred_region
        _
      $region40: #{_seq2seq_forward.3} parent=11 // pred_fallthru
        _
      // Predicated region
      $region41: #{_seq2seq_forward.3} parent=11 // pred_check
        %p515 = pneg %p201
      $region42: #{_seq2seq_forward.3} parent=11 // pred_check_branch
        %517 = sbr.rel (%p515) target = $region44
      $region43: #{_seq2seq_forward.3} parent=11 // pred_region
        _
      $region44: #{_seq2seq_forward.3} parent=11 // pred_fallthru
        _
      // Predicated region
      $region45: #{_seq2seq_forward.3} parent=11 // pred_check
        %p518 = pneg %p222
      $region46: #{_seq2seq_forward.3} parent=11 // pred_check_branch
        %520 = sbr.rel (%p518) target = $region48
      $region47: #{_seq2seq_forward.3} parent=11 // pred_region
        _
      $region48: #{_seq2seq_forward.3} parent=11 // pred_fallthru
        _
      // Predicated region
      $region49: #{_seq2seq_forward.3} parent=11 // pred_check
        %p521 = pneg %p243
      $region50: #{_seq2seq_forward.3} parent=11 // pred_check_branch
        %523 = sbr.rel (%p521) target = $region52
      $region51: #{_seq2seq_forward.3} parent=11 // pred_region
        _
      $region52: #{_seq2seq_forward.3} parent=11 // pred_fallthru
        _
      // Predicated region
      $region53: #{_seq2seq_forward.3} parent=11 // pred_check
        %p524 = pneg %p264
      $region54: #{_seq2seq_forward.3} parent=11 // pred_check_branch
        %526 = sbr.rel (%p524) target = $region56
      $region55: #{_seq2seq_forward.3} parent=11 // pred_region
        _
      $region56: #{_seq2seq_forward.3} parent=11 // pred_fallthru
        _
      // Predicated region
      $region57: #{_seq2seq_forward.3} parent=11 // pred_check
        %p527 = pneg %p285
      $region58: #{_seq2seq_forward.3} parent=11 // pred_check_branch
        %529 = sbr.rel (%p527) target = $region60
      $region59: #{_seq2seq_forward.3} parent=11 // pred_region
        _
      $region60: #{_seq2seq_forward.3} parent=11 // pred_fallthru
        _
      // Predicated region
      $region61: #{_seq2seq_forward.3} parent=11 // pred_check
        %p530 = pneg %p306
      $region62: #{_seq2seq_forward.3} parent=11 // pred_check_branch
        %532 = sbr.rel (%p530) target = $region64
      $region63: #{_seq2seq_forward.3} parent=11 // pred_region
        _
      $region64: #{_seq2seq_forward.3} parent=11 // pred_fallthru
        _
      // Predicated region
      $region65: #{_seq2seq_forward.3} parent=11 // pred_check
        %p533 = pneg %p327
      $region66: #{_seq2seq_forward.3} parent=11 // pred_check_branch
        %535 = sbr.rel (%p533) target = $region68
      $region67: #{_seq2seq_forward.3} parent=11 // pred_region
        _
      $region68: #{_seq2seq_forward.3} parent=11 // pred_fallthru
        _
      // Predicated region
      $region69: #{_seq2seq_forward.3} parent=11 // pred_check
        %p536 = pneg %p348
      $region70: #{_seq2seq_forward.3} parent=11 // pred_check_branch
        %538 = sbr.rel (%p536) target = $region72
      $region71: #{_seq2seq_forward.3} parent=11 // pred_region
        _
      $region72: #{_seq2seq_forward.3} parent=11 // pred_fallthru
        _
      // Predicated region
      $region73: #{_seq2seq_forward.3} parent=11 // pred_check
        %p539 = pneg %p369
      $region74: #{_seq2seq_forward.3} parent=11 // pred_check_branch
        %541 = sbr.rel (%p539) target = $region76
      $region75: #{_seq2seq_forward.3} parent=11 // pred_region
        _
      $region76: #{_seq2seq_forward.3} parent=11 // pred_fallthru
        _
      // Predicated region
      $region77: #{_seq2seq_forward.3} parent=11 // pred_check
        %p542 = pneg %p390
      $region78: #{_seq2seq_forward.3} parent=11 // pred_check_branch
        %544 = sbr.rel (%p542) target = $region80
      $region79: #{_seq2seq_forward.3} parent=11 // pred_region
        _
      $region80: #{_seq2seq_forward.3} parent=11 // pred_fallthru
        _
      // Predicated region
      $region81: #{_seq2seq_forward.3} parent=11 // pred_check
        %p545 = pneg %p411
      $region82: #{_seq2seq_forward.3} parent=11 // pred_check_branch
        %547 = sbr.rel (%p545) target = $region84
      $region83: #{_seq2seq_forward.3} parent=11 // pred_region
        _
      $region84: #{_seq2seq_forward.3} parent=11 // pred_fallthru
        _
      // Predicated region
      $region85: #{_seq2seq_forward.3} parent=11 // pred_check
        %p548 = pneg %p432
      $region86: #{_seq2seq_forward.3} parent=11 // pred_check_branch
        %550 = sbr.rel (%p548) target = $region88
      $region87: #{_seq2seq_forward.3} parent=11 // pred_region
        _
      $region88: #{_seq2seq_forward.3} parent=11 // pred_fallthru
        _
      // Predicated region
      $region89: #{_seq2seq_forward.3} parent=11 // pred_check
        %p551 = pneg %p453
      $region90: #{_seq2seq_forward.3} parent=11 // pred_check_branch
        %553 = sbr.rel (%p551) target = $region92
      $region91: #{_seq2seq_forward.3} parent=11 // pred_region
        _
      $region92: #{_seq2seq_forward.3} parent=11 // pred_fallthru
        _
    $region12: #{_seq2seq_forward.3} parent=5 // pred_fallthru
      _
    %p554 = scmp.lt.s32.totalorder %s33, 7
    // Predicated region
    $region93: #{_seq2seq_forward.3} parent=5 // pred_check
      %p555 = pneg %p554
    $region94: #{_seq2seq_forward.3} parent=5 // pred_check_branch
      %557 = sbr.rel (%p555) target = $region96
    $region95: #{_seq2seq_forward.3} parent=5 // pred_region
      _
    $region96: #{_seq2seq_forward.3} parent=5 // pred_fallthru
      _
    %p558 = scmp.le.s32.totalorder 1, %s33
    %p559 = scmp.lt.s32.totalorder %s33, 8
    %p560 = pnand %p558, %p559
    %p561 = pneg %p560
    // Predicated region
    $region97: #{_seq2seq_forward.3} parent=5 // pred_check
      _
    $region98: #{_seq2seq_forward.3} parent=5 // pred_check_branch
      %563 = sbr.rel (%p560) target = $region100
    $region99: #{_seq2seq_forward.3} parent=5 // pred_region
      %s564 = ssub.s32 %s33, 1
      %p565 = pneg %p54
      %p566 = pneg %p51
      %p567 = pneg %p75
      %p568 = pneg %p72
      %p569 = pneg %p96
      %p570 = pneg %p93
      %p571 = pneg %p117
      %p572 = pneg %p114
      %p573 = pneg %p138
      %p574 = pneg %p135
      %p575 = pneg %p159
      %p576 = pneg %p156
      %p577 = pneg %p180
      %p578 = pneg %p177
      %p579 = pneg %p201
      %p580 = pneg %p198
      %p581 = pneg %p222
      %p582 = pneg %p219
      %p583 = pneg %p243
      %p584 = pneg %p240
      %p585 = pneg %p264
      %p586 = pneg %p261
      %p587 = pneg %p285
      %p588 = pneg %p282
      %p589 = pneg %p306
      %p590 = pneg %p303
      %p591 = pneg %p327
      %p592 = pneg %p324
      %p593 = pneg %p348
      %p594 = pneg %p345
      %p595 = pneg %p369
      %p596 = pneg %p366
      %p597 = pneg %p390
      %p598 = pneg %p387
      %p599 = pneg %p411
      %p600 = pneg %p408
      %p601 = pneg %p432
      %p602 = pneg %p429
      %p603 = pneg %p453
      %p604 = pneg %p450
      %p605 = pneg %p479
      %p606 = pneg %p476
      %p607 = scmp.lt.s32.totalorder %s38, 6
      %s608 = scalar_select %p607, %s38, 6
      %s609 = smul.addr %s608, 2
      %s610 = scalar_lea.vmem %s21, %s609
      %p611 = scmp.lt.s32.totalorder %s38, 6
      %s612 = scalar_select %p611, %s38, 6
      %s613 = smul.addr %s612, 2
      %s614 = scalar_lea.vmem %s21, %s613
      %p615 = scmp.eq.s32.totalorder %s38, 0
      // Predicated region
      $region101: #{_seq2seq_forward.3} parent=99 // pred_check
        %p616 = pneg %p615
      $region102: #{_seq2seq_forward.3} parent=99 // pred_check_branch
        %618 = sbr.rel (%p616) target = $region104
      $region103: #{_seq2seq_forward.3} parent=99 // pred_region
        %v619 = vld [vmem:[%s1] sm:$0x3]
        %vm620 = vcmask 254976
        %621 = vst.msk [vmem:[#allocation2] sm:$0x3] %vm620, %v619
        %v622 = vld [vmem:[%s5] sm:$0x3]
        %v623 = vld [vmem:[%s6] sm:$0xff]
        %v624 = vld [vmem:[%s6 + $0x8] sm:$0xff]
        %v625 = vld [vmem:[%s6 + $0x10] sm:$0xff]
        %v626 = vld [vmem:[%s6 + $0x18] sm:$0xff]
        %vm627 = vcmask 261120
        %v629 = vsel %vm627, %v622, 0
        %631 = vmatprep.subr.mxu0 0.0
        %632 = vmatpush1.msra.mxu0 %v623
        %633 = vmatprep.subr.mxu0 0.0
        %634 = vmatpush1.msra.mxu0 %v624
        %635 = vmatprep.subr.mxu0 0.0
        %636 = vmatpush1.msra.mxu0 %v625
        %637 = vmatprep.subr.mxu0 0.0
        %638 = vmatpush1.msra.mxu0 %v626
        %639 = vmatprep.subr.mxu0 0.0
        %640 = vmatpush1.msra.mxu0 0.0
        %641 = vmatprep.subr.mxu0 0.0
        %642 = vmatpush1.msra.mxu0 0.0
        %643 = vmatprep.subr.mxu0 0.0
        %644 = vmatpush1.msra.mxu0 0.0
        %645 = vmatprep.subr.mxu0 0.0
        %646 = vmatpush1.msra.mxu0 0.0
        %647 = vmatprep.subr.mxu0 0.0
        %648 = vmatpush1.msra.mxu0 0.0
        %649 = vmatprep.subr.mxu0 0.0
        %650 = vmatpush1.msra.mxu0 0.0
        %651 = vmatprep.subr.mxu0 0.0
        %652 = vmatpush1.msra.mxu0 0.0
        %653 = vmatprep.subr.mxu0 0.0
        %654 = vmatpush1.msra.mxu0 0.0
        %655 = vmatprep.subr.mxu0 0.0
        %656 = vmatpush1.msra.mxu0 0.0
        %657 = vmatprep.subr.mxu0 0.0
        %658 = vmatpush1.msra.mxu0 0.0
        %659 = vmatprep.subr.mxu0 0.0
        %660 = vmatpush1.msra.mxu0 0.0
        %661 = vmatprep.subr.mxu0 0.0
        %662 = vmatpush1.msra.mxu0 0.0
        %663 = vmatprep.subr.mxu0 0.0
        %664 = vmatpush1.msra.mxu0 0.0
        %665 = vmatprep.subr.mxu0 0.0
        %666 = vmatpush1.msra.mxu0 0.0
        %667 = vmatprep.subr.mxu0 0.0
        %668 = vmatpush1.msra.mxu0 0.0
        %669 = vmatprep.subr.mxu0 0.0
        %670 = vmatpush1.msra.mxu0 0.0
        %671 = vmatprep.subr.mxu0 0.0
        %672 = vmatpush1.msra.mxu0 0.0
        %673 = vmatprep.subr.mxu0 0.0
        %674 = vmatpush1.msra.mxu0 0.0
        %675 = vmatprep.subr.mxu0 0.0
        %676 = vmatpush1.msra.mxu0 0.0
        %677 = vmatprep.subr.mxu0 0.0
        %678 = vmatpush1.msra.mxu0 0.0
        %679 = vmatprep.subr.mxu0 0.0
        %680 = vmatpush1.msra.mxu0 0.0
        %681 = vmatprep.subr.mxu0 0.0
        %682 = vmatpush1.msra.mxu0 0.0
        %683 = vmatprep.subr.mxu0 0.0
        %684 = vmatpush1.msra.mxu0 0.0
        %685 = vmatprep.subr.mxu0 0.0
        %686 = vmatpush1.msra.mxu0 0.0
        %687 = vmatprep.subr.mxu0 0.0
        %688 = vmatpush1.msra.mxu0 0.0
        %689 = vmatprep.subr.mxu0 0.0
        %690 = vmatpush1.msra.mxu0 0.0
        %691 = vmatprep.subr.mxu0 0.0
        %692 = vmatpush1.msra.mxu0 0.0
        %693 = vmatprep.subr.mxu0 0.0
        %694 = vmatpush1.msra.mxu0 0.0
        %695 = vmatprep.mubr.f32.mxu0 0.0
        %696 = vmatmul.mubr.f32.gmra.mrb[0].mxu0 %v629
        %v697 = vpop.f32.mrb[0].mxu0
        %v698 = vadd.f32 0.0, %v697
        %v699 = vpop.f32.mrb[0].mxu0
        %700 = vdwg.mxu0
        %vm701 = vcmask 123904
        %702 = vst.msk [vmem:[#allocation3] sm:$0x3] %vm701, %v698
      $region104: #{_seq2seq_forward.3} parent=99 // pred_fallthru
        _
      %v703 = vld [vmem:[#allocation2] sm:$0x3]
      %v704 = vld [vmem:[#allocation3] sm:$0x3]
      %v705 = vld [vmem:[%s7] sm:$0xff]
      %v706 = vld [vmem:[%s7 + $0x8] sm:$0xff]
      %v707 = vld [vmem:[%s7 + $0x10] sm:$0xff]
      %v708 = vld [vmem:[%s7 + $0x18] sm:$0xff]
      %v709 = vld [vmem:[%s8] sm:$0x1]
      %v711 = vlaneseq
      %v712 = vshrl.u32 %v711, 7
      %v713 = vsub.s32 0, %v712
      %v714 = vrot.slane %v709, %v713
      %vm716 = vcmask 261120
      %v718 = vsel %vm716, %v703, 0
      %720 = vmatprep.subr.mxu0 0.0
      %721 = vmatpush1.msra.mxu0 %v705
      %722 = vmatprep.subr.mxu0 0.0
      %723 = vmatpush1.msra.mxu0 %v706
      %724 = vmatprep.subr.mxu0 0.0
      %725 = vmatpush1.msra.mxu0 %v707
      %726 = vmatprep.subr.mxu0 0.0
      %727 = vmatpush1.msra.mxu0 %v708
      %728 = vmatprep.subr.mxu0 0.0
      %729 = vmatpush1.msra.mxu0 0.0
      %730 = vmatprep.subr.mxu0 0.0
      %731 = vmatpush1.msra.mxu0 0.0
      %732 = vmatprep.subr.mxu0 0.0
      %733 = vmatpush1.msra.mxu0 0.0
      %734 = vmatprep.subr.mxu0 0.0
      %735 = vmatpush1.msra.mxu0 0.0
      %736 = vmatprep.subr.mxu0 0.0
      %737 = vmatpush1.msra.mxu0 0.0
      %738 = vmatprep.subr.mxu0 0.0
      %739 = vmatpush1.msra.mxu0 0.0
      %740 = vmatprep.subr.mxu0 0.0
      %741 = vmatpush1.msra.mxu0 0.0
      %742 = vmatprep.subr.mxu0 0.0
      %743 = vmatpush1.msra.mxu0 0.0
      %744 = vmatprep.subr.mxu0 0.0
      %745 = vmatpush1.msra.mxu0 0.0
      %746 = vmatprep.subr.mxu0 0.0
      %747 = vmatpush1.msra.mxu0 0.0
      %748 = vmatprep.subr.mxu0 0.0
      %749 = vmatpush1.msra.mxu0 0.0
      %750 = vmatprep.subr.mxu0 0.0
      %751 = vmatpush1.msra.mxu0 0.0
      %752 = vmatprep.subr.mxu0 0.0
      %753 = vmatpush1.msra.mxu0 0.0
      %754 = vmatprep.subr.mxu0 0.0
      %755 = vmatpush1.msra.mxu0 0.0
      %756 = vmatprep.subr.mxu0 0.0
      %757 = vmatpush1.msra.mxu0 0.0
      %758 = vmatprep.subr.mxu0 0.0
      %759 = vmatpush1.msra.mxu0 0.0
      %760 = vmatprep.subr.mxu0 0.0
      %761 = vmatpush1.msra.mxu0 0.0
      %762 = vmatprep.subr.mxu0 0.0
      %763 = vmatpush1.msra.mxu0 0.0
      %764 = vmatprep.subr.mxu0 0.0
      %765 = vmatpush1.msra.mxu0 0.0
      %766 = vmatprep.subr.mxu0 0.0
      %767 = vmatpush1.msra.mxu0 0.0
      %768 = vmatprep.subr.mxu0 0.0
      %769 = vmatpush1.msra.mxu0 0.0
      %770 = vmatprep.subr.mxu0 0.0
      %771 = vmatpush1.msra.mxu0 0.0
      %772 = vmatprep.subr.mxu0 0.0
      %773 = vmatpush1.msra.mxu0 0.0
      %774 = vmatprep.subr.mxu0 0.0
      %775 = vmatpush1.msra.mxu0 0.0
      %776 = vmatprep.subr.mxu0 0.0
      %777 = vmatpush1.msra.mxu0 0.0
      %778 = vmatprep.subr.mxu0 0.0
      %779 = vmatpush1.msra.mxu0 0.0
      %780 = vmatprep.subr.mxu0 0.0
      %781 = vmatpush1.msra.mxu0 0.0
      %782 = vmatprep.subr.mxu0 0.0
      %783 = vmatpush1.msra.mxu0 0.0
      %784 = vmatprep.mubr.f32.mxu0 0.0
      %785 = vmatmul.mubr.f32.gmra.mrb[0].mxu0 %v718
      %v786 = vpop.f32.mrb[0].mxu0
      %v787 = vadd.f32 %v714, %v786
      %v788 = vpop.f32.mrb[0].mxu0
      %789 = vdwg.mxu0
      %v790 = vld [vmem:[%s4] sm:$0x3]
      %v791 = vld [vmem:[%s4 + $0x2] sm:$0x3]
      %v792 = vld [vmem:[%s4 + $0x4] sm:$0x3]
      %v793 = vld [vmem:[%s4 + $0x6] sm:$0x3]
      %v794 = vld [vmem:[%s4 + $0x8] sm:$0x3]
      %v795 = vld [vmem:[%s4 + $0xa] sm:$0x3]
      %v796 = vld [vmem:[%s4 + $0xc] sm:$0x3]
      %v797 = vld [vmem:[%s4 + $0xe] sm:$0x3]
      %v798 = vadd.f32 %v790, %v787
      %v799 = vadd.f32 %v791, %v787
      %v800 = vadd.f32 %v792, %v787
      %v801 = vadd.f32 %v793, %v787
      %v802 = vadd.f32 %v794, %v787
      %v803 = vadd.f32 %v795, %v787
      %v804 = vadd.f32 %v796, %v787
      %v805 = vadd.f32 %v797, %v787
      %v806 = vtanh.pop %v798
      %v807 = vtanh.pop %v799
      %v808 = vtanh.pop %v800
      %v809 = vtanh.pop %v801
      %v810 = vtanh.pop %v802
      %v811 = vtanh.pop %v803
      %v812 = vtanh.pop %v804
      %v813 = vtanh.pop %v805
      %v814 = vld [vmem:[%s9] sm:$0x1]
      %v816 = vlaneseq
      %v817 = vshrl.u32 %v816, 7
      %v818 = vsub.s32 0, %v817
      %v819 = vrot.slane %v814, %v818
      %v821 = vmul.f32 %v806, %v819
      %v822 = vmul.f32 %v807, %v819
      %v823 = vmul.f32 %v808, %v819
      %v824 = vmul.f32 %v809, %v819
      %v825 = vmul.f32 %v810, %v819
      %v826 = vmul.f32 %v811, %v819
      %v827 = vmul.f32 %v812, %v819
      %v828 = vmul.f32 %v813, %v819
      %vm829 = vcmask 254976
      %v830 = vsel %vm829, %v821, 0.0
      %831 = vadd.xlane.f32.xlu0 %v830
      %v832 = vpop.xlane.xlu0 %831
      %v833 = vsel %vm829, %v822, 0.0
      %834 = vadd.xlane.f32.xlu0 %v833
      %v835 = vpop.xlane.xlu0 %834
      %v836 = vsel %vm829, %v823, 0.0
      %837 = vadd.xlane.f32.xlu0 %v836
      %v838 = vpop.xlane.xlu0 %837
      %v839 = vsel %vm829, %v824, 0.0
      %840 = vadd.xlane.f32.xlu0 %v839
      %v841 = vpop.xlane.xlu0 %840
      %v842 = vsel %vm829, %v825, 0.0
      %843 = vadd.xlane.f32.xlu0 %v842
      %v844 = vpop.xlane.xlu0 %843
      %v845 = vsel %vm829, %v826, 0.0
      %846 = vadd.xlane.f32.xlu0 %v845
      %v847 = vpop.xlane.xlu0 %846
      %v848 = vsel %vm829, %v827, 0.0
      %849 = vadd.xlane.f32.xlu0 %v848
      %v850 = vpop.xlane.xlu0 %849
      %v851 = vsel %vm829, %v828, 0.0
      %852 = vadd.xlane.f32.xlu0 %v851
      %v853 = vpop.xlane.xlu0 %852
      %vm854 = vcmask 1041408
      %v855 = vsel %vm854, %v832, -inf
      %v856 = vsel %vm854, %v835, -inf
      %v857 = vsel %vm854, %v838, -inf
      %v858 = vsel %vm854, %v841, -inf
      %v859 = vsel %vm854, %v844, -inf
      %v860 = vmax.f32 %v855, %v859
      %v861 = vsel %vm854, %v847, -inf
      %v862 = vmax.f32 %v856, %v861
      %v863 = vsel %vm854, %v850, -inf
      %v864 = vmax.f32 %v857, %v863
      %v865 = vsel %vm854, %v853, -inf
      %v866 = vmax.f32 %v858, %v865
      %v867 = vmax.f32 %v860, %v862
      %v868 = vmax.f32 %v864, %v866
      %v869 = vmax.f32 %v867, %v868
      %v870 = vsub.f32 %v832, %v869
      %v871 = vsub.f32 %v835, %v869
      %v872 = vsub.f32 %v838, %v869
      %v873 = vsub.f32 %v841, %v869
      %v874 = vsub.f32 %v844, %v869
      %v875 = vsub.f32 %v847, %v869
      %v876 = vsub.f32 %v850, %v869
      %v877 = vsub.f32 %v853, %v869
      %v878 = vmul.f32 %v870, 1.442695
      %v879 = vpow.pop %v878
      %v880 = vmul.f32 %v871, 1.442695
      %v881 = vpow.pop %v880
      %v882 = vmul.f32 %v872, 1.442695
      %v883 = vpow.pop %v882
      %v884 = vmul.f32 %v873, 1.442695
      %v885 = vpow.pop %v884
      %v886 = vmul.f32 %v874, 1.442695
      %v887 = vpow.pop %v886
      %v888 = vmul.f32 %v875, 1.442695
      %v889 = vpow.pop %v888
      %v890 = vmul.f32 %v876, 1.442695
      %v891 = vpow.pop %v890
      %v892 = vmul.f32 %v877, 1.442695
      %v893 = vpow.pop %v892
      %v894 = vsel %vm854, %v879, 0.0
      %v895 = vsel %vm854, %v881, 0.0
      %v896 = vadd.f32 %v894, %v895
      %v897 = vsel %vm854, %v883, 0.0
      %v898 = vadd.f32 %v896, %v897
      %v899 = vsel %vm854, %v885, 0.0
      %v900 = vadd.f32 %v898, %v899
      %v901 = vsel %vm854, %v887, 0.0
      %v902 = vadd.f32 %v900, %v901
      %v903 = vsel %vm854, %v889, 0.0
      %v904 = vadd.f32 %v902, %v903
      %v905 = vsel %vm854, %v891, 0.0
      %v906 = vadd.f32 %v904, %v905
      %v907 = vsel %vm854, %v893, 0.0
      %v908 = vadd.f32 %v906, %v907
      %v909 = vrcp.pop %v908
      %v910 = vmul.f32 %v879, %v909
      %v911 = vmul.f32 %v881, %v909
      %v912 = vmul.f32 %v883, %v909
      %v913 = vmul.f32 %v885, %v909
      %v914 = vmul.f32 %v887, %v909
      %v915 = vmul.f32 %v889, %v909
      %v916 = vmul.f32 %v891, %v909
      %v917 = vmul.f32 %v893, %v909
      %v918 = vld [vmem:[%s2] sm:$0x3]
      %v919 = vld [vmem:[%s2 + $0x2] sm:$0x3]
      %v920 = vld [vmem:[%s2 + $0x4] sm:$0x3]
      %v921 = vld [vmem:[%s2 + $0x6] sm:$0x3]
      %v922 = vld [vmem:[%s2 + $0x8] sm:$0x3]
      %v923 = vld [vmem:[%s2 + $0xa] sm:$0x3]
      %v924 = vld [vmem:[%s2 + $0xc] sm:$0x3]
      %v925 = vld [vmem:[%s2 + $0xe] sm:$0x3]
      %v926 = vmul.f32 %v910, %v918
      %v927 = vmul.f32 %v911, %v919
      %v928 = vmul.f32 %v912, %v920
      %v929 = vmul.f32 %v913, %v921
      %v930 = vmul.f32 %v914, %v922
      %v931 = vmul.f32 %v915, %v923
      %v932 = vmul.f32 %v916, %v924
      %v933 = vmul.f32 %v917, %v925
      %v934 = vsel %vm829, %v926, 0.0
      %v935 = vsel %vm829, %v927, 0.0
      %v936 = vadd.f32 %v934, %v935
      %v937 = vsel %vm829, %v928, 0.0
      %v938 = vadd.f32 %v936, %v937
      %v939 = vsel %vm829, %v929, 0.0
      %v940 = vadd.f32 %v938, %v939
      %v941 = vsel %vm829, %v930, 0.0
      %v942 = vadd.f32 %v940, %v941
      %v943 = vsel %vm829, %v931, 0.0
      %v944 = vadd.f32 %v942, %v943
      %v945 = vsel %vm829, %v932, 0.0
      %v946 = vadd.f32 %v944, %v945
      %v947 = vsel %vm829, %v933, 0.0
      %v948 = vadd.f32 %v946, %v947
      %v949 = vld [vmem:[%s3] sm:$0x3]
      %v950 = vld [vmem:[%s3 + $0x2] sm:$0x3]
      %v951 = vld [vmem:[%s3 + $0x4] sm:$0x3]
      %v952 = vld [vmem:[%s3 + $0x6] sm:$0x3]
      %v953 = vld [vmem:[%s3 + $0x8] sm:$0x3]
      %v954 = vld [vmem:[%s3 + $0xa] sm:$0x3]
      %v955 = vld [vmem:[%s3 + $0xc] sm:$0x3]
      %v956 = vld [vmem:[%s3 + $0xe] sm:$0x3]
      %v957 = vmul.f32 %v910, %v949
      %v958 = vmul.f32 %v911, %v950
      %v959 = vmul.f32 %v912, %v951
      %v960 = vmul.f32 %v913, %v952
      %v961 = vmul.f32 %v914, %v953
      %v962 = vmul.f32 %v915, %v954
      %v963 = vmul.f32 %v916, %v955
      %v964 = vmul.f32 %v917, %v956
      %v965 = vsel %vm829, %v957, 0.0
      %v966 = vsel %vm829, %v958, 0.0
      %v967 = vadd.f32 %v965, %v966
      %v968 = vsel %vm829, %v959, 0.0
      %v969 = vadd.f32 %v967, %v968
      %v970 = vsel %vm829, %v960, 0.0
      %v971 = vadd.f32 %v969, %v970
      %v972 = vsel %vm829, %v961, 0.0
      %v973 = vadd.f32 %v971, %v972
      %v974 = vsel %vm829, %v962, 0.0
      %v975 = vadd.f32 %v973, %v974
      %v976 = vsel %vm829, %v963, 0.0
      %v977 = vadd.f32 %v975, %v976
      %v978 = vsel %vm829, %v964, 0.0
      %v979 = vadd.f32 %v977, %v978
      %v980 = vld [vmem:[%s10] sm:$0xff]
      %v981 = vld [vmem:[%s10 + $0x8] sm:$0xff]
      %v982 = vld [vmem:[%s11] sm:$0xff]
      %v983 = vld [vmem:[%s11 + $0x8] sm:$0xff]
      %v984 = vld [vmem:[%s11 + $0x10] sm:$0xff]
      %v985 = vld [vmem:[%s11 + $0x18] sm:$0xff]
      %v987 = vsel %vm716, %v948, 0
      %989 = vmatprep.subr.mxu0 0.0
      %990 = vmatpush1.msra.mxu0 %v982
      %991 = vmatprep.subr.mxu0 0.0
      %992 = vmatpush1.msra.mxu0 %v983
      %993 = vmatprep.subr.mxu0 0.0
      %994 = vmatpush1.msra.mxu0 %v984
      %995 = vmatprep.subr.mxu0 0.0
      %996 = vmatpush1.msra.mxu0 %v985
      %997 = vmatprep.subr.mxu0 0.0
      %998 = vmatpush1.msra.mxu0 0.0
      %999 = vmatprep.subr.mxu0 0.0
      %1000 = vmatpush1.msra.mxu0 0.0
      %1001 = vmatprep.subr.mxu0 0.0
      %1002 = vmatpush1.msra.mxu0 0.0
      %1003 = vmatprep.subr.mxu0 0.0
      %1004 = vmatpush1.msra.mxu0 0.0
      %1005 = vmatprep.subr.mxu0 0.0
      %1006 = vmatpush1.msra.mxu0 0.0
      %1007 = vmatprep.subr.mxu0 0.0
      %1008 = vmatpush1.msra.mxu0 0.0
      %1009 = vmatprep.subr.mxu0 0.0
      %1010 = vmatpush1.msra.mxu0 0.0
      %1011 = vmatprep.subr.mxu0 0.0
      %1012 = vmatpush1.msra.mxu0 0.0
      %1013 = vmatprep.subr.mxu0 0.0
      %1014 = vmatpush1.msra.mxu0 0.0
      %1015 = vmatprep.subr.mxu0 0.0
      %1016 = vmatpush1.msra.mxu0 0.0
      %1017 = vmatprep.subr.mxu0 0.0
      %1018 = vmatpush1.msra.mxu0 0.0
      %1019 = vmatprep.subr.mxu0 0.0
      %1020 = vmatpush1.msra.mxu0 0.0
      %1021 = vmatprep.subr.mxu0 0.0
      %1022 = vmatpush1.msra.mxu0 0.0
      %1023 = vmatprep.subr.mxu0 0.0
      %1024 = vmatpush1.msra.mxu0 0.0
      %1025 = vmatprep.subr.mxu0 0.0
      %1026 = vmatpush1.msra.mxu0 0.0
      %1027 = vmatprep.subr.mxu0 0.0
      %1028 = vmatpush1.msra.mxu0 0.0
      %1029 = vmatprep.subr.mxu0 0.0
      %1030 = vmatpush1.msra.mxu0 0.0
      %1031 = vmatprep.subr.mxu0 0.0
      %1032 = vmatpush1.msra.mxu0 0.0
      %1033 = vmatprep.subr.mxu0 0.0
      %1034 = vmatpush1.msra.mxu0 0.0
      %1035 = vmatprep.subr.mxu0 0.0
      %1036 = vmatpush1.msra.mxu0 0.0
      %1037 = vmatprep.subr.mxu0 0.0
      %1038 = vmatpush1.msra.mxu0 0.0
      %1039 = vmatprep.subr.mxu0 0.0
      %1040 = vmatpush1.msra.mxu0 0.0
      %1041 = vmatprep.subr.mxu0 0.0
      %1042 = vmatpush1.msra.mxu0 0.0
      %1043 = vmatprep.subr.mxu0 0.0
      %1044 = vmatpush1.msra.mxu0 0.0
      %1045 = vmatprep.subr.mxu0 0.0
      %1046 = vmatpush1.msra.mxu0 0.0
      %1047 = vmatprep.subr.mxu0 0.0
      %1048 = vmatpush1.msra.mxu0 0.0
      %1049 = vmatprep.subr.mxu0 0.0
      %1050 = vmatpush1.msra.mxu0 0.0
      %1051 = vmatprep.subr.mxu0 0.0
      %1052 = vmatpush1.msra.mxu0 0.0
      %1053 = vmatprep.mubr.f32.mxu0 0.0
      %1054 = vmatmul.mubr.f32.gmra.mrb[0].mxu0 %v987
      %v1055 = vpop.f32.mrb[0].mxu0
      %v1056 = vadd.f32 0.0, %v1055
      %v1057 = vpop.f32.mrb[0].mxu0
      %1058 = vdwg.mxu0
      %vm1059 = vcmask 130048
      %v1061 = vsel %vm1059, %v704, 0
      %1063 = vmatprep.subr.mxu0 0.0
      %1064 = vmatpush1.msra.mxu0 %v980
      %1065 = vmatprep.subr.mxu0 0.0
      %1066 = vmatpush1.msra.mxu0 %v981
      %1067 = vmatprep.subr.mxu0 0.0
      %1068 = vmatpush1.msra.mxu0 0.0
      %1069 = vmatprep.subr.mxu0 0.0
      %1070 = vmatpush1.msra.mxu0 0.0
      %1071 = vmatprep.subr.mxu0 0.0
      %1072 = vmatpush1.msra.mxu0 0.0
      %1073 = vmatprep.subr.mxu0 0.0
      %1074 = vmatpush1.msra.mxu0 0.0
      %1075 = vmatprep.subr.mxu0 0.0
      %1076 = vmatpush1.msra.mxu0 0.0
      %1077 = vmatprep.subr.mxu0 0.0
      %1078 = vmatpush1.msra.mxu0 0.0
      %1079 = vmatprep.subr.mxu0 0.0
      %1080 = vmatpush1.msra.mxu0 0.0
      %1081 = vmatprep.subr.mxu0 0.0
      %1082 = vmatpush1.msra.mxu0 0.0
      %1083 = vmatprep.subr.mxu0 0.0
      %1084 = vmatpush1.msra.mxu0 0.0
      %1085 = vmatprep.subr.mxu0 0.0
      %1086 = vmatpush1.msra.mxu0 0.0
      %1087 = vmatprep.subr.mxu0 0.0
      %1088 = vmatpush1.msra.mxu0 0.0
      %1089 = vmatprep.subr.mxu0 0.0
      %1090 = vmatpush1.msra.mxu0 0.0
      %1091 = vmatprep.subr.mxu0 0.0
      %1092 = vmatpush1.msra.mxu0 0.0
      %1093 = vmatprep.subr.mxu0 0.0
      %1094 = vmatpush1.msra.mxu0 0.0
      %1095 = vmatprep.subr.mxu0 0.0
      %1096 = vmatpush1.msra.mxu0 0.0
      %1097 = vmatprep.subr.mxu0 0.0
      %1098 = vmatpush1.msra.mxu0 0.0
      %1099 = vmatprep.subr.mxu0 0.0
      %1100 = vmatpush1.msra.mxu0 0.0
      %1101 = vmatprep.subr.mxu0 0.0
      %1102 = vmatpush1.msra.mxu0 0.0
      %1103 = vmatprep.subr.mxu0 0.0
      %1104 = vmatpush1.msra.mxu0 0.0
      %1105 = vmatprep.subr.mxu0 0.0
      %1106 = vmatpush1.msra.mxu0 0.0
      %1107 = vmatprep.subr.mxu0 0.0
      %1108 = vmatpush1.msra.mxu0 0.0
      %1109 = vmatprep.subr.mxu0 0.0
      %1110 = vmatpush1.msra.mxu0 0.0
      %1111 = vmatprep.subr.mxu0 0.0
      %1112 = vmatpush1.msra.mxu0 0.0
      %1113 = vmatprep.subr.mxu0 0.0
      %1114 = vmatpush1.msra.mxu0 0.0
      %1115 = vmatprep.subr.mxu0 0.0
      %1116 = vmatpush1.msra.mxu0 0.0
      %1117 = vmatprep.subr.mxu0 0.0
      %1118 = vmatpush1.msra.mxu0 0.0
      %1119 = vmatprep.subr.mxu0 0.0
      %1120 = vmatpush1.msra.mxu0 0.0
      %1121 = vmatprep.subr.mxu0 0.0
      %1122 = vmatpush1.msra.mxu0 0.0
      %1123 = vmatprep.subr.mxu0 0.0
      %1124 = vmatpush1.msra.mxu0 0.0
      %1125 = vmatprep.subr.mxu0 0.0
      %1126 = vmatpush1.msra.mxu0 0.0
      %1127 = vmatprep.mubr.f32.mxu0 0.0
      %1128 = vmatmul.mubr.f32.gmra.mrb[0].mxu0 %v1061
      %v1129 = vpop.f32.mrb[0].mxu0
      %v1130 = vadd.f32 %v1056, %v1129
      %v1131 = vpop.f32.mrb[0].mxu0
      %1132 = vdwg.mxu0
      %v1133 = vld [vmem:[%s12] sm:$0xff]
      %v1134 = vld [vmem:[%s12 + $0x8] sm:$0xff]
      %v1135 = vld [vmem:[%s12 + $0x10] sm:$0xff]
      %v1136 = vld [vmem:[%s12 + $0x18] sm:$0xff]
      %v1138 = vsel %vm716, %v979, 0
      %1140 = vmatprep.subr.mxu0 0.0
      %1141 = vmatpush1.msra.mxu0 %v1133
      %1142 = vmatprep.subr.mxu0 0.0
      %1143 = vmatpush1.msra.mxu0 %v1134
      %1144 = vmatprep.subr.mxu0 0.0
      %1145 = vmatpush1.msra.mxu0 %v1135
      %1146 = vmatprep.subr.mxu0 0.0
      %1147 = vmatpush1.msra.mxu0 %v1136
      %1148 = vmatprep.subr.mxu0 0.0
      %1149 = vmatpush1.msra.mxu0 0.0
      %1150 = vmatprep.subr.mxu0 0.0
      %1151 = vmatpush1.msra.mxu0 0.0
      %1152 = vmatprep.subr.mxu0 0.0
      %1153 = vmatpush1.msra.mxu0 0.0
      %1154 = vmatprep.subr.mxu0 0.0
      %1155 = vmatpush1.msra.mxu0 0.0
      %1156 = vmatprep.subr.mxu0 0.0
      %1157 = vmatpush1.msra.mxu0 0.0
      %1158 = vmatprep.subr.mxu0 0.0
      %1159 = vmatpush1.msra.mxu0 0.0
      %1160 = vmatprep.subr.mxu0 0.0
      %1161 = vmatpush1.msra.mxu0 0.0
      %1162 = vmatprep.subr.mxu0 0.0
      %1163 = vmatpush1.msra.mxu0 0.0
      %1164 = vmatprep.subr.mxu0 0.0
      %1165 = vmatpush1.msra.mxu0 0.0
      %1166 = vmatprep.subr.mxu0 0.0
      %1167 = vmatpush1.msra.mxu0 0.0
      %1168 = vmatprep.subr.mxu0 0.0
      %1169 = vmatpush1.msra.mxu0 0.0
      %1170 = vmatprep.subr.mxu0 0.0
      %1171 = vmatpush1.msra.mxu0 0.0
      %1172 = vmatprep.subr.mxu0 0.0
      %1173 = vmatpush1.msra.mxu0 0.0
      %1174 = vmatprep.subr.mxu0 0.0
      %1175 = vmatpush1.msra.mxu0 0.0
      %1176 = vmatprep.subr.mxu0 0.0
      %1177 = vmatpush1.msra.mxu0 0.0
      %1178 = vmatprep.subr.mxu0 0.0
      %1179 = vmatpush1.msra.mxu0 0.0
      %1180 = vmatprep.subr.mxu0 0.0
      %1181 = vmatpush1.msra.mxu0 0.0
      %1182 = vmatprep.subr.mxu0 0.0
      %1183 = vmatpush1.msra.mxu0 0.0
      %1184 = vmatprep.subr.mxu0 0.0
      %1185 = vmatpush1.msra.mxu0 0.0
      %1186 = vmatprep.subr.mxu0 0.0
      %1187 = vmatpush1.msra.mxu0 0.0
      %1188 = vmatprep.subr.mxu0 0.0
      %1189 = vmatpush1.msra.mxu0 0.0
      %1190 = vmatprep.subr.mxu0 0.0
      %1191 = vmatpush1.msra.mxu0 0.0
      %1192 = vmatprep.subr.mxu0 0.0
      %1193 = vmatpush1.msra.mxu0 0.0
      %1194 = vmatprep.subr.mxu0 0.0
      %1195 = vmatpush1.msra.mxu0 0.0
      %1196 = vmatprep.subr.mxu0 0.0
      %1197 = vmatpush1.msra.mxu0 0.0
      %1198 = vmatprep.subr.mxu0 0.0
      %1199 = vmatpush1.msra.mxu0 0.0
      %1200 = vmatprep.subr.mxu0 0.0
      %1201 = vmatpush1.msra.mxu0 0.0
      %1202 = vmatprep.subr.mxu0 0.0
      %1203 = vmatpush1.msra.mxu0 0.0
      %1204 = vmatprep.mubr.f32.mxu0 0.0
      %1205 = vmatmul.mubr.f32.gmra.mrb[0].mxu0 %v1138
      %v1206 = vpop.f32.mrb[0].mxu0
      %v1207 = vadd.f32 0.0, %v1206
      %v1208 = vpop.f32.mrb[0].mxu0
      %1209 = vdwg.mxu0
      %v1210 = vadd.f32 %v1130, %v1207
      %v1211 = vld [vmem:[%s14] sm:$0x1]
      %v1213 = vlaneseq
      %v1214 = vshrl.u32 %v1213, 7
      %v1215 = vsub.s32 0, %v1214
      %v1216 = vrot.slane %v1211, %v1215
      %v1218 = vadd.f32 %v1210, %v1216
      %v1219 = vld [vmem:[%s13] sm:$0xff]
      %v1220 = vld [vmem:[%s13 + $0x8] sm:$0xff]
      %v1221 = vld [vmem:[%s13 + $0x10] sm:$0xff]
      %v1222 = vld [vmem:[%s13 + $0x18] sm:$0xff]
      %v1223 = vld [vmem:[%s15] sm:$0x1]
      %v1225 = vlaneseq
      %v1226 = vshrl.u32 %v1225, 7
      %v1227 = vsub.s32 0, %v1226
      %v1228 = vrot.slane %v1223, %v1227
      %1230 = vmatprep.subr.mxu0 0.0
      %1231 = vmatpush1.msra.mxu0 %v1219
      %1232 = vmatprep.subr.mxu0 0.0
      %1233 = vmatpush1.msra.mxu0 %v1220
      %1234 = vmatprep.subr.mxu0 0.0
      %1235 = vmatpush1.msra.mxu0 %v1221
      %1236 = vmatprep.subr.mxu0 0.0
      %1237 = vmatpush1.msra.mxu0 %v1222
      %1238 = vmatprep.subr.mxu0 0.0
      %1239 = vmatpush1.msra.mxu0 0.0
      %1240 = vmatprep.subr.mxu0 0.0
      %1241 = vmatpush1.msra.mxu0 0.0
      %1242 = vmatprep.subr.mxu0 0.0
      %1243 = vmatpush1.msra.mxu0 0.0
      %1244 = vmatprep.subr.mxu0 0.0
      %1245 = vmatpush1.msra.mxu0 0.0
      %1246 = vmatprep.subr.mxu0 0.0
      %1247 = vmatpush1.msra.mxu0 0.0
      %1248 = vmatprep.subr.mxu0 0.0
      %1249 = vmatpush1.msra.mxu0 0.0
      %1250 = vmatprep.subr.mxu0 0.0
      %1251 = vmatpush1.msra.mxu0 0.0
      %1252 = vmatprep.subr.mxu0 0.0
      %1253 = vmatpush1.msra.mxu0 0.0
      %1254 = vmatprep.subr.mxu0 0.0
      %1255 = vmatpush1.msra.mxu0 0.0
      %1256 = vmatprep.subr.mxu0 0.0
      %1257 = vmatpush1.msra.mxu0 0.0
      %1258 = vmatprep.subr.mxu0 0.0
      %1259 = vmatpush1.msra.mxu0 0.0
      %1260 = vmatprep.subr.mxu0 0.0
      %1261 = vmatpush1.msra.mxu0 0.0
      %1262 = vmatprep.subr.mxu0 0.0
      %1263 = vmatpush1.msra.mxu0 0.0
      %1264 = vmatprep.subr.mxu0 0.0
      %1265 = vmatpush1.msra.mxu0 0.0
      %1266 = vmatprep.subr.mxu0 0.0
      %1267 = vmatpush1.msra.mxu0 0.0
      %1268 = vmatprep.subr.mxu0 0.0
      %1269 = vmatpush1.msra.mxu0 0.0
      %1270 = vmatprep.subr.mxu0 0.0
      %1271 = vmatpush1.msra.mxu0 0.0
      %1272 = vmatprep.subr.mxu0 0.0
      %1273 = vmatpush1.msra.mxu0 0.0
      %1274 = vmatprep.subr.mxu0 0.0
      %1275 = vmatpush1.msra.mxu0 0.0
      %1276 = vmatprep.subr.mxu0 0.0
      %1277 = vmatpush1.msra.mxu0 0.0
      %1278 = vmatprep.subr.mxu0 0.0
      %1279 = vmatpush1.msra.mxu0 0.0
      %1280 = vmatprep.subr.mxu0 0.0
      %1281 = vmatpush1.msra.mxu0 0.0
      %1282 = vmatprep.subr.mxu0 0.0
      %1283 = vmatpush1.msra.mxu0 0.0
      %1284 = vmatprep.subr.mxu0 0.0
      %1285 = vmatpush1.msra.mxu0 0.0
      %1286 = vmatprep.subr.mxu0 0.0
      %1287 = vmatpush1.msra.mxu0 0.0
      %1288 = vmatprep.subr.mxu0 0.0
      %1289 = vmatpush1.msra.mxu0 0.0
      %1290 = vmatprep.subr.mxu0 0.0
      %1291 = vmatpush1.msra.mxu0 0.0
      %1292 = vmatprep.subr.mxu0 0.0
      %1293 = vmatpush1.msra.mxu0 0.0
      %1294 = vmatprep.mubr.f32.mxu0 0.0
      %1295 = vmatmul.mubr.f32.gmra.mrb[0].mxu0 %v718
      %v1296 = vpop.f32.mrb[0].mxu0
      %v1297 = vadd.f32 %v1228, %v1296
      %v1298 = vpop.f32.mrb[0].mxu0
      %1299 = vdwg.mxu0
      %v1300 = vadd.f32 %v1218, %v1297
      %v1301 = vxor.u32 %v1300, 2147483648
      %v1302 = vmul.f32 %v1301, 1.442695
      %v1303 = vpow.pop %v1302
      %v1304 = vadd.f32 %v1303, 1.0
      %v1305 = vrcp.pop %v1304
      %v1306 = vmul.f32 1.0, %v1305
      %1308 = vrot.lane.b32.xlu0 %v1297, 64
      %v1309 = vpop.permute.xlu0 %1308
      %v1311 = vmul.f32 %v1306, %v1309
      %1313 = vrot.lane.b32.xlu0 %v1311, 64
      %v1314 = vpop.permute.xlu0 %1313
      %v1316 = vadd.f32 %v1218, %v1314
      %v1317 = vtanh.pop %v1316
      %v1318 = vsub.f32 1.0, %v1306
      %1320 = vrot.lane.b32.xlu0 %v1317, 96
      %v1321 = vpop.permute.xlu0 %1320
      %v1323 = vmul.f32 %v1318, %v1321
      %1324 = vrot.lane.b32.xlu0 %v703, 32
      %v1325 = vpop.permute.xlu0 %1324
      %v1327 = vmul.f32 %v1306, %v1325
      %v1328 = vadd.f32 %v1323, %v1327
      %v1329 = vld [vmem:[%s16] sm:$0xff]
      %v1330 = vld [vmem:[%s16 + $0x8] sm:$0xff]
      %v1331 = vld [vmem:[%s16 + $0x10] sm:$0xff]
      %v1332 = vld [vmem:[%s16 + $0x18] sm:$0xff]
      %v1333 = vld [vmem:[%s17] sm:$0xff]
      %v1334 = vld [vmem:[%s17 + $0x8] sm:$0xff]
      %v1335 = vld [vmem:[%s17 + $0x10] sm:$0xff]
      %v1336 = vld [vmem:[%s17 + $0x18] sm:$0xff]
      %1337 = vmatprep.subr.mxu0 0.0
      %1338 = vmatpush1.msra.mxu0 %v1333
      %1339 = vmatprep.subr.mxu0 0.0
      %1340 = vmatpush1.msra.mxu0 %v1334
      %1341 = vmatprep.subr.mxu0 0.0
      %1342 = vmatpush1.msra.mxu0 %v1335
      %1343 = vmatprep.subr.mxu0 0.0
      %1344 = vmatpush1.msra.mxu0 %v1336
      %1345 = vmatprep.subr.mxu0 0.0
      %1346 = vmatpush1.msra.mxu0 0.0
      %1347 = vmatprep.subr.mxu0 0.0
      %1348 = vmatpush1.msra.mxu0 0.0
      %1349 = vmatprep.subr.mxu0 0.0
      %1350 = vmatpush1.msra.mxu0 0.0
      %1351 = vmatprep.subr.mxu0 0.0
      %1352 = vmatpush1.msra.mxu0 0.0
      %1353 = vmatprep.subr.mxu0 0.0
      %1354 = vmatpush1.msra.mxu0 0.0
      %1355 = vmatprep.subr.mxu0 0.0
      %1356 = vmatpush1.msra.mxu0 0.0
      %1357 = vmatprep.subr.mxu0 0.0
      %1358 = vmatpush1.msra.mxu0 0.0
      %1359 = vmatprep.subr.mxu0 0.0
      %1360 = vmatpush1.msra.mxu0 0.0
      %1361 = vmatprep.subr.mxu0 0.0
      %1362 = vmatpush1.msra.mxu0 0.0
      %1363 = vmatprep.subr.mxu0 0.0
      %1364 = vmatpush1.msra.mxu0 0.0
      %1365 = vmatprep.subr.mxu0 0.0
      %1366 = vmatpush1.msra.mxu0 0.0
      %1367 = vmatprep.subr.mxu0 0.0
      %1368 = vmatpush1.msra.mxu0 0.0
      %1369 = vmatprep.subr.mxu0 0.0
      %1370 = vmatpush1.msra.mxu0 0.0
      %1371 = vmatprep.subr.mxu0 0.0
      %1372 = vmatpush1.msra.mxu0 0.0
      %1373 = vmatprep.subr.mxu0 0.0
      %1374 = vmatpush1.msra.mxu0 0.0
      %1375 = vmatprep.subr.mxu0 0.0
      %1376 = vmatpush1.msra.mxu0 0.0
      %1377 = vmatprep.subr.mxu0 0.0
      %1378 = vmatpush1.msra.mxu0 0.0
      %1379 = vmatprep.subr.mxu0 0.0
      %1380 = vmatpush1.msra.mxu0 0.0
      %1381 = vmatprep.subr.mxu0 0.0
      %1382 = vmatpush1.msra.mxu0 0.0
      %1383 = vmatprep.subr.mxu0 0.0
      %1384 = vmatpush1.msra.mxu0 0.0
      %1385 = vmatprep.subr.mxu0 0.0
      %1386 = vmatpush1.msra.mxu0 0.0
      %1387 = vmatprep.subr.mxu0 0.0
      %1388 = vmatpush1.msra.mxu0 0.0
      %1389 = vmatprep.subr.mxu0 0.0
      %1390 = vmatpush1.msra.mxu0 0.0
      %1391 = vmatprep.subr.mxu0 0.0
      %1392 = vmatpush1.msra.mxu0 0.0
      %1393 = vmatprep.subr.mxu0 0.0
      %1394 = vmatpush1.msra.mxu0 0.0
      %1395 = vmatprep.subr.mxu0 0.0
      %1396 = vmatpush1.msra.mxu0 0.0
      %1397 = vmatprep.subr.mxu0 0.0
      %1398 = vmatpush1.msra.mxu0 0.0
      %1399 = vmatprep.subr.mxu0 0.0
      %1400 = vmatpush1.msra.mxu0 0.0
      %1401 = vmatprep.mubr.f32.mxu0 0.0
      %1402 = vmatmul.mubr.f32.gmra.mrb[0].mxu0 %v987
      %v1403 = vpop.f32.mrb[0].mxu0
      %v1404 = vadd.f32 0.0, %v1403
      %v1405 = vpop.f32.mrb[0].mxu0
      %1406 = vdwg.mxu0
      %1408 = vrot.lane.b32.xlu0 %v1328, 96
      %v1409 = vpop.permute.xlu0 %1408
      %v1410 = vsel %vm716, %v1409, 0
      %1412 = vmatprep.subr.mxu0 0.0
      %1413 = vmatpush1.msra.mxu0 %v1329
      %1414 = vmatprep.subr.mxu0 0.0
      %1415 = vmatpush1.msra.mxu0 %v1330
      %1416 = vmatprep.subr.mxu0 0.0
      %1417 = vmatpush1.msra.mxu0 %v1331
      %1418 = vmatprep.subr.mxu0 0.0
      %1419 = vmatpush1.msra.mxu0 %v1332
      %1420 = vmatprep.subr.mxu0 0.0
      %1421 = vmatpush1.msra.mxu0 0.0
      %1422 = vmatprep.subr.mxu0 0.0
      %1423 = vmatpush1.msra.mxu0 0.0
      %1424 = vmatprep.subr.mxu0 0.0
      %1425 = vmatpush1.msra.mxu0 0.0
      %1426 = vmatprep.subr.mxu0 0.0
      %1427 = vmatpush1.msra.mxu0 0.0
      %1428 = vmatprep.subr.mxu0 0.0
      %1429 = vmatpush1.msra.mxu0 0.0
      %1430 = vmatprep.subr.mxu0 0.0
      %1431 = vmatpush1.msra.mxu0 0.0
      %1432 = vmatprep.subr.mxu0 0.0
      %1433 = vmatpush1.msra.mxu0 0.0
      %1434 = vmatprep.subr.mxu0 0.0
      %1435 = vmatpush1.msra.mxu0 0.0
      %1436 = vmatprep.subr.mxu0 0.0
      %1437 = vmatpush1.msra.mxu0 0.0
      %1438 = vmatprep.subr.mxu0 0.0
      %1439 = vmatpush1.msra.mxu0 0.0
      %1440 = vmatprep.subr.mxu0 0.0
      %1441 = vmatpush1.msra.mxu0 0.0
      %1442 = vmatprep.subr.mxu0 0.0
      %1443 = vmatpush1.msra.mxu0 0.0
      %1444 = vmatprep.subr.mxu0 0.0
      %1445 = vmatpush1.msra.mxu0 0.0
      %1446 = vmatprep.subr.mxu0 0.0
      %1447 = vmatpush1.msra.mxu0 0.0
      %1448 = vmatprep.subr.mxu0 0.0
      %1449 = vmatpush1.msra.mxu0 0.0
      %1450 = vmatprep.subr.mxu0 0.0
      %1451 = vmatpush1.msra.mxu0 0.0
      %1452 = vmatprep.subr.mxu0 0.0
      %1453 = vmatpush1.msra.mxu0 0.0
      %1454 = vmatprep.subr.mxu0 0.0
      %1455 = vmatpush1.msra.mxu0 0.0
      %1456 = vmatprep.subr.mxu0 0.0
      %1457 = vmatpush1.msra.mxu0 0.0
      %1458 = vmatprep.subr.mxu0 0.0
      %1459 = vmatpush1.msra.mxu0 0.0
      %1460 = vmatprep.subr.mxu0 0.0
      %1461 = vmatpush1.msra.mxu0 0.0
      %1462 = vmatprep.subr.mxu0 0.0
      %1463 = vmatpush1.msra.mxu0 0.0
      %1464 = vmatprep.subr.mxu0 0.0
      %1465 = vmatpush1.msra.mxu0 0.0
      %1466 = vmatprep.subr.mxu0 0.0
      %1467 = vmatpush1.msra.mxu0 0.0
      %1468 = vmatprep.subr.mxu0 0.0
      %1469 = vmatpush1.msra.mxu0 0.0
      %1470 = vmatprep.subr.mxu0 0.0
      %1471 = vmatpush1.msra.mxu0 0.0
      %1472 = vmatprep.subr.mxu0 0.0
      %1473 = vmatpush1.msra.mxu0 0.0
      %1474 = vmatprep.subr.mxu0 0.0
      %1475 = vmatpush1.msra.mxu0 0.0
      %1476 = vmatprep.mubr.f32.mxu0 0.0
      %1477 = vmatmul.mubr.f32.gmra.mrb[0].mxu0 %v1410
      %v1478 = vpop.f32.mrb[0].mxu0
      %v1479 = vadd.f32 %v1404, %v1478
      %v1480 = vpop.f32.mrb[0].mxu0
      %1481 = vdwg.mxu0
      %v1482 = vld [vmem:[%s18] sm:$0xff]
      %v1483 = vld [vmem:[%s18 + $0x8] sm:$0xff]
      %v1484 = vld [vmem:[%s18 + $0x10] sm:$0xff]
      %v1485 = vld [vmem:[%s18 + $0x18] sm:$0xff]
      %1486 = vmatprep.subr.mxu0 0.0
      %1487 = vmatpush1.msra.mxu0 %v1482
      %1488 = vmatprep.subr.mxu0 0.0
      %1489 = vmatpush1.msra.mxu0 %v1483
      %1490 = vmatprep.subr.mxu0 0.0
      %1491 = vmatpush1.msra.mxu0 %v1484
      %1492 = vmatprep.subr.mxu0 0.0
      %1493 = vmatpush1.msra.mxu0 %v1485
      %1494 = vmatprep.subr.mxu0 0.0
      %1495 = vmatpush1.msra.mxu0 0.0
      %1496 = vmatprep.subr.mxu0 0.0
      %1497 = vmatpush1.msra.mxu0 0.0
      %1498 = vmatprep.subr.mxu0 0.0
      %1499 = vmatpush1.msra.mxu0 0.0
      %1500 = vmatprep.subr.mxu0 0.0
      %1501 = vmatpush1.msra.mxu0 0.0
      %1502 = vmatprep.subr.mxu0 0.0
      %1503 = vmatpush1.msra.mxu0 0.0
      %1504 = vmatprep.subr.mxu0 0.0
      %1505 = vmatpush1.msra.mxu0 0.0
      %1506 = vmatprep.subr.mxu0 0.0
      %1507 = vmatpush1.msra.mxu0 0.0
      %1508 = vmatprep.subr.mxu0 0.0
      %1509 = vmatpush1.msra.mxu0 0.0
      %1510 = vmatprep.subr.mxu0 0.0
      %1511 = vmatpush1.msra.mxu0 0.0
      %1512 = vmatprep.subr.mxu0 0.0
      %1513 = vmatpush1.msra.mxu0 0.0
      %1514 = vmatprep.subr.mxu0 0.0
      %1515 = vmatpush1.msra.mxu0 0.0
      %1516 = vmatprep.subr.mxu0 0.0
      %1517 = vmatpush1.msra.mxu0 0.0
      %1518 = vmatprep.subr.mxu0 0.0
      %1519 = vmatpush1.msra.mxu0 0.0
      %1520 = vmatprep.subr.mxu0 0.0
      %1521 = vmatpush1.msra.mxu0 0.0
      %1522 = vmatprep.subr.mxu0 0.0
      %1523 = vmatpush1.msra.mxu0 0.0
      %1524 = vmatprep.subr.mxu0 0.0
      %1525 = vmatpush1.msra.mxu0 0.0
      %1526 = vmatprep.subr.mxu0 0.0
      %1527 = vmatpush1.msra.mxu0 0.0
      %1528 = vmatprep.subr.mxu0 0.0
      %1529 = vmatpush1.msra.mxu0 0.0
      %1530 = vmatprep.subr.mxu0 0.0
      %1531 = vmatpush1.msra.mxu0 0.0
      %1532 = vmatprep.subr.mxu0 0.0
      %1533 = vmatpush1.msra.mxu0 0.0
      %1534 = vmatprep.subr.mxu0 0.0
      %1535 = vmatpush1.msra.mxu0 0.0
      %1536 = vmatprep.subr.mxu0 0.0
      %1537 = vmatpush1.msra.mxu0 0.0
      %1538 = vmatprep.subr.mxu0 0.0
      %1539 = vmatpush1.msra.mxu0 0.0
      %1540 = vmatprep.subr.mxu0 0.0
      %1541 = vmatpush1.msra.mxu0 0.0
      %1542 = vmatprep.subr.mxu0 0.0
      %1543 = vmatpush1.msra.mxu0 0.0
      %1544 = vmatprep.subr.mxu0 0.0
      %1545 = vmatpush1.msra.mxu0 0.0
      %1546 = vmatprep.subr.mxu0 0.0
      %1547 = vmatpush1.msra.mxu0 0.0
      %1548 = vmatprep.subr.mxu0 0.0
      %1549 = vmatpush1.msra.mxu0 0.0
      %1550 = vmatprep.mubr.f32.mxu0 0.0
      %1551 = vmatmul.mubr.f32.gmra.mrb[0].mxu0 %v1138
      %v1552 = vpop.f32.mrb[0].mxu0
      %v1553 = vadd.f32 0.0, %v1552
      %v1554 = vpop.f32.mrb[0].mxu0
      %1555 = vdwg.mxu0
      %v1556 = vadd.f32 %v1479, %v1553
      %v1557 = vld [vmem:[%s19] sm:$0xff]
      %v1558 = vld [vmem:[%s19 + $0x8] sm:$0xff]
      %1559 = vmatprep.subr.mxu0 0.0
      %1560 = vmatpush1.msra.mxu0 %v1557
      %1561 = vmatprep.subr.mxu0 0.0
      %1562 = vmatpush1.msra.mxu0 %v1558
      %1563 = vmatprep.subr.mxu0 0.0
      %1564 = vmatpush1.msra.mxu0 0.0
      %1565 = vmatprep.subr.mxu0 0.0
      %1566 = vmatpush1.msra.mxu0 0.0
      %1567 = vmatprep.subr.mxu0 0.0
      %1568 = vmatpush1.msra.mxu0 0.0
      %1569 = vmatprep.subr.mxu0 0.0
      %1570 = vmatpush1.msra.mxu0 0.0
      %1571 = vmatprep.subr.mxu0 0.0
      %1572 = vmatpush1.msra.mxu0 0.0
      %1573 = vmatprep.subr.mxu0 0.0
      %1574 = vmatpush1.msra.mxu0 0.0
      %1575 = vmatprep.subr.mxu0 0.0
      %1576 = vmatpush1.msra.mxu0 0.0
      %1577 = vmatprep.subr.mxu0 0.0
      %1578 = vmatpush1.msra.mxu0 0.0
      %1579 = vmatprep.subr.mxu0 0.0
      %1580 = vmatpush1.msra.mxu0 0.0
      %1581 = vmatprep.subr.mxu0 0.0
      %1582 = vmatpush1.msra.mxu0 0.0
      %1583 = vmatprep.subr.mxu0 0.0
      %1584 = vmatpush1.msra.mxu0 0.0
      %1585 = vmatprep.subr.mxu0 0.0
      %1586 = vmatpush1.msra.mxu0 0.0
      %1587 = vmatprep.subr.mxu0 0.0
      %1588 = vmatpush1.msra.mxu0 0.0
      %1589 = vmatprep.subr.mxu0 0.0
      %1590 = vmatpush1.msra.mxu0 0.0
      %1591 = vmatprep.subr.mxu0 0.0
      %1592 = vmatpush1.msra.mxu0 0.0
      %1593 = vmatprep.subr.mxu0 0.0
      %1594 = vmatpush1.msra.mxu0 0.0
      %1595 = vmatprep.subr.mxu0 0.0
      %1596 = vmatpush1.msra.mxu0 0.0
      %1597 = vmatprep.subr.mxu0 0.0
      %1598 = vmatpush1.msra.mxu0 0.0
      %1599 = vmatprep.subr.mxu0 0.0
      %1600 = vmatpush1.msra.mxu0 0.0
      %1601 = vmatprep.subr.mxu0 0.0
      %1602 = vmatpush1.msra.mxu0 0.0
      %1603 = vmatprep.subr.mxu0 0.0
      %1604 = vmatpush1.msra.mxu0 0.0
      %1605 = vmatprep.subr.mxu0 0.0
      %1606 = vmatpush1.msra.mxu0 0.0
      %1607 = vmatprep.subr.mxu0 0.0
      %1608 = vmatpush1.msra.mxu0 0.0
      %1609 = vmatprep.subr.mxu0 0.0
      %1610 = vmatpush1.msra.mxu0 0.0
      %1611 = vmatprep.subr.mxu0 0.0
      %1612 = vmatpush1.msra.mxu0 0.0
      %1613 = vmatprep.subr.mxu0 0.0
      %1614 = vmatpush1.msra.mxu0 0.0
      %1615 = vmatprep.subr.mxu0 0.0
      %1616 = vmatpush1.msra.mxu0 0.0
      %1617 = vmatprep.subr.mxu0 0.0
      %1618 = vmatpush1.msra.mxu0 0.0
      %1619 = vmatprep.subr.mxu0 0.0
      %1620 = vmatpush1.msra.mxu0 0.0
      %1621 = vmatprep.subr.mxu0 0.0
      %1622 = vmatpush1.msra.mxu0 0.0
      %1623 = vmatprep.mubr.f32.mxu0 0.0
      %1624 = vmatmul.mubr.f32.gmra.mrb[0].mxu0 %v1061
      %v1625 = vpop.f32.mrb[0].mxu0
      %v1626 = vadd.f32 0.0, %v1625
      %v1627 = vpop.f32.mrb[0].mxu0
      %1628 = vdwg.mxu0
      %v1629 = vadd.f32 %v1556, %v1626
      %v1630 = vld [vmem:[%s20] sm:$0x1]
      %v1632 = vlaneseq
      %v1633 = vshrl.u32 %v1632, 7
      %v1634 = vsub.s32 0, %v1633
      %v1635 = vrot.slane %v1630, %v1634
      %v1637 = vadd.f32 %v1629, %v1635
      %1638 = vst.msk [vmem:[%s614] sm:$0x3] %vm829, %v1637
      %1640 = vst.msk [vmem:[#allocation2] sm:$0x3] %vm829, %v1409
      %s1641 = sadd.s32 %s38, 1
      %v1642 = vlaneseq
      %v1643 = vand.u32 %v1642, 127
      %v1644 = vsel %vm829, %v1637, -inf
      %1645 = vmax.xlane.f32.xlu0 %v1644
      %v1646 = vpop.xlane.xlu0 %1645
      %vm1647 = vcmp.eq.f32.partialorder %v1637, %v1646
      %v1648 = vsel %vm1647, %v1643, 32
      %v1649 = vsel %vm829, %v1648, 2147483647
      %v1650 = vand.u32 %v1649, 65535
      %v1651 = vshra.s32 %v1649, 16
      %v1652 = vcvt.s32.f32 %v1650
      %v1653 = vcvt.s32.f32 %v1651
      %1654 = vmin.xlane.f32.xlu0 %v1653
      %v1655 = vpop.xlane.xlu0 %1654
      %vm1656 = vcmp.eq.f32.partialorder %v1653, %v1655
      %v1657 = vsel %vm1656, %v1652, inf
      %1658 = vmin.xlane.f32.xlu0 %v1657
      %v1659 = vpop.xlane.xlu0 %1658
      %v1660 = vcvt.f32.s32 %v1659
      %v1661 = vcvt.f32.s32 %v1655
      %v1662 = vshll.u32 %v1661, 16
      %v1663 = vadd.s32 %v1662, %v1660
      %vm1664 = vcmp.eq.s32.totalorder %v1643, %v1663
      %v1665 = vsel %vm1664, 1, 0
      %v1666 = vcvt.s32.f32 %v1665
      %s1667 = sld [smem:[#allocation5 + %s1641]]
      %p1668 = scmp.ne.s32.totalorder %s1667, 0
      %s1669 = scalar_select %p1668, 1, 0
      %s1670 = scvt.s32.f32 %s1669
      %s1671 = smul.u32 %s1641, 2
      %s1672 = scalar_lea.vmem %s5, %s1671
      %v1673 = vld [vmem:[%s1672] sm:$0x3]
      %v1674 = vstv %s1670
      %v1675 = vmul.f32 %v1674, %v1673
      %s1676 = ssub.f32 1.0, %s1670
      %v1677 = vstv %s1676
      %v1678 = vmul.f32 %v1677, %v1666
      %v1679 = vadd.f32 %v1675, %v1678
      %v1680 = vld [vmem:[%s6] sm:$0xff]
      %v1681 = vld [vmem:[%s6 + $0x8] sm:$0xff]
      %v1682 = vld [vmem:[%s6 + $0x10] sm:$0xff]
      %v1683 = vld [vmem:[%s6 + $0x18] sm:$0xff]
      %v1685 = vsel %vm716, %v1679, 0
      %1687 = vmatprep.subr.mxu0 0.0
      %1688 = vmatpush1.msra.mxu0 %v1680
      %1689 = vmatprep.subr.mxu0 0.0
      %1690 = vmatpush1.msra.mxu0 %v1681
      %1691 = vmatprep.subr.mxu0 0.0
      %1692 = vmatpush1.msra.mxu0 %v1682
      %1693 = vmatprep.subr.mxu0 0.0
      %1694 = vmatpush1.msra.mxu0 %v1683
      %1695 = vmatprep.subr.mxu0 0.0
      %1696 = vmatpush1.msra.mxu0 0.0
      %1697 = vmatprep.subr.mxu0 0.0
      %1698 = vmatpush1.msra.mxu0 0.0
      %1699 = vmatprep.subr.mxu0 0.0
      %1700 = vmatpush1.msra.mxu0 0.0
      %1701 = vmatprep.subr.mxu0 0.0
      %1702 = vmatpush1.msra.mxu0 0.0
      %1703 = vmatprep.subr.mxu0 0.0
      %1704 = vmatpush1.msra.mxu0 0.0
      %1705 = vmatprep.subr.mxu0 0.0
      %1706 = vmatpush1.msra.mxu0 0.0
      %1707 = vmatprep.subr.mxu0 0.0
      %1708 = vmatpush1.msra.mxu0 0.0
      %1709 = vmatprep.subr.mxu0 0.0
      %1710 = vmatpush1.msra.mxu0 0.0
      %1711 = vmatprep.subr.mxu0 0.0
      %1712 = vmatpush1.msra.mxu0 0.0
      %1713 = vmatprep.subr.mxu0 0.0
      %1714 = vmatpush1.msra.mxu0 0.0
      %1715 = vmatprep.subr.mxu0 0.0
      %1716 = vmatpush1.msra.mxu0 0.0
      %1717 = vmatprep.subr.mxu0 0.0
      %1718 = vmatpush1.msra.mxu0 0.0
      %1719 = vmatprep.subr.mxu0 0.0
      %1720 = vmatpush1.msra.mxu0 0.0
      %1721 = vmatprep.subr.mxu0 0.0
      %1722 = vmatpush1.msra.mxu0 0.0
      %1723 = vmatprep.subr.mxu0 0.0
      %1724 = vmatpush1.msra.mxu0 0.0
      %1725 = vmatprep.subr.mxu0 0.0
      %1726 = vmatpush1.msra.mxu0 0.0
      %1727 = vmatprep.subr.mxu0 0.0
      %1728 = vmatpush1.msra.mxu0 0.0
      %1729 = vmatprep.subr.mxu0 0.0
      %1730 = vmatpush1.msra.mxu0 0.0
      %1731 = vmatprep.subr.mxu0 0.0
      %1732 = vmatpush1.msra.mxu0 0.0
      %1733 = vmatprep.subr.mxu0 0.0
      %1734 = vmatpush1.msra.mxu0 0.0
      %1735 = vmatprep.subr.mxu0 0.0
      %1736 = vmatpush1.msra.mxu0 0.0
      %1737 = vmatprep.subr.mxu0 0.0
      %1738 = vmatpush1.msra.mxu0 0.0
      %1739 = vmatprep.subr.mxu0 0.0
      %1740 = vmatpush1.msra.mxu0 0.0
      %1741 = vmatprep.subr.mxu0 0.0
      %1742 = vmatpush1.msra.mxu0 0.0
      %1743 = vmatprep.subr.mxu0 0.0
      %1744 = vmatpush1.msra.mxu0 0.0
      %1745 = vmatprep.subr.mxu0 0.0
      %1746 = vmatpush1.msra.mxu0 0.0
      %1747 = vmatprep.subr.mxu0 0.0
      %1748 = vmatpush1.msra.mxu0 0.0
      %1749 = vmatprep.subr.mxu0 0.0
      %1750 = vmatpush1.msra.mxu0 0.0
      %1751 = vmatprep.mubr.f32.mxu0 0.0
      %1752 = vmatmul.mubr.f32.gmra.mrb[0].mxu0 %v1685
      %v1753 = vpop.f32.mrb[0].mxu0
      %v1754 = vadd.f32 0.0, %v1753
      %v1755 = vpop.f32.mrb[0].mxu0
      %1756 = vdwg.mxu0
      %vm1757 = vcmask 123904
      %1758 = vst.msk [vmem:[#allocation3] sm:$0x3] %vm1757, %v1754
      %p1759 = scmp.lt.s32.totalorder %s38, 6
      %s1760 = scalar_select %p1759, %s38, 6
      %s1761 = smul.addr %s1760, 2
      %s1762 = scalar_lea.vmem %s21, %s1761
      // Predicated region
      $region105: #{_seq2seq_forward.3} parent=99 // pred_check
        %p1763 = pneg %p476
      $region106: #{_seq2seq_forward.3} parent=99 // pred_check_branch
        %1765 = sbr.rel (%p1763) target = $region108
      $region107: #{_seq2seq_forward.3} parent=99 // pred_region
        _
      $region108: #{_seq2seq_forward.3} parent=99 // pred_fallthru
        _
    $region100: #{_seq2seq_forward.3} parent=5 // pred_fallthru
      _
    %p1766 = scmp.le.s32.totalorder 2, %s33
    // Predicated region
    $region109: #{_seq2seq_forward.3} parent=5 // pred_check
      %p1767 = pneg %p1766
    $region110: #{_seq2seq_forward.3} parent=5 // pred_check_branch
      %1769 = sbr.rel (%p1767) target = $region112
    $region111: #{_seq2seq_forward.3} parent=5 // pred_region
      %s1770 = ssub.s32 %s33, 2
      // Predicated region
      $region113: #{_seq2seq_forward.3} parent=111 // pred_check
        %p1771 = pneg %p482
      $region114: #{_seq2seq_forward.3} parent=111 // pred_check_branch
        %1773 = sbr.rel (%p1771) target = $region116
      $region115: #{_seq2seq_forward.3} parent=111 // pred_region
        %p1774 = scmp.lt.s32.totalorder %s39, 6
        %s1775 = scalar_select %p1774, %s39, 6
        %s1776 = smul.addr %s1775, 2
        %s1777 = scalar_lea.vmem %s21, %s1776
      $region116: #{_seq2seq_forward.3} parent=111 // pred_fallthru
        _
    $region112: #{_seq2seq_forward.3} parent=5 // pred_fallthru
      _
  $region6: #{_seq2seq_forward.3} parent=0 // loop_footer
    %s37 = sadd.s32 1, %s33
  $region7: #{_seq2seq_forward.3} parent=0 // loop_footer_branch
    %32 = sbr.rel target = $region3
  $region8: #{_seq2seq_forward.3} parent=0 // loop_exit
    _

// kernel: _seq2seq_forward.2
$region0: #{_seq2seq_forward.2}
  #allocation0 [shape = 'u32[]', space=smem, size = 0x4, offset = 0x4, fixed_abs, tag = 'smem constant byte address 0x4 - core index']
  #allocation1 [shape = 'u32[144,128]{1,0:T(1,128)}', space=vmem, size = 0x12000, scoped, tag = 'internal scratch']
  %s0 = inlined_call_operand.vmem [shape: f32[16,16], index: 0, kind: input, shape index: {}]
  %s1 = inlined_call_operand.vmem [shape: f32[16,96], index: 1, kind: input, shape index: {}]
  %s2 = inlined_call_operand.vmem [shape: f32[1,96], index: 2, kind: input, shape index: {}]
  %s3 = inlined_call_operand.vmem [shape: f32[16,96], index: 3, kind: input, shape index: {}]
  %s4 = inlined_call_operand.vmem [shape: f32[1,96], index: 4, kind: input, shape index: {}]
  %s5 = inlined_call_operand.vmem [shape: f32[32,96], index: 5, kind: input, shape index: {}]
  %s6 = inlined_call_operand.vmem [shape: f32[1,96], index: 6, kind: input, shape index: {}]
  %s7 = inlined_call_operand.vmem [shape: f32[32,96], index: 7, kind: input, shape index: {}]
  %s8 = inlined_call_operand.vmem [shape: f32[1,96], index: 8, kind: input, shape index: {}]
  %s9 = inlined_call_operand.vmem [shape: f32[32,32], index: 9, kind: input, shape index: {}]
  %s10 = inlined_call_operand.vmem [shape: f32[32,32], index: 10, kind: input, shape index: {}]
  %s11 = inlined_call_operand.vmem [shape: f32[1,32], index: 11, kind: input, shape index: {}]
  %s12 = inlined_call_operand.vmem [shape: f32[32,32], index: 12, kind: input, shape index: {}]
  %s13 = inlined_call_operand.vmem [shape: f32[32,32], index: 13, kind: input, shape index: {}]
  %s14 = inlined_call_operand.vmem [shape: f32[16,32], index: 14, kind: output, shape index: {0}]
  %s15 = inlined_call_operand.vmem [shape: f32[16,32], index: 15, kind: output, shape index: {1}]
  %s16 = inlined_call_operand.vmem [shape: f32[16,32], index: 16, kind: output, shape index: {2}]
  %s17 = inlined_call_operand.vmem [shape: f32[2,32], index: 17, kind: output, shape index: {3}]
  %18 = xla_tuple %s14, %s15, %s16, %s17
  %s19 = sld [smem:[#allocation0]]
  $region90: #{_seq2seq_forward.2} parent=0
    _
  %s21 = ssub.s32 1, %s19
  %s22 = scalar_select 0, %s21, %s19
  // Predicated region
  $region2: #{_seq2seq_forward.2} parent=0 // pred_check
    _
  $region3: #{_seq2seq_forward.2} parent=0 // pred_check_branch
    %24 = sbr.rel (0) target = $region5
  $region4: #{_seq2seq_forward.2} parent=0 // pred_region
    _
  $region5: #{_seq2seq_forward.2} parent=0 // pred_fallthru
    _
  // Predicated region
  $region6: #{_seq2seq_forward.2} parent=0 // pred_check
    _
  $region7: #{_seq2seq_forward.2} parent=0 // pred_check_branch
    %26 = sbr.rel (0) target = $region9
  $region8: #{_seq2seq_forward.2} parent=0 // pred_region
    _
  $region9: #{_seq2seq_forward.2} parent=0 // pred_fallthru
    _
  // Predicated region
  $region10: #{_seq2seq_forward.2} parent=0 // pred_check
    _
  $region11: #{_seq2seq_forward.2} parent=0 // pred_check_branch
    %28 = sbr.rel (0) target = $region13
  $region12: #{_seq2seq_forward.2} parent=0 // pred_region
    _
  $region13: #{_seq2seq_forward.2} parent=0 // pred_fallthru
    _
  // Predicated region
  $region14: #{_seq2seq_forward.2} parent=0 // pred_check
    _
  $region15: #{_seq2seq_forward.2} parent=0 // pred_check_branch
    %30 = sbr.rel (0) target = $region17
  $region16: #{_seq2seq_forward.2} parent=0 // pred_region
    _
  $region17: #{_seq2seq_forward.2} parent=0 // pred_fallthru
    _
  // Predicated region
  $region18: #{_seq2seq_forward.2} parent=0 // pred_check
    _
  $region19: #{_seq2seq_forward.2} parent=0 // pred_check_branch
    %32 = sbr.rel (0) target = $region21
  $region20: #{_seq2seq_forward.2} parent=0 // pred_region
    _
  $region21: #{_seq2seq_forward.2} parent=0 // pred_fallthru
    _
  // Predicated region
  $region22: #{_seq2seq_forward.2} parent=0 // pred_check
    _
  $region23: #{_seq2seq_forward.2} parent=0 // pred_check_branch
    %34 = sbr.rel (0) target = $region25
  $region24: #{_seq2seq_forward.2} parent=0 // pred_region
    _
  $region25: #{_seq2seq_forward.2} parent=0 // pred_fallthru
    _
  // Predicated region
  $region26: #{_seq2seq_forward.2} parent=0 // pred_check
    _
  $region27: #{_seq2seq_forward.2} parent=0 // pred_check_branch
    %36 = sbr.rel (0) target = $region29
  $region28: #{_seq2seq_forward.2} parent=0 // pred_region
    _
  $region29: #{_seq2seq_forward.2} parent=0 // pred_fallthru
    _
  // Predicated region
  $region30: #{_seq2seq_forward.2} parent=0 // pred_check
    _
  $region31: #{_seq2seq_forward.2} parent=0 // pred_check_branch
    %38 = sbr.rel (0) target = $region33
  $region32: #{_seq2seq_forward.2} parent=0 // pred_region
    _
  $region33: #{_seq2seq_forward.2} parent=0 // pred_fallthru
    _
  // Predicated region
  $region34: #{_seq2seq_forward.2} parent=0 // pred_check
    _
  $region35: #{_seq2seq_forward.2} parent=0 // pred_check_branch
    %40 = sbr.rel (0) target = $region37
  $region36: #{_seq2seq_forward.2} parent=0 // pred_region
    _
  $region37: #{_seq2seq_forward.2} parent=0 // pred_fallthru
    _
  // Predicated region
  $region38: #{_seq2seq_forward.2} parent=0 // pred_check
    _
  $region39: #{_seq2seq_forward.2} parent=0 // pred_check_branch
    %42 = sbr.rel (0) target = $region41
  $region40: #{_seq2seq_forward.2} parent=0 // pred_region
    _
  $region41: #{_seq2seq_forward.2} parent=0 // pred_fallthru
    _
  // Predicated region
  $region42: #{_seq2seq_forward.2} parent=0 // pred_check
    _
  $region43: #{_seq2seq_forward.2} parent=0 // pred_check_branch
    %44 = sbr.rel (0) target = $region45
  $region44: #{_seq2seq_forward.2} parent=0 // pred_region
    _
  $region45: #{_seq2seq_forward.2} parent=0 // pred_fallthru
    _
  // Predicated region
  $region46: #{_seq2seq_forward.2} parent=0 // pred_check
    _
  $region47: #{_seq2seq_forward.2} parent=0 // pred_check_branch
    %46 = sbr.rel (0) target = $region49
  $region48: #{_seq2seq_forward.2} parent=0 // pred_region
    _
  $region49: #{_seq2seq_forward.2} parent=0 // pred_fallthru
    _
  // Predicated region
  $region50: #{_seq2seq_forward.2} parent=0 // pred_check
    _
  $region51: #{_seq2seq_forward.2} parent=0 // pred_check_branch
    %48 = sbr.rel (0) target = $region53
  $region52: #{_seq2seq_forward.2} parent=0 // pred_region
    _
  $region53: #{_seq2seq_forward.2} parent=0 // pred_fallthru
    _
  // Predicated region
  $region54: #{_seq2seq_forward.2} parent=0 // pred_check
    _
  $region55: #{_seq2seq_forward.2} parent=0 // pred_check_branch
    %50 = sbr.rel (0) target = $region57
  $region56: #{_seq2seq_forward.2} parent=0 // pred_region
    _
  $region57: #{_seq2seq_forward.2} parent=0 // pred_fallthru
    _
  %v51 = vld [vmem:[%s0] sm:$0xff]
  %v52 = vld [vmem:[%s0 + $0x8] sm:$0xff]
  %v53 = vld [vmem:[%s1] sm:$0xff]
  %v54 = vld [vmem:[%s1 + $0x8] sm:$0xff]
  %v55 = vld [vmem:[%s2] sm:$0x1]
  %v57 = vlaneseq
  %v58 = vshrl.u32 %v57, 7
  %v59 = vsub.s32 0, %v58
  %v60 = vrot.slane %v55, %v59
  %vm62 = vcmask 130048
  %v64 = vsel %vm62, %v51, 0
  %v67 = vsel %vm62, %v52, 0
  %69 = vmatprep.subr.mxu0 0.0
  %70 = vmatpush1.msra.mxu0 %v53
  %71 = vmatprep.subr.mxu0 0.0
  %72 = vmatpush1.msra.mxu0 %v54
  %73 = vmatprep.subr.mxu0 0.0
  %74 = vmatpush1.msra.mxu0 0.0
  %75 = vmatprep.subr.mxu0 0.0
  %76 = vmatpush1.msra.mxu0 0.0
  %77 = vmatprep.subr.mxu0 0.0
  %78 = vmatpush1.msra.mxu0 0.0
  %79 = vmatprep.subr.mxu0 0.0
  %80 = vmatpush1.msra.mxu0 0.0
  %81 = vmatprep.subr.mxu0 0.0
  %82 = vmatpush1.msra.mxu0 0.0
  %83 = vmatprep.subr.mxu0 0.0
  %84 = vmatpush1.msra.mxu0 0.0
  %85 = vmatprep.subr.mxu0 0.0
  %86 = vmatpush1.msra.mxu0 0.0
  %87 = vmatprep.subr.mxu0 0.0
  %88 = vmatpush1.msra.mxu0 0.0
  %89 = vmatprep.subr.mxu0 0.0
  %90 = vmatpush1.msra.mxu0 0.0
  %91 = vmatprep.subr.mxu0 0.0
  %92 = vmatpush1.msra.mxu0 0.0
  %93 = vmatprep.subr.mxu0 0.0
  %94 = vmatpush1.msra.mxu0 0.0
  %95 = vmatprep.subr.mxu0 0.0
  %96 = vmatpush1.msra.mxu0 0.0
  %97 = vmatprep.subr.mxu0 0.0
  %98 = vmatpush1.msra.mxu0 0.0
  %99 = vmatprep.subr.mxu0 0.0
  %100 = vmatpush1.msra.mxu0 0.0
  %101 = vmatprep.subr.mxu0 0.0
  %102 = vmatpush1.msra.mxu0 0.0
  %103 = vmatprep.subr.mxu0 0.0
  %104 = vmatpush1.msra.mxu0 0.0
  %105 = vmatprep.subr.mxu0 0.0
  %106 = vmatpush1.msra.mxu0 0.0
  %107 = vmatprep.subr.mxu0 0.0
  %108 = vmatpush1.msra.mxu0 0.0
  %109 = vmatprep.subr.mxu0 0.0
  %110 = vmatpush1.msra.mxu0 0.0
  %111 = vmatprep.subr.mxu0 0.0
  %112 = vmatpush1.msra.mxu0 0.0
  %113 = vmatprep.subr.mxu0 0.0
  %114 = vmatpush1.msra.mxu0 0.0
  %115 = vmatprep.subr.mxu0 0.0
  %116 = vmatpush1.msra.mxu0 0.0
  %117 = vmatprep.subr.mxu0 0.0
  %118 = vmatpush1.msra.mxu0 0.0
  %119 = vmatprep.subr.mxu0 0.0
  %120 = vmatpush1.msra.mxu0 0.0
  %121 = vmatprep.subr.mxu0 0.0
  %122 = vmatpush1.msra.mxu0 0.0
  %123 = vmatprep.subr.mxu0 0.0
  %124 = vmatpush1.msra.mxu0 0.0
  %125 = vmatprep.subr.mxu0 0.0
  %126 = vmatpush1.msra.mxu0 0.0
  %127 = vmatprep.subr.mxu0 0.0
  %128 = vmatpush1.msra.mxu0 0.0
  %129 = vmatprep.subr.mxu0 0.0
  %130 = vmatpush1.msra.mxu0 0.0
  %131 = vmatprep.subr.mxu0 0.0
  %132 = vmatpush1.msra.mxu0 0.0
  %133 = vmatprep.mubr.f32.mxu0 0.0
  %134 = vmatmul.mubr.f32.gmra.mrb[0].mxu0 %v64
  %v135 = vpop.f32.mrb[0].mxu0
  %v136 = vadd.f32 %v60, %v135
  %v137 = vpop.f32.mrb[0].mxu0
  %138 = vmatprep.mubr.f32.mxu0 0.0
  %139 = vmatmul.mubr.f32.gmra.mrb[0].mxu0 %v67
  %v140 = vpop.f32.mrb[0].mxu0
  %v141 = vadd.f32 %v60, %v140
  %v142 = vpop.f32.mrb[0].mxu0
  %143 = vdwg.mxu0
  %v144 = vld [vmem:[%s3] sm:$0xff]
  %v145 = vld [vmem:[%s3 + $0x8] sm:$0xff]
  %v146 = vld [vmem:[%s4] sm:$0x1]
  %v148 = vlaneseq
  %v149 = vshrl.u32 %v148, 7
  %v150 = vsub.s32 0, %v149
  %v151 = vrot.slane %v146, %v150
  %153 = vmatprep.subr.mxu0 0.0
  %154 = vmatpush1.msra.mxu0 %v144
  %155 = vmatprep.subr.mxu0 0.0
  %156 = vmatpush1.msra.mxu0 %v145
  %157 = vmatprep.subr.mxu0 0.0
  %158 = vmatpush1.msra.mxu0 0.0
  %159 = vmatprep.subr.mxu0 0.0
  %160 = vmatpush1.msra.mxu0 0.0
  %161 = vmatprep.subr.mxu0 0.0
  %162 = vmatpush1.msra.mxu0 0.0
  %163 = vmatprep.subr.mxu0 0.0
  %164 = vmatpush1.msra.mxu0 0.0
  %165 = vmatprep.subr.mxu0 0.0
  %166 = vmatpush1.msra.mxu0 0.0
  %167 = vmatprep.subr.mxu0 0.0
  %168 = vmatpush1.msra.mxu0 0.0
  %169 = vmatprep.subr.mxu0 0.0
  %170 = vmatpush1.msra.mxu0 0.0
  %171 = vmatprep.subr.mxu0 0.0
  %172 = vmatpush1.msra.mxu0 0.0
  %173 = vmatprep.subr.mxu0 0.0
  %174 = vmatpush1.msra.mxu0 0.0
  %175 = vmatprep.subr.mxu0 0.0
  %176 = vmatpush1.msra.mxu0 0.0
  %177 = vmatprep.subr.mxu0 0.0
  %178 = vmatpush1.msra.mxu0 0.0
  %179 = vmatprep.subr.mxu0 0.0
  %180 = vmatpush1.msra.mxu0 0.0
  %181 = vmatprep.subr.mxu0 0.0
  %182 = vmatpush1.msra.mxu0 0.0
  %183 = vmatprep.subr.mxu0 0.0
  %184 = vmatpush1.msra.mxu0 0.0
  %185 = vmatprep.subr.mxu0 0.0
  %186 = vmatpush1.msra.mxu0 0.0
  %187 = vmatprep.subr.mxu0 0.0
  %188 = vmatpush1.msra.mxu0 0.0
  %189 = vmatprep.subr.mxu0 0.0
  %190 = vmatpush1.msra.mxu0 0.0
  %191 = vmatprep.subr.mxu0 0.0
  %192 = vmatpush1.msra.mxu0 0.0
  %193 = vmatprep.subr.mxu0 0.0
  %194 = vmatpush1.msra.mxu0 0.0
  %195 = vmatprep.subr.mxu0 0.0
  %196 = vmatpush1.msra.mxu0 0.0
  %197 = vmatprep.subr.mxu0 0.0
  %198 = vmatpush1.msra.mxu0 0.0
  %199 = vmatprep.subr.mxu0 0.0
  %200 = vmatpush1.msra.mxu0 0.0
  %201 = vmatprep.subr.mxu0 0.0
  %202 = vmatpush1.msra.mxu0 0.0
  %203 = vmatprep.subr.mxu0 0.0
  %204 = vmatpush1.msra.mxu0 0.0
  %205 = vmatprep.subr.mxu0 0.0
  %206 = vmatpush1.msra.mxu0 0.0
  %207 = vmatprep.subr.mxu0 0.0
  %208 = vmatpush1.msra.mxu0 0.0
  %209 = vmatprep.subr.mxu0 0.0
  %210 = vmatpush1.msra.mxu0 0.0
  %211 = vmatprep.subr.mxu0 0.0
  %212 = vmatpush1.msra.mxu0 0.0
  %213 = vmatprep.subr.mxu0 0.0
  %214 = vmatpush1.msra.mxu0 0.0
  %215 = vmatprep.subr.mxu0 0.0
  %216 = vmatpush1.msra.mxu0 0.0
  %217 = vmatprep.mubr.f32.mxu0 0.0
  %218 = vmatmul.mubr.f32.gmra.mrb[0].mxu0 %v64
  %v219 = vpop.f32.mrb[0].mxu0
  %v220 = vadd.f32 %v151, %v219
  %v221 = vpop.f32.mrb[0].mxu0
  %222 = vmatprep.mubr.f32.mxu0 0.0
  %223 = vmatmul.mubr.f32.gmra.mrb[0].mxu0 %v67
  %v224 = vpop.f32.mrb[0].mxu0
  %v225 = vadd.f32 %v151, %v224
  %v226 = vpop.f32.mrb[0].mxu0
  %227 = vdwg.mxu0
  %v228 = vld [vmem:[%s5] sm:$0xff]
  %v229 = vld [vmem:[%s5 + $0x8] sm:$0xff]
  %v230 = vld [vmem:[%s5 + $0x10] sm:$0xff]
  %v231 = vld [vmem:[%s5 + $0x18] sm:$0xff]
  %v232 = vld [vmem:[%s6] sm:$0x1]
  %v233 = vld [vmem:[%s7] sm:$0xff]
  %v234 = vld [vmem:[%s7 + $0x8] sm:$0xff]
  %v235 = vld [vmem:[%s7 + $0x10] sm:$0xff]
  %v236 = vld [vmem:[%s7 + $0x18] sm:$0xff]
  %v237 = vld [vmem:[%s8] sm:$0x1]
  %v239 = vlaneseq
  %v240 = vshrl.u32 %v239, 7
  %v241 = vsub.s32 0, %v240
  %v242 = vrot.slane %v232, %v241
  %vm244 = vcmask 261120
  %v246 = vsel %vm244, 0.0, 0
  %248 = vmatprep.subr.mxu0 0.0
  %249 = vmatpush1.msra.mxu0 %v228
  %250 = vmatprep.subr.mxu0 0.0
  %251 = vmatpush1.msra.mxu0 %v229
  %252 = vmatprep.subr.mxu0 0.0
  %253 = vmatpush1.msra.mxu0 %v230
  %254 = vmatprep.subr.mxu0 0.0
  %255 = vmatpush1.msra.mxu0 %v231
  %256 = vmatprep.subr.mxu0 0.0
  %257 = vmatpush1.msra.mxu0 0.0
  %258 = vmatprep.subr.mxu0 0.0
  %259 = vmatpush1.msra.mxu0 0.0
  %260 = vmatprep.subr.mxu0 0.0
  %261 = vmatpush1.msra.mxu0 0.0
  %262 = vmatprep.subr.mxu0 0.0
  %263 = vmatpush1.msra.mxu0 0.0
  %264 = vmatprep.subr.mxu0 0.0
  %265 = vmatpush1.msra.mxu0 0.0
  %266 = vmatprep.subr.mxu0 0.0
  %267 = vmatpush1.msra.mxu0 0.0
  %268 = vmatprep.subr.mxu0 0.0
  %269 = vmatpush1.msra.mxu0 0.0
  %270 = vmatprep.subr.mxu0 0.0
  %271 = vmatpush1.msra.mxu0 0.0
  %272 = vmatprep.subr.mxu0 0.0
  %273 = vmatpush1.msra.mxu0 0.0
  %274 = vmatprep.subr.mxu0 0.0
  %275 = vmatpush1.msra.mxu0 0.0
  %276 = vmatprep.subr.mxu0 0.0
  %277 = vmatpush1.msra.mxu0 0.0
  %278 = vmatprep.subr.mxu0 0.0
  %279 = vmatpush1.msra.mxu0 0.0
  %280 = vmatprep.subr.mxu0 0.0
  %281 = vmatpush1.msra.mxu0 0.0
  %282 = vmatprep.subr.mxu0 0.0
  %283 = vmatpush1.msra.mxu0 0.0
  %284 = vmatprep.subr.mxu0 0.0
  %285 = vmatpush1.msra.mxu0 0.0
  %286 = vmatprep.subr.mxu0 0.0
  %287 = vmatpush1.msra.mxu0 0.0
  %288 = vmatprep.subr.mxu0 0.0
  %289 = vmatpush1.msra.mxu0 0.0
  %290 = vmatprep.subr.mxu0 0.0
  %291 = vmatpush1.msra.mxu0 0.0
  %292 = vmatprep.subr.mxu0 0.0
  %293 = vmatpush1.msra.mxu0 0.0
  %294 = vmatprep.subr.mxu0 0.0
  %295 = vmatpush1.msra.mxu0 0.0
  %296 = vmatprep.subr.mxu0 0.0
  %297 = vmatpush1.msra.mxu0 0.0
  %298 = vmatprep.subr.mxu0 0.0
  %299 = vmatpush1.msra.mxu0 0.0
  %300 = vmatprep.subr.mxu0 0.0
  %301 = vmatpush1.msra.mxu0 0.0
  %302 = vmatprep.subr.mxu0 0.0
  %303 = vmatpush1.msra.mxu0 0.0
  %304 = vmatprep.subr.mxu0 0.0
  %305 = vmatpush1.msra.mxu0 0.0
  %306 = vmatprep.subr.mxu0 0.0
  %307 = vmatpush1.msra.mxu0 0.0
  %308 = vmatprep.subr.mxu0 0.0
  %309 = vmatpush1.msra.mxu0 0.0
  %310 = vmatprep.subr.mxu0 0.0
  %311 = vmatpush1.msra.mxu0 0.0
  %312 = vmatprep.mubr.f32.mxu0 0.0
  %313 = vmatmul.mubr.f32.gmra.mrb[0].mxu0 %v246
  %v314 = vpop.f32.mrb[0].mxu0
  %v315 = vadd.f32 %v242, %v314
  %v316 = vpop.f32.mrb[0].mxu0
  %317 = vdwg.mxu0
  %v318 = vadd.f32 %v136, %v315
  %v319 = vxor.u32 %v318, 2147483648
  %v320 = vmul.f32 %v319, 1.442695
  %v321 = vpow.pop %v320
  %v322 = vadd.f32 %v321, 1.0
  %v323 = vrcp.pop %v322
  %v324 = vmul.f32 1.0, %v323
  %326 = vrot.lane.b32.xlu0 %v315, 64
  %v327 = vpop.permute.xlu0 %326
  %v329 = vmul.f32 %v324, %v327
  %331 = vrot.lane.b32.xlu0 %v329, 64
  %v332 = vpop.permute.xlu0 %331
  %v334 = vadd.f32 %v136, %v332
  %v335 = vtanh.pop %v334
  %v336 = vsub.f32 1.0, %v324
  %338 = vrot.lane.b32.xlu0 %v335, 96
  %v339 = vpop.permute.xlu0 %338
  %v341 = vmul.f32 %v336, %v339
  %v342 = vmul.f32 %v324, 0.0
  %v343 = vadd.f32 %v341, %v342
  %345 = vrot.lane.b32.xlu0 %v343, 96
  %v346 = vpop.permute.xlu0 %345
  %vm348 = vcmask 254976
  %349 = vst.msk [vmem:[%s14] sm:$0x3] %vm348, %v346
  %v350 = vsel %vm244, %v346, 0
  %352 = vmatprep.subr.mxu0 0.0
  %353 = vmatpush1.msra.mxu0 %v228
  %354 = vmatprep.subr.mxu0 0.0
  %355 = vmatpush1.msra.mxu0 %v229
  %356 = vmatprep.subr.mxu0 0.0
  %357 = vmatpush1.msra.mxu0 %v230
  %358 = vmatprep.subr.mxu0 0.0
  %359 = vmatpush1.msra.mxu0 %v231
  %360 = vmatprep.subr.mxu0 0.0
  %361 = vmatpush1.msra.mxu0 0.0
  %362 = vmatprep.subr.mxu0 0.0
  %363 = vmatpush1.msra.mxu0 0.0
  %364 = vmatprep.subr.mxu0 0.0
  %365 = vmatpush1.msra.mxu0 0.0
  %366 = vmatprep.subr.mxu0 0.0
  %367 = vmatpush1.msra.mxu0 0.0
  %368 = vmatprep.subr.mxu0 0.0
  %369 = vmatpush1.msra.mxu0 0.0
  %370 = vmatprep.subr.mxu0 0.0
  %371 = vmatpush1.msra.mxu0 0.0
  %372 = vmatprep.subr.mxu0 0.0
  %373 = vmatpush1.msra.mxu0 0.0
  %374 = vmatprep.subr.mxu0 0.0
  %375 = vmatpush1.msra.mxu0 0.0
  %376 = vmatprep.subr.mxu0 0.0
  %377 = vmatpush1.msra.mxu0 0.0
  %378 = vmatprep.subr.mxu0 0.0
  %379 = vmatpush1.msra.mxu0 0.0
  %380 = vmatprep.subr.mxu0 0.0
  %381 = vmatpush1.msra.mxu0 0.0
  %382 = vmatprep.subr.mxu0 0.0
  %383 = vmatpush1.msra.mxu0 0.0
  %384 = vmatprep.subr.mxu0 0.0
  %385 = vmatpush1.msra.mxu0 0.0
  %386 = vmatprep.subr.mxu0 0.0
  %387 = vmatpush1.msra.mxu0 0.0
  %388 = vmatprep.subr.mxu0 0.0
  %389 = vmatpush1.msra.mxu0 0.0
  %390 = vmatprep.subr.mxu0 0.0
  %391 = vmatpush1.msra.mxu0 0.0
  %392 = vmatprep.subr.mxu0 0.0
  %393 = vmatpush1.msra.mxu0 0.0
  %394 = vmatprep.subr.mxu0 0.0
  %395 = vmatpush1.msra.mxu0 0.0
  %396 = vmatprep.subr.mxu0 0.0
  %397 = vmatpush1.msra.mxu0 0.0
  %398 = vmatprep.subr.mxu0 0.0
  %399 = vmatpush1.msra.mxu0 0.0
  %400 = vmatprep.subr.mxu0 0.0
  %401 = vmatpush1.msra.mxu0 0.0
  %402 = vmatprep.subr.mxu0 0.0
  %403 = vmatpush1.msra.mxu0 0.0
  %404 = vmatprep.subr.mxu0 0.0
  %405 = vmatpush1.msra.mxu0 0.0
  %406 = vmatprep.subr.mxu0 0.0
  %407 = vmatpush1.msra.mxu0 0.0
  %408 = vmatprep.subr.mxu0 0.0
  %409 = vmatpush1.msra.mxu0 0.0
  %410 = vmatprep.subr.mxu0 0.0
  %411 = vmatpush1.msra.mxu0 0.0
  %412 = vmatprep.subr.mxu0 0.0
  %413 = vmatpush1.msra.mxu0 0.0
  %414 = vmatprep.subr.mxu0 0.0
  %415 = vmatpush1.msra.mxu0 0.0
  %416 = vmatprep.mubr.f32.mxu0 0.0
  %417 = vmatmul.mubr.f32.gmra.mrb[0].mxu0 %v350
  %v418 = vpop.f32.mrb[0].mxu0
  %v419 = vadd.f32 %v242, %v418
  %v420 = vpop.f32.mrb[0].mxu0
  %421 = vdwg.mxu0
  %v423 = vrot.slane %v419, 6
  %v425 = vadd.f32 %v136, %v423
  %v426 = vxor.u32 %v425, 2147483648
  %v427 = vmul.f32 %v426, 1.442695
  %v428 = vpow.pop %v427
  %v429 = vadd.f32 %v428, 1.0
  %v430 = vrcp.pop %v429
  %v431 = vmul.f32 1.0, %v430
  %432 = vrot.lane.b32.xlu0 %v423, 64
  %v433 = vpop.permute.xlu0 %432
  %v435 = vmul.f32 %v431, %v433
  %437 = vrot.lane.b32.xlu0 %v435, 64
  %v438 = vpop.permute.xlu0 %437
  %v440 = vadd.f32 %v136, %v438
  %v441 = vtanh.pop %v440
  %v442 = vsub.f32 1.0, %v431
  %444 = vrot.lane.b32.xlu0 %v441, 96
  %v445 = vpop.permute.xlu0 %444
  %v447 = vmul.f32 %v442, %v445
  %v448 = vrot.slane %v343, 6
  %v450 = vmul.f32 %v431, %v448
  %v451 = vadd.f32 %v447, %v450
  %453 = vrot.lane.b32.xlu0 %v451, 96
  %v454 = vpop.permute.xlu0 %453
  %vm456 = vcmask 257026
  %457 = vst.msk [vmem:[%s14] sm:$0xc] %vm456, %v454
  %v458 = vrot.slane %v451, 2
  %459 = vrot.lane.b32.xlu0 %v458, 96
  %v460 = vpop.permute.xlu0 %459
  %v461 = vsel %vm244, %v460, 0
  %463 = vmatprep.subr.mxu0 0.0
  %464 = vmatpush1.msra.mxu0 %v228
  %465 = vmatprep.subr.mxu0 0.0
  %466 = vmatpush1.msra.mxu0 %v229
  %467 = vmatprep.subr.mxu0 0.0
  %468 = vmatpush1.msra.mxu0 %v230
  %469 = vmatprep.subr.mxu0 0.0
  %470 = vmatpush1.msra.mxu0 %v231
  %471 = vmatprep.subr.mxu0 0.0
  %472 = vmatpush1.msra.mxu0 0.0
  %473 = vmatprep.subr.mxu0 0.0
  %474 = vmatpush1.msra.mxu0 0.0
  %475 = vmatprep.subr.mxu0 0.0
  %476 = vmatpush1.msra.mxu0 0.0
  %477 = vmatprep.subr.mxu0 0.0
  %478 = vmatpush1.msra.mxu0 0.0
  %479 = vmatprep.subr.mxu0 0.0
  %480 = vmatpush1.msra.mxu0 0.0
  %481 = vmatprep.subr.mxu0 0.0
  %482 = vmatpush1.msra.mxu0 0.0
  %483 = vmatprep.subr.mxu0 0.0
  %484 = vmatpush1.msra.mxu0 0.0
  %485 = vmatprep.subr.mxu0 0.0
  %486 = vmatpush1.msra.mxu0 0.0
  %487 = vmatprep.subr.mxu0 0.0
  %488 = vmatpush1.msra.mxu0 0.0
  %489 = vmatprep.subr.mxu0 0.0
  %490 = vmatpush1.msra.mxu0 0.0
  %491 = vmatprep.subr.mxu0 0.0
  %492 = vmatpush1.msra.mxu0 0.0
  %493 = vmatprep.subr.mxu0 0.0
  %494 = vmatpush1.msra.mxu0 0.0
  %495 = vmatprep.subr.mxu0 0.0
  %496 = vmatpush1.msra.mxu0 0.0
  %497 = vmatprep.subr.mxu0 0.0
  %498 = vmatpush1.msra.mxu0 0.0
  %499 = vmatprep.subr.mxu0 0.0
  %500 = vmatpush1.msra.mxu0 0.0
  %501 = vmatprep.subr.mxu0 0.0
  %502 = vmatpush1.msra.mxu0 0.0
  %503 = vmatprep.subr.mxu0 0.0
  %504 = vmatpush1.msra.mxu0 0.0
  %505 = vmatprep.subr.mxu0 0.0
  %506 = vmatpush1.msra.mxu0 0.0
  %507 = vmatprep.subr.mxu0 0.0
  %508 = vmatpush1.msra.mxu0 0.0
  %509 = vmatprep.subr.mxu0 0.0
  %510 = vmatpush1.msra.mxu0 0.0
  %511 = vmatprep.subr.mxu0 0.0
  %512 = vmatpush1.msra.mxu0 0.0
  %513 = vmatprep.subr.mxu0 0.0
  %514 = vmatpush1.msra.mxu0 0.0
  %515 = vmatprep.subr.mxu0 0.0
  %516 = vmatpush1.msra.mxu0 0.0
  %517 = vmatprep.subr.mxu0 0.0
  %518 = vmatpush1.msra.mxu0 0.0
  %519 = vmatprep.subr.mxu0 0.0
  %520 = vmatpush1.msra.mxu0 0.0
  %521 = vmatprep.subr.mxu0 0.0
  %522 = vmatpush1.msra.mxu0 0.0
  %523 = vmatprep.subr.mxu0 0.0
  %524 = vmatpush1.msra.mxu0 0.0
  %525 = vmatprep.subr.mxu0 0.0
  %526 = vmatpush1.msra.mxu0 0.0
  %527 = vmatprep.mubr.f32.mxu0 0.0
  %528 = vmatmul.mubr.f32.gmra.mrb[0].mxu0 %v461
  %v529 = vpop.f32.mrb[0].mxu0
  %v530 = vadd.f32 %v242, %v529
  %v531 = vpop.f32.mrb[0].mxu0
  %532 = vdwg.mxu0
  %v534 = vrot.slane %v530, 4
  %v536 = vadd.f32 %v136, %v534
  %v537 = vxor.u32 %v536, 2147483648
  %v538 = vmul.f32 %v537, 1.442695
  %v539 = vpow.pop %v538
  %v540 = vadd.f32 %v539, 1.0
  %v541 = vrcp.pop %v540
  %v542 = vmul.f32 1.0, %v541
  %543 = vrot.lane.b32.xlu0 %v534, 64
  %v544 = vpop.permute.xlu0 %543
  %v546 = vmul.f32 %v542, %v544
  %548 = vrot.lane.b32.xlu0 %v546, 64
  %v549 = vpop.permute.xlu0 %548
  %v551 = vadd.f32 %v136, %v549
  %v552 = vtanh.pop %v551
  %v553 = vsub.f32 1.0, %v542
  %555 = vrot.lane.b32.xlu0 %v552, 96
  %v556 = vpop.permute.xlu0 %555
  %v558 = vmul.f32 %v553, %v556
  %v559 = vrot.slane %v451, 6
  %v561 = vmul.f32 %v542, %v559
  %v562 = vadd.f32 %v558, %v561
  %564 = vrot.lane.b32.xlu0 %v562, 96
  %v565 = vpop.permute.xlu0 %564
  %vm567 = vcmask 259076
  %568 = vst.msk [vmem:[%s14] sm:$0x30] %vm567, %v565
  %v569 = vrot.slane %v562, 4
  %570 = vrot.lane.b32.xlu0 %v569, 96
  %v571 = vpop.permute.xlu0 %570
  %v572 = vsel %vm244, %v571, 0
  %574 = vmatprep.subr.mxu0 0.0
  %575 = vmatpush1.msra.mxu0 %v228
  %576 = vmatprep.subr.mxu0 0.0
  %577 = vmatpush1.msra.mxu0 %v229
  %578 = vmatprep.subr.mxu0 0.0
  %579 = vmatpush1.msra.mxu0 %v230
  %580 = vmatprep.subr.mxu0 0.0
  %581 = vmatpush1.msra.mxu0 %v231
  %582 = vmatprep.subr.mxu0 0.0
  %583 = vmatpush1.msra.mxu0 0.0
  %584 = vmatprep.subr.mxu0 0.0
  %585 = vmatpush1.msra.mxu0 0.0
  %586 = vmatprep.subr.mxu0 0.0
  %587 = vmatpush1.msra.mxu0 0.0
  %588 = vmatprep.subr.mxu0 0.0
  %589 = vmatpush1.msra.mxu0 0.0
  %590 = vmatprep.subr.mxu0 0.0
  %591 = vmatpush1.msra.mxu0 0.0
  %592 = vmatprep.subr.mxu0 0.0
  %593 = vmatpush1.msra.mxu0 0.0
  %594 = vmatprep.subr.mxu0 0.0
  %595 = vmatpush1.msra.mxu0 0.0
  %596 = vmatprep.subr.mxu0 0.0
  %597 = vmatpush1.msra.mxu0 0.0
  %598 = vmatprep.subr.mxu0 0.0
  %599 = vmatpush1.msra.mxu0 0.0
  %600 = vmatprep.subr.mxu0 0.0
  %601 = vmatpush1.msra.mxu0 0.0
  %602 = vmatprep.subr.mxu0 0.0
  %603 = vmatpush1.msra.mxu0 0.0
  %604 = vmatprep.subr.mxu0 0.0
  %605 = vmatpush1.msra.mxu0 0.0
  %606 = vmatprep.subr.mxu0 0.0
  %607 = vmatpush1.msra.mxu0 0.0
  %608 = vmatprep.subr.mxu0 0.0
  %609 = vmatpush1.msra.mxu0 0.0
  %610 = vmatprep.subr.mxu0 0.0
  %611 = vmatpush1.msra.mxu0 0.0
  %612 = vmatprep.subr.mxu0 0.0
  %613 = vmatpush1.msra.mxu0 0.0
  %614 = vmatprep.subr.mxu0 0.0
  %615 = vmatpush1.msra.mxu0 0.0
  %616 = vmatprep.subr.mxu0 0.0
  %617 = vmatpush1.msra.mxu0 0.0
  %618 = vmatprep.subr.mxu0 0.0
  %619 = vmatpush1.msra.mxu0 0.0
  %620 = vmatprep.subr.mxu0 0.0
  %621 = vmatpush1.msra.mxu0 0.0
  %622 = vmatprep.subr.mxu0 0.0
  %623 = vmatpush1.msra.mxu0 0.0
  %624 = vmatprep.subr.mxu0 0.0
  %625 = vmatpush1.msra.mxu0 0.0
  %626 = vmatprep.subr.mxu0 0.0
  %627 = vmatpush1.msra.mxu0 0.0
  %628 = vmatprep.subr.mxu0 0.0
  %629 = vmatpush1.msra.mxu0 0.0
  %630 = vmatprep.subr.mxu0 0.0
  %631 = vmatpush1.msra.mxu0 0.0
  %632 = vmatprep.subr.mxu0 0.0
  %633 = vmatpush1.msra.mxu0 0.0
  %634 = vmatprep.subr.mxu0 0.0
  %635 = vmatpush1.msra.mxu0 0.0
  %636 = vmatprep.subr.mxu0 0.0
  %637 = vmatpush1.msra.mxu0 0.0
  %638 = vmatprep.mubr.f32.mxu0 0.0
  %639 = vmatmul.mubr.f32.gmra.mrb[0].mxu0 %v572
  %v640 = vpop.f32.mrb[0].mxu0
  %v641 = vadd.f32 %v242, %v640
  %v642 = vpop.f32.mrb[0].mxu0
  %643 = vdwg.mxu0
  %v645 = vrot.slane %v641, 2
  %v647 = vadd.f32 %v136, %v645
  %v648 = vxor.u32 %v647, 2147483648
  %v649 = vmul.f32 %v648, 1.442695
  %v650 = vpow.pop %v649
  %v651 = vadd.f32 %v650, 1.0
  %v652 = vrcp.pop %v651
  %v653 = vmul.f32 1.0, %v652
  %654 = vrot.lane.b32.xlu0 %v645, 64
  %v655 = vpop.permute.xlu0 %654
  %v657 = vmul.f32 %v653, %v655
  %659 = vrot.lane.b32.xlu0 %v657, 64
  %v660 = vpop.permute.xlu0 %659
  %v662 = vadd.f32 %v136, %v660
  %v663 = vtanh.pop %v662
  %v664 = vsub.f32 1.0, %v653
  %666 = vrot.lane.b32.xlu0 %v663, 96
  %v667 = vpop.permute.xlu0 %666
  %v669 = vmul.f32 %v664, %v667
  %v670 = vrot.slane %v562, 6
  %v672 = vmul.f32 %v653, %v670
  %v673 = vadd.f32 %v669, %v672
  %675 = vrot.lane.b32.xlu0 %v673, 96
  %v676 = vpop.permute.xlu0 %675
  %vm678 = vcmask 261126
  %679 = vst.msk [vmem:[%s14] sm:$0xc0] %vm678, %v676
  %v680 = vrot.slane %v673, 6
  %681 = vrot.lane.b32.xlu0 %v680, 96
  %v682 = vpop.permute.xlu0 %681
  %v683 = vsel %vm244, %v682, 0
  %685 = vmatprep.subr.mxu0 0.0
  %686 = vmatpush1.msra.mxu0 %v228
  %687 = vmatprep.subr.mxu0 0.0
  %688 = vmatpush1.msra.mxu0 %v229
  %689 = vmatprep.subr.mxu0 0.0
  %690 = vmatpush1.msra.mxu0 %v230
  %691 = vmatprep.subr.mxu0 0.0
  %692 = vmatpush1.msra.mxu0 %v231
  %693 = vmatprep.subr.mxu0 0.0
  %694 = vmatpush1.msra.mxu0 0.0
  %695 = vmatprep.subr.mxu0 0.0
  %696 = vmatpush1.msra.mxu0 0.0
  %697 = vmatprep.subr.mxu0 0.0
  %698 = vmatpush1.msra.mxu0 0.0
  %699 = vmatprep.subr.mxu0 0.0
  %700 = vmatpush1.msra.mxu0 0.0
  %701 = vmatprep.subr.mxu0 0.0
  %702 = vmatpush1.msra.mxu0 0.0
  %703 = vmatprep.subr.mxu0 0.0
  %704 = vmatpush1.msra.mxu0 0.0
  %705 = vmatprep.subr.mxu0 0.0
  %706 = vmatpush1.msra.mxu0 0.0
  %707 = vmatprep.subr.mxu0 0.0
  %708 = vmatpush1.msra.mxu0 0.0
  %709 = vmatprep.subr.mxu0 0.0
  %710 = vmatpush1.msra.mxu0 0.0
  %711 = vmatprep.subr.mxu0 0.0
  %712 = vmatpush1.msra.mxu0 0.0
  %713 = vmatprep.subr.mxu0 0.0
  %714 = vmatpush1.msra.mxu0 0.0
  %715 = vmatprep.subr.mxu0 0.0
  %716 = vmatpush1.msra.mxu0 0.0
  %717 = vmatprep.subr.mxu0 0.0
  %718 = vmatpush1.msra.mxu0 0.0
  %719 = vmatprep.subr.mxu0 0.0
  %720 = vmatpush1.msra.mxu0 0.0
  %721 = vmatprep.subr.mxu0 0.0
  %722 = vmatpush1.msra.mxu0 0.0
  %723 = vmatprep.subr.mxu0 0.0
  %724 = vmatpush1.msra.mxu0 0.0
  %725 = vmatprep.subr.mxu0 0.0
  %726 = vmatpush1.msra.mxu0 0.0
  %727 = vmatprep.subr.mxu0 0.0
  %728 = vmatpush1.msra.mxu0 0.0
  %729 = vmatprep.subr.mxu0 0.0
  %730 = vmatpush1.msra.mxu0 0.0
  %731 = vmatprep.subr.mxu0 0.0
  %732 = vmatpush1.msra.mxu0 0.0
  %733 = vmatprep.subr.mxu0 0.0
  %734 = vmatpush1.msra.mxu0 0.0
  %735 = vmatprep.subr.mxu0 0.0
  %736 = vmatpush1.msra.mxu0 0.0
  %737 = vmatprep.subr.mxu0 0.0
  %738 = vmatpush1.msra.mxu0 0.0
  %739 = vmatprep.subr.mxu0 0.0
  %740 = vmatpush1.msra.mxu0 0.0
  %741 = vmatprep.subr.mxu0 0.0
  %742 = vmatpush1.msra.mxu0 0.0
  %743 = vmatprep.subr.mxu0 0.0
  %744 = vmatpush1.msra.mxu0 0.0
  %745 = vmatprep.subr.mxu0 0.0
  %746 = vmatpush1.msra.mxu0 0.0
  %747 = vmatprep.subr.mxu0 0.0
  %748 = vmatpush1.msra.mxu0 0.0
  %749 = vmatprep.mubr.f32.mxu0 0.0
  %750 = vmatmul.mubr.f32.gmra.mrb[0].mxu0 %v683
  %v751 = vpop.f32.mrb[0].mxu0
  %v752 = vadd.f32 %v242, %v751
  %v753 = vpop.f32.mrb[0].mxu0
  %754 = vdwg.mxu0
  %v755 = vadd.f32 %v141, %v752
  %v756 = vxor.u32 %v755, 2147483648
  %v757 = vmul.f32 %v756, 1.442695
  %v758 = vpow.pop %v757
  %v759 = vadd.f32 %v758, 1.0
  %v760 = vrcp.pop %v759
  %v761 = vmul.f32 1.0, %v760
  %763 = vrot.lane.b32.xlu0 %v752, 64
  %v764 = vpop.permute.xlu0 %763
  %v766 = vmul.f32 %v761, %v764
  %768 = vrot.lane.b32.xlu0 %v766, 64
  %v769 = vpop.permute.xlu0 %768
  %v771 = vadd.f32 %v141, %v769
  %v772 = vtanh.pop %v771
  %v773 = vsub.f32 1.0, %v761
  %775 = vrot.lane.b32.xlu0 %v772, 96
  %v776 = vpop.permute.xlu0 %775
  %v778 = vmul.f32 %v773, %v776
  %v780 = vmul.f32 %v761, %v680
  %v781 = vadd.f32 %v778, %v780
  %783 = vrot.lane.b32.xlu0 %v781, 96
  %v784 = vpop.permute.xlu0 %783
  %786 = vst.msk [vmem:[%s14 + $0x8] sm:$0x3] %vm348, %v784
  %v787 = vsel %vm244, %v784, 0
  %789 = vmatprep.subr.mxu0 0.0
  %790 = vmatpush1.msra.mxu0 %v228
  %791 = vmatprep.subr.mxu0 0.0
  %792 = vmatpush1.msra.mxu0 %v229
  %793 = vmatprep.subr.mxu0 0.0
  %794 = vmatpush1.msra.mxu0 %v230
  %795 = vmatprep.subr.mxu0 0.0
  %796 = vmatpush1.msra.mxu0 %v231
  %797 = vmatprep.subr.mxu0 0.0
  %798 = vmatpush1.msra.mxu0 0.0
  %799 = vmatprep.subr.mxu0 0.0
  %800 = vmatpush1.msra.mxu0 0.0
  %801 = vmatprep.subr.mxu0 0.0
  %802 = vmatpush1.msra.mxu0 0.0
  %803 = vmatprep.subr.mxu0 0.0
  %804 = vmatpush1.msra.mxu0 0.0
  %805 = vmatprep.subr.mxu0 0.0
  %806 = vmatpush1.msra.mxu0 0.0
  %807 = vmatprep.subr.mxu0 0.0
  %808 = vmatpush1.msra.mxu0 0.0
  %809 = vmatprep.subr.mxu0 0.0
  %810 = vmatpush1.msra.mxu0 0.0
  %811 = vmatprep.subr.mxu0 0.0
  %812 = vmatpush1.msra.mxu0 0.0
  %813 = vmatprep.subr.mxu0 0.0
  %814 = vmatpush1.msra.mxu0 0.0
  %815 = vmatprep.subr.mxu0 0.0
  %816 = vmatpush1.msra.mxu0 0.0
  %817 = vmatprep.subr.mxu0 0.0
  %818 = vmatpush1.msra.mxu0 0.0
  %819 = vmatprep.subr.mxu0 0.0
  %820 = vmatpush1.msra.mxu0 0.0
  %821 = vmatprep.subr.mxu0 0.0
  %822 = vmatpush1.msra.mxu0 0.0
  %823 = vmatprep.subr.mxu0 0.0
  %824 = vmatpush1.msra.mxu0 0.0
  %825 = vmatprep.subr.mxu0 0.0
  %826 = vmatpush1.msra.mxu0 0.0
  %827 = vmatprep.subr.mxu0 0.0
  %828 = vmatpush1.msra.mxu0 0.0
  %829 = vmatprep.subr.mxu0 0.0
  %830 = vmatpush1.msra.mxu0 0.0
  %831 = vmatprep.subr.mxu0 0.0
  %832 = vmatpush1.msra.mxu0 0.0
  %833 = vmatprep.subr.mxu0 0.0
  %834 = vmatpush1.msra.mxu0 0.0
  %835 = vmatprep.subr.mxu0 0.0
  %836 = vmatpush1.msra.mxu0 0.0
  %837 = vmatprep.subr.mxu0 0.0
  %838 = vmatpush1.msra.mxu0 0.0
  %839 = vmatprep.subr.mxu0 0.0
  %840 = vmatpush1.msra.mxu0 0.0
  %841 = vmatprep.subr.mxu0 0.0
  %842 = vmatpush1.msra.mxu0 0.0
  %843 = vmatprep.subr.mxu0 0.0
  %844 = vmatpush1.msra.mxu0 0.0
  %845 = vmatprep.subr.mxu0 0.0
  %846 = vmatpush1.msra.mxu0 0.0
  %847 = vmatprep.subr.mxu0 0.0
  %848 = vmatpush1.msra.mxu0 0.0
  %849 = vmatprep.subr.mxu0 0.0
  %850 = vmatpush1.msra.mxu0 0.0
  %851 = vmatprep.subr.mxu0 0.0
  %852 = vmatpush1.msra.mxu0 0.0
  %853 = vmatprep.mubr.f32.mxu0 0.0
  %854 = vmatmul.mubr.f32.gmra.mrb[0].mxu0 %v787
  %v855 = vpop.f32.mrb[0].mxu0
  %v856 = vadd.f32 %v242, %v855
  %v857 = vpop.f32.mrb[0].mxu0
  %858 = vdwg.mxu0
  %v860 = vrot.slane %v856, 6
  %v862 = vadd.f32 %v141, %v860
  %v863 = vxor.u32 %v862, 2147483648
  %v864 = vmul.f32 %v863, 1.442695
  %v865 = vpow.pop %v864
  %v866 = vadd.f32 %v865, 1.0
  %v867 = vrcp.pop %v866
  %v868 = vmul.f32 1.0, %v867
  %869 = vrot.lane.b32.xlu0 %v860, 64
  %v870 = vpop.permute.xlu0 %869
  %v872 = vmul.f32 %v868, %v870
  %874 = vrot.lane.b32.xlu0 %v872, 64
  %v875 = vpop.permute.xlu0 %874
  %v877 = vadd.f32 %v141, %v875
  %v878 = vtanh.pop %v877
  %v879 = vsub.f32 1.0, %v868
  %881 = vrot.lane.b32.xlu0 %v878, 96
  %v882 = vpop.permute.xlu0 %881
  %v884 = vmul.f32 %v879, %v882
  %v885 = vrot.slane %v781, 6
  %v887 = vmul.f32 %v868, %v885
  %v888 = vadd.f32 %v884, %v887
  %890 = vrot.lane.b32.xlu0 %v888, 96
  %v891 = vpop.permute.xlu0 %890
  %893 = vst.msk [vmem:[%s14 + $0x8] sm:$0xc] %vm456, %v891
  %v894 = vrot.slane %v888, 2
  %895 = vrot.lane.b32.xlu0 %v894, 96
  %v896 = vpop.permute.xlu0 %895
  %v897 = vsel %vm244, %v896, 0
  %899 = vmatprep.subr.mxu0 0.0
  %900 = vmatpush1.msra.mxu0 %v228
  %901 = vmatprep.subr.mxu0 0.0
  %902 = vmatpush1.msra.mxu0 %v229
  %903 = vmatprep.subr.mxu0 0.0
  %904 = vmatpush1.msra.mxu0 %v230
  %905 = vmatprep.subr.mxu0 0.0
  %906 = vmatpush1.msra.mxu0 %v231
  %907 = vmatprep.subr.mxu0 0.0
  %908 = vmatpush1.msra.mxu0 0.0
  %909 = vmatprep.subr.mxu0 0.0
  %910 = vmatpush1.msra.mxu0 0.0
  %911 = vmatprep.subr.mxu0 0.0
  %912 = vmatpush1.msra.mxu0 0.0
  %913 = vmatprep.subr.mxu0 0.0
  %914 = vmatpush1.msra.mxu0 0.0
  %915 = vmatprep.subr.mxu0 0.0
  %916 = vmatpush1.msra.mxu0 0.0
  %917 = vmatprep.subr.mxu0 0.0
  %918 = vmatpush1.msra.mxu0 0.0
  %919 = vmatprep.subr.mxu0 0.0
  %920 = vmatpush1.msra.mxu0 0.0
  %921 = vmatprep.subr.mxu0 0.0
  %922 = vmatpush1.msra.mxu0 0.0
  %923 = vmatprep.subr.mxu0 0.0
  %924 = vmatpush1.msra.mxu0 0.0
  %925 = vmatprep.subr.mxu0 0.0
  %926 = vmatpush1.msra.mxu0 0.0
  %927 = vmatprep.subr.mxu0 0.0
  %928 = vmatpush1.msra.mxu0 0.0
  %929 = vmatprep.subr.mxu0 0.0
  %930 = vmatpush1.msra.mxu0 0.0
  %931 = vmatprep.subr.mxu0 0.0
  %932 = vmatpush1.msra.mxu0 0.0
  %933 = vmatprep.subr.mxu0 0.0
  %934 = vmatpush1.msra.mxu0 0.0
  %935 = vmatprep.subr.mxu0 0.0
  %936 = vmatpush1.msra.mxu0 0.0
  %937 = vmatprep.subr.mxu0 0.0
  %938 = vmatpush1.msra.mxu0 0.0
  %939 = vmatprep.subr.mxu0 0.0
  %940 = vmatpush1.msra.mxu0 0.0
  %941 = vmatprep.subr.mxu0 0.0
  %942 = vmatpush1.msra.mxu0 0.0
  %943 = vmatprep.subr.mxu0 0.0
  %944 = vmatpush1.msra.mxu0 0.0
  %945 = vmatprep.subr.mxu0 0.0
  %946 = vmatpush1.msra.mxu0 0.0
  %947 = vmatprep.subr.mxu0 0.0
  %948 = vmatpush1.msra.mxu0 0.0
  %949 = vmatprep.subr.mxu0 0.0
  %950 = vmatpush1.msra.mxu0 0.0
  %951 = vmatprep.subr.mxu0 0.0
  %952 = vmatpush1.msra.mxu0 0.0
  %953 = vmatprep.subr.mxu0 0.0
  %954 = vmatpush1.msra.mxu0 0.0
  %955 = vmatprep.subr.mxu0 0.0
  %956 = vmatpush1.msra.mxu0 0.0
  %957 = vmatprep.subr.mxu0 0.0
  %958 = vmatpush1.msra.mxu0 0.0
  %959 = vmatprep.subr.mxu0 0.0
  %960 = vmatpush1.msra.mxu0 0.0
  %961 = vmatprep.subr.mxu0 0.0
  %962 = vmatpush1.msra.mxu0 0.0
  %963 = vmatprep.mubr.f32.mxu0 0.0
  %964 = vmatmul.mubr.f32.gmra.mrb[0].mxu0 %v897
  %v965 = vpop.f32.mrb[0].mxu0
  %v966 = vadd.f32 %v242, %v965
  %v967 = vpop.f32.mrb[0].mxu0
  %968 = vdwg.mxu0
  %v970 = vrot.slane %v966, 4
  %v972 = vadd.f32 %v141, %v970
  %v973 = vxor.u32 %v972, 2147483648
  %v974 = vmul.f32 %v973, 1.442695
  %v975 = vpow.pop %v974
  %v976 = vadd.f32 %v975, 1.0
  %v977 = vrcp.pop %v976
  %v978 = vmul.f32 1.0, %v977
  %979 = vrot.lane.b32.xlu0 %v970, 64
  %v980 = vpop.permute.xlu0 %979
  %v982 = vmul.f32 %v978, %v980
  %984 = vrot.lane.b32.xlu0 %v982, 64
  %v985 = vpop.permute.xlu0 %984
  %v987 = vadd.f32 %v141, %v985
  %v988 = vtanh.pop %v987
  %v989 = vsub.f32 1.0, %v978
  %991 = vrot.lane.b32.xlu0 %v988, 96
  %v992 = vpop.permute.xlu0 %991
  %v994 = vmul.f32 %v989, %v992
  %v995 = vrot.slane %v888, 6
  %v997 = vmul.f32 %v978, %v995
  %v998 = vadd.f32 %v994, %v997
  %1000 = vrot.lane.b32.xlu0 %v998, 96
  %v1001 = vpop.permute.xlu0 %1000
  %1003 = vst.msk [vmem:[%s14 + $0x8] sm:$0x30] %vm567, %v1001
  %v1004 = vrot.slane %v998, 4
  %1005 = vrot.lane.b32.xlu0 %v1004, 96
  %v1006 = vpop.permute.xlu0 %1005
  %v1007 = vsel %vm244, %v1006, 0
  %1009 = vmatprep.subr.mxu0 0.0
  %1010 = vmatpush1.msra.mxu0 %v228
  %1011 = vmatprep.subr.mxu0 0.0
  %1012 = vmatpush1.msra.mxu0 %v229
  %1013 = vmatprep.subr.mxu0 0.0
  %1014 = vmatpush1.msra.mxu0 %v230
  %1015 = vmatprep.subr.mxu0 0.0
  %1016 = vmatpush1.msra.mxu0 %v231
  %1017 = vmatprep.subr.mxu0 0.0
  %1018 = vmatpush1.msra.mxu0 0.0
  %1019 = vmatprep.subr.mxu0 0.0
  %1020 = vmatpush1.msra.mxu0 0.0
  %1021 = vmatprep.subr.mxu0 0.0
  %1022 = vmatpush1.msra.mxu0 0.0
  %1023 = vmatprep.subr.mxu0 0.0
  %1024 = vmatpush1.msra.mxu0 0.0
  %1025 = vmatprep.subr.mxu0 0.0
  %1026 = vmatpush1.msra.mxu0 0.0
  %1027 = vmatprep.subr.mxu0 0.0
  %1028 = vmatpush1.msra.mxu0 0.0
  %1029 = vmatprep.subr.mxu0 0.0
  %1030 = vmatpush1.msra.mxu0 0.0
  %1031 = vmatprep.subr.mxu0 0.0
  %1032 = vmatpush1.msra.mxu0 0.0
  %1033 = vmatprep.subr.mxu0 0.0
  %1034 = vmatpush1.msra.mxu0 0.0
  %1035 = vmatprep.subr.mxu0 0.0
  %1036 = vmatpush1.msra.mxu0 0.0
  %1037 = vmatprep.subr.mxu0 0.0
  %1038 = vmatpush1.msra.mxu0 0.0
  %1039 = vmatprep.subr.mxu0 0.0
  %1040 = vmatpush1.msra.mxu0 0.0
  %1041 = vmatprep.subr.mxu0 0.0
  %1042 = vmatpush1.msra.mxu0 0.0
  %1043 = vmatprep.subr.mxu0 0.0
  %1044 = vmatpush1.msra.mxu0 0.0
  %1045 = vmatprep.subr.mxu0 0.0
  %1046 = vmatpush1.msra.mxu0 0.0
  %1047 = vmatprep.subr.mxu0 0.0
  %1048 = vmatpush1.msra.mxu0 0.0
  %1049 = vmatprep.subr.mxu0 0.0
  %1050 = vmatpush1.msra.mxu0 0.0
  %1051 = vmatprep.subr.mxu0 0.0
  %1052 = vmatpush1.msra.mxu0 0.0
  %1053 = vmatprep.subr.mxu0 0.0
  %1054 = vmatpush1.msra.mxu0 0.0
  %1055 = vmatprep.subr.mxu0 0.0
  %1056 = vmatpush1.msra.mxu0 0.0
  %1057 = vmatprep.subr.mxu0 0.0
  %1058 = vmatpush1.msra.mxu0 0.0
  %1059 = vmatprep.subr.mxu0 0.0
  %1060 = vmatpush1.msra.mxu0 0.0
  %1061 = vmatprep.subr.mxu0 0.0
  %1062 = vmatpush1.msra.mxu0 0.0
  %1063 = vmatprep.subr.mxu0 0.0
  %1064 = vmatpush1.msra.mxu0 0.0
  %1065 = vmatprep.subr.mxu0 0.0
  %1066 = vmatpush1.msra.mxu0 0.0
  %1067 = vmatprep.subr.mxu0 0.0
  %1068 = vmatpush1.msra.mxu0 0.0
  %1069 = vmatprep.subr.mxu0 0.0
  %1070 = vmatpush1.msra.mxu0 0.0
  %1071 = vmatprep.subr.mxu0 0.0
  %1072 = vmatpush1.msra.mxu0 0.0
  %1073 = vmatprep.mubr.f32.mxu0 0.0
  %1074 = vmatmul.mubr.f32.gmra.mrb[0].mxu0 %v1007
  %v1075 = vpop.f32.mrb[0].mxu0
  %v1076 = vadd.f32 %v242, %v1075
  %v1077 = vpop.f32.mrb[0].mxu0
  %1078 = vdwg.mxu0
  %v1080 = vrot.slane %v1076, 2
  %v1082 = vadd.f32 %v141, %v1080
  %v1083 = vxor.u32 %v1082, 2147483648
  %v1084 = vmul.f32 %v1083, 1.442695
  %v1085 = vpow.pop %v1084
  %v1086 = vadd.f32 %v1085, 1.0
  %v1087 = vrcp.pop %v1086
  %v1088 = vmul.f32 1.0, %v1087
  %1089 = vrot.lane.b32.xlu0 %v1080, 64
  %v1090 = vpop.permute.xlu0 %1089
  %v1092 = vmul.f32 %v1088, %v1090
  %1094 = vrot.lane.b32.xlu0 %v1092, 64
  %v1095 = vpop.permute.xlu0 %1094
  %v1097 = vadd.f32 %v141, %v1095
  %v1098 = vtanh.pop %v1097
  %v1099 = vsub.f32 1.0, %v1088
  %1101 = vrot.lane.b32.xlu0 %v1098, 96
  %v1102 = vpop.permute.xlu0 %1101
  %v1104 = vmul.f32 %v1099, %v1102
  %v1105 = vrot.slane %v998, 6
  %v1107 = vmul.f32 %v1088, %v1105
  %v1108 = vadd.f32 %v1104, %v1107
  %1110 = vrot.lane.b32.xlu0 %v1108, 96
  %v1111 = vpop.permute.xlu0 %1110
  %1113 = vst.msk [vmem:[%s14 + $0x8] sm:$0xc0] %vm678, %v1111
  %v1115 = vlaneseq
  %v1116 = vshrl.u32 %v1115, 7
  %v1117 = vsub.s32 0, %v1116
  %v1118 = vrot.slane %v237, %v1117
  %1120 = vmatprep.subr.mxu0 0.0
  %1121 = vmatpush1.msra.mxu0 %v233
  %1122 = vmatprep.subr.mxu0 0.0
  %1123 = vmatpush1.msra.mxu0 %v234
  %1124 = vmatprep.subr.mxu0 0.0
  %1125 = vmatpush1.msra.mxu0 %v235
  %1126 = vmatprep.subr.mxu0 0.0
  %1127 = vmatpush1.msra.mxu0 %v236
  %1128 = vmatprep.subr.mxu0 0.0
  %1129 = vmatpush1.msra.mxu0 0.0
  %1130 = vmatprep.subr.mxu0 0.0
  %1131 = vmatpush1.msra.mxu0 0.0
  %1132 = vmatprep.subr.mxu0 0.0
  %1133 = vmatpush1.msra.mxu0 0.0
  %1134 = vmatprep.subr.mxu0 0.0
  %1135 = vmatpush1.msra.mxu0 0.0
  %1136 = vmatprep.subr.mxu0 0.0
  %1137 = vmatpush1.msra.mxu0 0.0
  %1138 = vmatprep.subr.mxu0 0.0
  %1139 = vmatpush1.msra.mxu0 0.0
  %1140 = vmatprep.subr.mxu0 0.0
  %1141 = vmatpush1.msra.mxu0 0.0
  %1142 = vmatprep.subr.mxu0 0.0
  %1143 = vmatpush1.msra.mxu0 0.0
  %1144 = vmatprep.subr.mxu0 0.0
  %1145 = vmatpush1.msra.mxu0 0.0
  %1146 = vmatprep.subr.mxu0 0.0
  %1147 = vmatpush1.msra.mxu0 0.0
  %1148 = vmatprep.subr.mxu0 0.0
  %1149 = vmatpush1.msra.mxu0 0.0
  %1150 = vmatprep.subr.mxu0 0.0
  %1151 = vmatpush1.msra.mxu0 0.0
  %1152 = vmatprep.subr.mxu0 0.0
  %1153 = vmatpush1.msra.mxu0 0.0
  %1154 = vmatprep.subr.mxu0 0.0
  %1155 = vmatpush1.msra.mxu0 0.0
  %1156 = vmatprep.subr.mxu0 0.0
  %1157 = vmatpush1.msra.mxu0 0.0
  %1158 = vmatprep.subr.mxu0 0.0
  %1159 = vmatpush1.msra.mxu0 0.0
  %1160 = vmatprep.subr.mxu0 0.0
  %1161 = vmatpush1.msra.mxu0 0.0
  %1162 = vmatprep.subr.mxu0 0.0
  %1163 = vmatpush1.msra.mxu0 0.0
  %1164 = vmatprep.subr.mxu0 0.0
  %1165 = vmatpush1.msra.mxu0 0.0
  %1166 = vmatprep.subr.mxu0 0.0
  %1167 = vmatpush1.msra.mxu0 0.0
  %1168 = vmatprep.subr.mxu0 0.0
  %1169 = vmatpush1.msra.mxu0 0.0
  %1170 = vmatprep.subr.mxu0 0.0
  %1171 = vmatpush1.msra.mxu0 0.0
  %1172 = vmatprep.subr.mxu0 0.0
  %1173 = vmatpush1.msra.mxu0 0.0
  %1174 = vmatprep.subr.mxu0 0.0
  %1175 = vmatpush1.msra.mxu0 0.0
  %1176 = vmatprep.subr.mxu0 0.0
  %1177 = vmatpush1.msra.mxu0 0.0
  %1178 = vmatprep.subr.mxu0 0.0
  %1179 = vmatpush1.msra.mxu0 0.0
  %1180 = vmatprep.subr.mxu0 0.0
  %1181 = vmatpush1.msra.mxu0 0.0
  %1182 = vmatprep.subr.mxu0 0.0
  %1183 = vmatpush1.msra.mxu0 0.0
  %1184 = vmatprep.mubr.f32.mxu0 0.0
  %1185 = vmatmul.mubr.f32.gmra.mrb[0].mxu0 %v246
  %v1186 = vpop.f32.mrb[0].mxu0
  %v1187 = vadd.f32 %v1118, %v1186
  %v1188 = vpop.f32.mrb[0].mxu0
  %1189 = vdwg.mxu0
  %v1191 = vrot.slane %v1187, 2
  %v1193 = vadd.f32 %v225, %v1191
  %v1194 = vxor.u32 %v1193, 2147483648
  %v1195 = vmul.f32 %v1194, 1.442695
  %v1196 = vpow.pop %v1195
  %v1197 = vadd.f32 %v1196, 1.0
  %v1198 = vrcp.pop %v1197
  %v1199 = vmul.f32 1.0, %v1198
  %1200 = vrot.lane.b32.xlu0 %v1191, 64
  %v1201 = vpop.permute.xlu0 %1200
  %v1203 = vmul.f32 %v1199, %v1201
  %1205 = vrot.lane.b32.xlu0 %v1203, 64
  %v1206 = vpop.permute.xlu0 %1205
  %v1208 = vadd.f32 %v225, %v1206
  %v1209 = vtanh.pop %v1208
  %v1210 = vsub.f32 1.0, %v1199
  %1212 = vrot.lane.b32.xlu0 %v1209, 96
  %v1213 = vpop.permute.xlu0 %1212
  %v1215 = vmul.f32 %v1210, %v1213
  %v1216 = vmul.f32 %v1199, 0.0
  %v1217 = vadd.f32 %v1215, %v1216
  %1219 = vrot.lane.b32.xlu0 %v1217, 96
  %v1220 = vpop.permute.xlu0 %1219
  %1222 = vst.msk [vmem:[%s15 + $0x8] sm:$0xc0] %vm678, %v1220
  %v1223 = vrot.slane %v1217, 6
  %1224 = vrot.lane.b32.xlu0 %v1223, 96
  %v1225 = vpop.permute.xlu0 %1224
  %v1226 = vsel %vm244, %v1225, 0
  %1228 = vmatprep.subr.mxu0 0.0
  %1229 = vmatpush1.msra.mxu0 %v233
  %1230 = vmatprep.subr.mxu0 0.0
  %1231 = vmatpush1.msra.mxu0 %v234
  %1232 = vmatprep.subr.mxu0 0.0
  %1233 = vmatpush1.msra.mxu0 %v235
  %1234 = vmatprep.subr.mxu0 0.0
  %1235 = vmatpush1.msra.mxu0 %v236
  %1236 = vmatprep.subr.mxu0 0.0
  %1237 = vmatpush1.msra.mxu0 0.0
  %1238 = vmatprep.subr.mxu0 0.0
  %1239 = vmatpush1.msra.mxu0 0.0
  %1240 = vmatprep.subr.mxu0 0.0
  %1241 = vmatpush1.msra.mxu0 0.0
  %1242 = vmatprep.subr.mxu0 0.0
  %1243 = vmatpush1.msra.mxu0 0.0
  %1244 = vmatprep.subr.mxu0 0.0
  %1245 = vmatpush1.msra.mxu0 0.0
  %1246 = vmatprep.subr.mxu0 0.0
  %1247 = vmatpush1.msra.mxu0 0.0
  %1248 = vmatprep.subr.mxu0 0.0
  %1249 = vmatpush1.msra.mxu0 0.0
  %1250 = vmatprep.subr.mxu0 0.0
  %1251 = vmatpush1.msra.mxu0 0.0
  %1252 = vmatprep.subr.mxu0 0.0
  %1253 = vmatpush1.msra.mxu0 0.0
  %1254 = vmatprep.subr.mxu0 0.0
  %1255 = vmatpush1.msra.mxu0 0.0
  %1256 = vmatprep.subr.mxu0 0.0
  %1257 = vmatpush1.msra.mxu0 0.0
  %1258 = vmatprep.subr.mxu0 0.0
  %1259 = vmatpush1.msra.mxu0 0.0
  %1260 = vmatprep.subr.mxu0 0.0
  %1261 = vmatpush1.msra.mxu0 0.0
  %1262 = vmatprep.subr.mxu0 0.0
  %1263 = vmatpush1.msra.mxu0 0.0
  %1264 = vmatprep.subr.mxu0 0.0
  %1265 = vmatpush1.msra.mxu0 0.0
  %1266 = vmatprep.subr.mxu0 0.0
  %1267 = vmatpush1.msra.mxu0 0.0
  %1268 = vmatprep.subr.mxu0 0.0
  %1269 = vmatpush1.msra.mxu0 0.0
  %1270 = vmatprep.subr.mxu0 0.0
  %1271 = vmatpush1.msra.mxu0 0.0
  %1272 = vmatprep.subr.mxu0 0.0
  %1273 = vmatpush1.msra.mxu0 0.0
  %1274 = vmatprep.subr.mxu0 0.0
  %1275 = vmatpush1.msra.mxu0 0.0
  %1276 = vmatprep.subr.mxu0 0.0
  %1277 = vmatpush1.msra.mxu0 0.0
  %1278 = vmatprep.subr.mxu0 0.0
  %1279 = vmatpush1.msra.mxu0 0.0
  %1280 = vmatprep.subr.mxu0 0.0
  %1281 = vmatpush1.msra.mxu0 0.0
  %1282 = vmatprep.subr.mxu0 0.0
  %1283 = vmatpush1.msra.mxu0 0.0
  %1284 = vmatprep.subr.mxu0 0.0
  %1285 = vmatpush1.msra.mxu0 0.0
  %1286 = vmatprep.subr.mxu0 0.0
  %1287 = vmatpush1.msra.mxu0 0.0
  %1288 = vmatprep.subr.mxu0 0.0
  %1289 = vmatpush1.msra.mxu0 0.0
  %1290 = vmatprep.subr.mxu0 0.0
  %1291 = vmatpush1.msra.mxu0 0.0
  %1292 = vmatprep.mubr.f32.mxu0 0.0
  %1293 = vmatmul.mubr.f32.gmra.mrb[0].mxu0 %v1226
  %v1294 = vpop.f32.mrb[0].mxu0
  %v1295 = vadd.f32 %v1118, %v1294
  %v1296 = vpop.f32.mrb[0].mxu0
  %1297 = vdwg.mxu0
  %v1299 = vrot.slane %v1295, 4
  %v1301 = vadd.f32 %v225, %v1299
  %v1302 = vxor.u32 %v1301, 2147483648
  %v1303 = vmul.f32 %v1302, 1.442695
  %v1304 = vpow.pop %v1303
  %v1305 = vadd.f32 %v1304, 1.0
  %v1306 = vrcp.pop %v1305
  %v1307 = vmul.f32 1.0, %v1306
  %1308 = vrot.lane.b32.xlu0 %v1299, 64
  %v1309 = vpop.permute.xlu0 %1308
  %v1311 = vmul.f32 %v1307, %v1309
  %1313 = vrot.lane.b32.xlu0 %v1311, 64
  %v1314 = vpop.permute.xlu0 %1313
  %v1316 = vadd.f32 %v225, %v1314
  %v1317 = vtanh.pop %v1316
  %v1318 = vsub.f32 1.0, %v1307
  %1320 = vrot.lane.b32.xlu0 %v1317, 96
  %v1321 = vpop.permute.xlu0 %1320
  %v1323 = vmul.f32 %v1318, %v1321
  %v1324 = vrot.slane %v1217, 2
  %v1326 = vmul.f32 %v1307, %v1324
  %v1327 = vadd.f32 %v1323, %v1326
  %1329 = vrot.lane.b32.xlu0 %v1327, 96
  %v1330 = vpop.permute.xlu0 %1329
  %1332 = vst.msk [vmem:[%s15 + $0x8] sm:$0x30] %vm567, %v1330
  %v1333 = vrot.slane %v1327, 4
  %1334 = vrot.lane.b32.xlu0 %v1333, 96
  %v1335 = vpop.permute.xlu0 %1334
  %v1336 = vsel %vm244, %v1335, 0
  %1338 = vmatprep.subr.mxu0 0.0
  %1339 = vmatpush1.msra.mxu0 %v233
  %1340 = vmatprep.subr.mxu0 0.0
  %1341 = vmatpush1.msra.mxu0 %v234
  %1342 = vmatprep.subr.mxu0 0.0
  %1343 = vmatpush1.msra.mxu0 %v235
  %1344 = vmatprep.subr.mxu0 0.0
  %1345 = vmatpush1.msra.mxu0 %v236
  %1346 = vmatprep.subr.mxu0 0.0
  %1347 = vmatpush1.msra.mxu0 0.0
  %1348 = vmatprep.subr.mxu0 0.0
  %1349 = vmatpush1.msra.mxu0 0.0
  %1350 = vmatprep.subr.mxu0 0.0
  %1351 = vmatpush1.msra.mxu0 0.0
  %1352 = vmatprep.subr.mxu0 0.0
  %1353 = vmatpush1.msra.mxu0 0.0
  %1354 = vmatprep.subr.mxu0 0.0
  %1355 = vmatpush1.msra.mxu0 0.0
  %1356 = vmatprep.subr.mxu0 0.0
  %1357 = vmatpush1.msra.mxu0 0.0
  %1358 = vmatprep.subr.mxu0 0.0
  %1359 = vmatpush1.msra.mxu0 0.0
  %1360 = vmatprep.subr.mxu0 0.0
  %1361 = vmatpush1.msra.mxu0 0.0
  %1362 = vmatprep.subr.mxu0 0.0
  %1363 = vmatpush1.msra.mxu0 0.0
  %1364 = vmatprep.subr.mxu0 0.0
  %1365 = vmatpush1.msra.mxu0 0.0
  %1366 = vmatprep.subr.mxu0 0.0
  %1367 = vmatpush1.msra.mxu0 0.0
  %1368 = vmatprep.subr.mxu0 0.0
  %1369 = vmatpush1.msra.mxu0 0.0
  %1370 = vmatprep.subr.mxu0 0.0
  %1371 = vmatpush1.msra.mxu0 0.0
  %1372 = vmatprep.subr.mxu0 0.0
  %1373 = vmatpush1.msra.mxu0 0.0
  %1374 = vmatprep.subr.mxu0 0.0
  %1375 = vmatpush1.msra.mxu0 0.0
  %1376 = vmatprep.subr.mxu0 0.0
  %1377 = vmatpush1.msra.mxu0 0.0
  %1378 = vmatprep.subr.mxu0 0.0
  %1379 = vmatpush1.msra.mxu0 0.0
  %1380 = vmatprep.subr.mxu0 0.0
  %1381 = vmatpush1.msra.mxu0 0.0
  %1382 = vmatprep.subr.mxu0 0.0
  %1383 = vmatpush1.msra.mxu0 0.0
  %1384 = vmatprep.subr.mxu0 0.0
  %1385 = vmatpush1.msra.mxu0 0.0
  %1386 = vmatprep.subr.mxu0 0.0
  %1387 = vmatpush1.msra.mxu0 0.0
  %1388 = vmatprep.subr.mxu0 0.0
  %1389 = vmatpush1.msra.mxu0 0.0
  %1390 = vmatprep.subr.mxu0 0.0
  %1391 = vmatpush1.msra.mxu0 0.0
  %1392 = vmatprep.subr.mxu0 0.0
  %1393 = vmatpush1.msra.mxu0 0.0
  %1394 = vmatprep.subr.mxu0 0.0
  %1395 = vmatpush1.msra.mxu0 0.0
  %1396 = vmatprep.subr.mxu0 0.0
  %1397 = vmatpush1.msra.mxu0 0.0
  %1398 = vmatprep.subr.mxu0 0.0
  %1399 = vmatpush1.msra.mxu0 0.0
  %1400 = vmatprep.subr.mxu0 0.0
  %1401 = vmatpush1.msra.mxu0 0.0
  %1402 = vmatprep.mubr.f32.mxu0 0.0
  %1403 = vmatmul.mubr.f32.gmra.mrb[0].mxu0 %v1336
  %v1404 = vpop.f32.mrb[0].mxu0
  %v1405 = vadd.f32 %v1118, %v1404
  %v1406 = vpop.f32.mrb[0].mxu0
  %1407 = vdwg.mxu0
  %v1409 = vrot.slane %v1405, 6
  %v1411 = vadd.f32 %v225, %v1409
  %v1412 = vxor.u32 %v1411, 2147483648
  %v1413 = vmul.f32 %v1412, 1.442695
  %v1414 = vpow.pop %v1413
  %v1415 = vadd.f32 %v1414, 1.0
  %v1416 = vrcp.pop %v1415
  %v1417 = vmul.f32 1.0, %v1416
  %1418 = vrot.lane.b32.xlu0 %v1409, 64
  %v1419 = vpop.permute.xlu0 %1418
  %v1421 = vmul.f32 %v1417, %v1419
  %1423 = vrot.lane.b32.xlu0 %v1421, 64
  %v1424 = vpop.permute.xlu0 %1423
  %v1426 = vadd.f32 %v225, %v1424
  %v1427 = vtanh.pop %v1426
  %v1428 = vsub.f32 1.0, %v1417
  %1430 = vrot.lane.b32.xlu0 %v1427, 96
  %v1431 = vpop.permute.xlu0 %1430
  %v1433 = vmul.f32 %v1428, %v1431
  %v1434 = vrot.slane %v1327, 2
  %v1436 = vmul.f32 %v1417, %v1434
  %v1437 = vadd.f32 %v1433, %v1436
  %1439 = vrot.lane.b32.xlu0 %v1437, 96
  %v1440 = vpop.permute.xlu0 %1439
  %1442 = vst.msk [vmem:[%s15 + $0x8] sm:$0xc] %vm456, %v1440
  %v1443 = vrot.slane %v1437, 2
  %1444 = vrot.lane.b32.xlu0 %v1443, 96
  %v1445 = vpop.permute.xlu0 %1444
  %v1446 = vsel %vm244, %v1445, 0
  %1448 = vmatprep.subr.mxu0 0.0
  %1449 = vmatpush1.msra.mxu0 %v233
  %1450 = vmatprep.subr.mxu0 0.0
  %1451 = vmatpush1.msra.mxu0 %v234
  %1452 = vmatprep.subr.mxu0 0.0
  %1453 = vmatpush1.msra.mxu0 %v235
  %1454 = vmatprep.subr.mxu0 0.0
  %1455 = vmatpush1.msra.mxu0 %v236
  %1456 = vmatprep.subr.mxu0 0.0
  %1457 = vmatpush1.msra.mxu0 0.0
  %1458 = vmatprep.subr.mxu0 0.0
  %1459 = vmatpush1.msra.mxu0 0.0
  %1460 = vmatprep.subr.mxu0 0.0
  %1461 = vmatpush1.msra.mxu0 0.0
  %1462 = vmatprep.subr.mxu0 0.0
  %1463 = vmatpush1.msra.mxu0 0.0
  %1464 = vmatprep.subr.mxu0 0.0
  %1465 = vmatpush1.msra.mxu0 0.0
  %1466 = vmatprep.subr.mxu0 0.0
  %1467 = vmatpush1.msra.mxu0 0.0
  %1468 = vmatprep.subr.mxu0 0.0
  %1469 = vmatpush1.msra.mxu0 0.0
  %1470 = vmatprep.subr.mxu0 0.0
  %1471 = vmatpush1.msra.mxu0 0.0
  %1472 = vmatprep.subr.mxu0 0.0
  %1473 = vmatpush1.msra.mxu0 0.0
  %1474 = vmatprep.subr.mxu0 0.0
  %1475 = vmatpush1.msra.mxu0 0.0
  %1476 = vmatprep.subr.mxu0 0.0
  %1477 = vmatpush1.msra.mxu0 0.0
  %1478 = vmatprep.subr.mxu0 0.0
  %1479 = vmatpush1.msra.mxu0 0.0
  %1480 = vmatprep.subr.mxu0 0.0
  %1481 = vmatpush1.msra.mxu0 0.0
  %1482 = vmatprep.subr.mxu0 0.0
  %1483 = vmatpush1.msra.mxu0 0.0
  %1484 = vmatprep.subr.mxu0 0.0
  %1485 = vmatpush1.msra.mxu0 0.0
  %1486 = vmatprep.subr.mxu0 0.0
  %1487 = vmatpush1.msra.mxu0 0.0
  %1488 = vmatprep.subr.mxu0 0.0
  %1489 = vmatpush1.msra.mxu0 0.0
  %1490 = vmatprep.subr.mxu0 0.0
  %1491 = vmatpush1.msra.mxu0 0.0
  %1492 = vmatprep.subr.mxu0 0.0
  %1493 = vmatpush1.msra.mxu0 0.0
  %1494 = vmatprep.subr.mxu0 0.0
  %1495 = vmatpush1.msra.mxu0 0.0
  %1496 = vmatprep.subr.mxu0 0.0
  %1497 = vmatpush1.msra.mxu0 0.0
  %1498 = vmatprep.subr.mxu0 0.0
  %1499 = vmatpush1.msra.mxu0 0.0
  %1500 = vmatprep.subr.mxu0 0.0
  %1501 = vmatpush1.msra.mxu0 0.0
  %1502 = vmatprep.subr.mxu0 0.0
  %1503 = vmatpush1.msra.mxu0 0.0
  %1504 = vmatprep.subr.mxu0 0.0
  %1505 = vmatpush1.msra.mxu0 0.0
  %1506 = vmatprep.subr.mxu0 0.0
  %1507 = vmatpush1.msra.mxu0 0.0
  %1508 = vmatprep.subr.mxu0 0.0
  %1509 = vmatpush1.msra.mxu0 0.0
  %1510 = vmatprep.subr.mxu0 0.0
  %1511 = vmatpush1.msra.mxu0 0.0
  %1512 = vmatprep.mubr.f32.mxu0 0.0
  %1513 = vmatmul.mubr.f32.gmra.mrb[0].mxu0 %v1446
  %v1514 = vpop.f32.mrb[0].mxu0
  %v1515 = vadd.f32 %v1118, %v1514
  %v1516 = vpop.f32.mrb[0].mxu0
  %1517 = vdwg.mxu0
  %v1518 = vadd.f32 %v225, %v1515
  %v1519 = vxor.u32 %v1518, 2147483648
  %v1520 = vmul.f32 %v1519, 1.442695
  %v1521 = vpow.pop %v1520
  %v1522 = vadd.f32 %v1521, 1.0
  %v1523 = vrcp.pop %v1522
  %v1524 = vmul.f32 1.0, %v1523
  %1526 = vrot.lane.b32.xlu0 %v1515, 64
  %v1527 = vpop.permute.xlu0 %1526
  %v1529 = vmul.f32 %v1524, %v1527
  %1531 = vrot.lane.b32.xlu0 %v1529, 64
  %v1532 = vpop.permute.xlu0 %1531
  %v1534 = vadd.f32 %v225, %v1532
  %v1535 = vtanh.pop %v1534
  %v1536 = vsub.f32 1.0, %v1524
  %1538 = vrot.lane.b32.xlu0 %v1535, 96
  %v1539 = vpop.permute.xlu0 %1538
  %v1541 = vmul.f32 %v1536, %v1539
  %v1543 = vmul.f32 %v1524, %v1443
  %v1544 = vadd.f32 %v1541, %v1543
  %1546 = vrot.lane.b32.xlu0 %v1544, 96
  %v1547 = vpop.permute.xlu0 %1546
  %1549 = vst.msk [vmem:[%s15 + $0x8] sm:$0x3] %vm348, %v1547
  %v1550 = vsel %vm244, %v1547, 0
  %1552 = vmatprep.subr.mxu0 0.0
  %1553 = vmatpush1.msra.mxu0 %v233
  %1554 = vmatprep.subr.mxu0 0.0
  %1555 = vmatpush1.msra.mxu0 %v234
  %1556 = vmatprep.subr.mxu0 0.0
  %1557 = vmatpush1.msra.mxu0 %v235
  %1558 = vmatprep.subr.mxu0 0.0
  %1559 = vmatpush1.msra.mxu0 %v236
  %1560 = vmatprep.subr.mxu0 0.0
  %1561 = vmatpush1.msra.mxu0 0.0
  %1562 = vmatprep.subr.mxu0 0.0
  %1563 = vmatpush1.msra.mxu0 0.0
  %1564 = vmatprep.subr.mxu0 0.0
  %1565 = vmatpush1.msra.mxu0 0.0
  %1566 = vmatprep.subr.mxu0 0.0
  %1567 = vmatpush1.msra.mxu0 0.0
  %1568 = vmatprep.subr.mxu0 0.0
  %1569 = vmatpush1.msra.mxu0 0.0
  %1570 = vmatprep.subr.mxu0 0.0
  %1571 = vmatpush1.msra.mxu0 0.0
  %1572 = vmatprep.subr.mxu0 0.0
  %1573 = vmatpush1.msra.mxu0 0.0
  %1574 = vmatprep.subr.mxu0 0.0
  %1575 = vmatpush1.msra.mxu0 0.0
  %1576 = vmatprep.subr.mxu0 0.0
  %1577 = vmatpush1.msra.mxu0 0.0
  %1578 = vmatprep.subr.mxu0 0.0
  %1579 = vmatpush1.msra.mxu0 0.0
  %1580 = vmatprep.subr.mxu0 0.0
  %1581 = vmatpush1.msra.mxu0 0.0
  %1582 = vmatprep.subr.mxu0 0.0
  %1583 = vmatpush1.msra.mxu0 0.0
  %1584 = vmatprep.subr.mxu0 0.0
  %1585 = vmatpush1.msra.mxu0 0.0
  %1586 = vmatprep.subr.mxu0 0.0
  %1587 = vmatpush1.msra.mxu0 0.0
  %1588 = vmatprep.subr.mxu0 0.0
  %1589 = vmatpush1.msra.mxu0 0.0
  %1590 = vmatprep.subr.mxu0 0.0
  %1591 = vmatpush1.msra.mxu0 0.0
  %1592 = vmatprep.subr.mxu0 0.0
  %1593 = vmatpush1.msra.mxu0 0.0
  %1594 = vmatprep.subr.mxu0 0.0
  %1595 = vmatpush1.msra.mxu0 0.0
  %1596 = vmatprep.subr.mxu0 0.0
  %1597 = vmatpush1.msra.mxu0 0.0
  %1598 = vmatprep.subr.mxu0 0.0
  %1599 = vmatpush1.msra.mxu0 0.0
  %1600 = vmatprep.subr.mxu0 0.0
  %1601 = vmatpush1.msra.mxu0 0.0
  %1602 = vmatprep.subr.mxu0 0.0
  %1603 = vmatpush1.msra.mxu0 0.0
  %1604 = vmatprep.subr.mxu0 0.0
  %1605 = vmatpush1.msra.mxu0 0.0
  %1606 = vmatprep.subr.mxu0 0.0
  %1607 = vmatpush1.msra.mxu0 0.0
  %1608 = vmatprep.subr.mxu0 0.0
  %1609 = vmatpush1.msra.mxu0 0.0
  %1610 = vmatprep.subr.mxu0 0.0
  %1611 = vmatpush1.msra.mxu0 0.0
  %1612 = vmatprep.subr.mxu0 0.0
  %1613 = vmatpush1.msra.mxu0 0.0
  %1614 = vmatprep.subr.mxu0 0.0
  %1615 = vmatpush1.msra.mxu0 0.0
  %1616 = vmatprep.mubr.f32.mxu0 0.0
  %1617 = vmatmul.mubr.f32.gmra.mrb[0].mxu0 %v1550
  %v1618 = vpop.f32.mrb[0].mxu0
  %v1619 = vadd.f32 %v1118, %v1618
  %v1620 = vpop.f32.mrb[0].mxu0
  %1621 = vdwg.mxu0
  %v1623 = vrot.slane %v1619, 2
  %v1625 = vadd.f32 %v220, %v1623
  %v1626 = vxor.u32 %v1625, 2147483648
  %v1627 = vmul.f32 %v1626, 1.442695
  %v1628 = vpow.pop %v1627
  %v1629 = vadd.f32 %v1628, 1.0
  %v1630 = vrcp.pop %v1629
  %v1631 = vmul.f32 1.0, %v1630
  %1632 = vrot.lane.b32.xlu0 %v1623, 64
  %v1633 = vpop.permute.xlu0 %1632
  %v1635 = vmul.f32 %v1631, %v1633
  %1637 = vrot.lane.b32.xlu0 %v1635, 64
  %v1638 = vpop.permute.xlu0 %1637
  %v1640 = vadd.f32 %v220, %v1638
  %v1641 = vtanh.pop %v1640
  %v1642 = vsub.f32 1.0, %v1631
  %1644 = vrot.lane.b32.xlu0 %v1641, 96
  %v1645 = vpop.permute.xlu0 %1644
  %v1647 = vmul.f32 %v1642, %v1645
  %v1648 = vrot.slane %v1544, 2
  %v1650 = vmul.f32 %v1631, %v1648
  %v1651 = vadd.f32 %v1647, %v1650
  %1653 = vrot.lane.b32.xlu0 %v1651, 96
  %v1654 = vpop.permute.xlu0 %1653
  %1656 = vst.msk [vmem:[%s15] sm:$0xc0] %vm678, %v1654
  %v1657 = vrot.slane %v1651, 6
  %1658 = vrot.lane.b32.xlu0 %v1657, 96
  %v1659 = vpop.permute.xlu0 %1658
  %v1660 = vsel %vm244, %v1659, 0
  %1662 = vmatprep.subr.mxu0 0.0
  %1663 = vmatpush1.msra.mxu0 %v233
  %1664 = vmatprep.subr.mxu0 0.0
  %1665 = vmatpush1.msra.mxu0 %v234
  %1666 = vmatprep.subr.mxu0 0.0
  %1667 = vmatpush1.msra.mxu0 %v235
  %1668 = vmatprep.subr.mxu0 0.0
  %1669 = vmatpush1.msra.mxu0 %v236
  %1670 = vmatprep.subr.mxu0 0.0
  %1671 = vmatpush1.msra.mxu0 0.0
  %1672 = vmatprep.subr.mxu0 0.0
  %1673 = vmatpush1.msra.mxu0 0.0
  %1674 = vmatprep.subr.mxu0 0.0
  %1675 = vmatpush1.msra.mxu0 0.0
  %1676 = vmatprep.subr.mxu0 0.0
  %1677 = vmatpush1.msra.mxu0 0.0
  %1678 = vmatprep.subr.mxu0 0.0
  %1679 = vmatpush1.msra.mxu0 0.0
  %1680 = vmatprep.subr.mxu0 0.0
  %1681 = vmatpush1.msra.mxu0 0.0
  %1682 = vmatprep.subr.mxu0 0.0
  %1683 = vmatpush1.msra.mxu0 0.0
  %1684 = vmatprep.subr.mxu0 0.0
  %1685 = vmatpush1.msra.mxu0 0.0
  %1686 = vmatprep.subr.mxu0 0.0
  %1687 = vmatpush1.msra.mxu0 0.0
  %1688 = vmatprep.subr.mxu0 0.0
  %1689 = vmatpush1.msra.mxu0 0.0
  %1690 = vmatprep.subr.mxu0 0.0
  %1691 = vmatpush1.msra.mxu0 0.0
  %1692 = vmatprep.subr.mxu0 0.0
  %1693 = vmatpush1.msra.mxu0 0.0
  %1694 = vmatprep.subr.mxu0 0.0
  %1695 = vmatpush1.msra.mxu0 0.0
  %1696 = vmatprep.subr.mxu0 0.0
  %1697 = vmatpush1.msra.mxu0 0.0
  %1698 = vmatprep.subr.mxu0 0.0
  %1699 = vmatpush1.msra.mxu0 0.0
  %1700 = vmatprep.subr.mxu0 0.0
  %1701 = vmatpush1.msra.mxu0 0.0
  %1702 = vmatprep.subr.mxu0 0.0
  %1703 = vmatpush1.msra.mxu0 0.0
  %1704 = vmatprep.subr.mxu0 0.0
  %1705 = vmatpush1.msra.mxu0 0.0
  %1706 = vmatprep.subr.mxu0 0.0
  %1707 = vmatpush1.msra.mxu0 0.0
  %1708 = vmatprep.subr.mxu0 0.0
  %1709 = vmatpush1.msra.mxu0 0.0
  %1710 = vmatprep.subr.mxu0 0.0
  %1711 = vmatpush1.msra.mxu0 0.0
  %1712 = vmatprep.subr.mxu0 0.0
  %1713 = vmatpush1.msra.mxu0 0.0
  %1714 = vmatprep.subr.mxu0 0.0
  %1715 = vmatpush1.msra.mxu0 0.0
  %1716 = vmatprep.subr.mxu0 0.0
  %1717 = vmatpush1.msra.mxu0 0.0
  %1718 = vmatprep.subr.mxu0 0.0
  %1719 = vmatpush1.msra.mxu0 0.0
  %1720 = vmatprep.subr.mxu0 0.0
  %1721 = vmatpush1.msra.mxu0 0.0
  %1722 = vmatprep.subr.mxu0 0.0
  %1723 = vmatpush1.msra.mxu0 0.0
  %1724 = vmatprep.subr.mxu0 0.0
  %1725 = vmatpush1.msra.mxu0 0.0
  %1726 = vmatprep.mubr.f32.mxu0 0.0
  %1727 = vmatmul.mubr.f32.gmra.mrb[0].mxu0 %v1660
  %v1728 = vpop.f32.mrb[0].mxu0
  %v1729 = vadd.f32 %v1118, %v1728
  %v1730 = vpop.f32.mrb[0].mxu0
  %1731 = vdwg.mxu0
  %v1733 = vrot.slane %v1729, 4
  %v1735 = vadd.f32 %v220, %v1733
  %v1736 = vxor.u32 %v1735, 2147483648
  %v1737 = vmul.f32 %v1736, 1.442695
  %v1738 = vpow.pop %v1737
  %v1739 = vadd.f32 %v1738, 1.0
  %v1740 = vrcp.pop %v1739
  %v1741 = vmul.f32 1.0, %v1740
  %1742 = vrot.lane.b32.xlu0 %v1733, 64
  %v1743 = vpop.permute.xlu0 %1742
  %v1745 = vmul.f32 %v1741, %v1743
  %1747 = vrot.lane.b32.xlu0 %v1745, 64
  %v1748 = vpop.permute.xlu0 %1747
  %v1750 = vadd.f32 %v220, %v1748
  %v1751 = vtanh.pop %v1750
  %v1752 = vsub.f32 1.0, %v1741
  %1754 = vrot.lane.b32.xlu0 %v1751, 96
  %v1755 = vpop.permute.xlu0 %1754
  %v1757 = vmul.f32 %v1752, %v1755
  %v1758 = vrot.slane %v1651, 2
  %v1760 = vmul.f32 %v1741, %v1758
  %v1761 = vadd.f32 %v1757, %v1760
  %1763 = vrot.lane.b32.xlu0 %v1761, 96
  %v1764 = vpop.permute.xlu0 %1763
  %1766 = vst.msk [vmem:[%s15] sm:$0x30] %vm567, %v1764
  %v1767 = vrot.slane %v1761, 4
  %1768 = vrot.lane.b32.xlu0 %v1767, 96
  %v1769 = vpop.permute.xlu0 %1768
  %v1770 = vsel %vm244, %v1769, 0
  %1772 = vmatprep.subr.mxu0 0.0
  %1773 = vmatpush1.msra.mxu0 %v233
  %1774 = vmatprep.subr.mxu0 0.0
  %1775 = vmatpush1.msra.mxu0 %v234
  %1776 = vmatprep.subr.mxu0 0.0
  %1777 = vmatpush1.msra.mxu0 %v235
  %1778 = vmatprep.subr.mxu0 0.0
  %1779 = vmatpush1.msra.mxu0 %v236
  %1780 = vmatprep.subr.mxu0 0.0
  %1781 = vmatpush1.msra.mxu0 0.0
  %1782 = vmatprep.subr.mxu0 0.0
  %1783 = vmatpush1.msra.mxu0 0.0
  %1784 = vmatprep.subr.mxu0 0.0
  %1785 = vmatpush1.msra.mxu0 0.0
  %1786 = vmatprep.subr.mxu0 0.0
  %1787 = vmatpush1.msra.mxu0 0.0
  %1788 = vmatprep.subr.mxu0 0.0
  %1789 = vmatpush1.msra.mxu0 0.0
  %1790 = vmatprep.subr.mxu0 0.0
  %1791 = vmatpush1.msra.mxu0 0.0
  %1792 = vmatprep.subr.mxu0 0.0
  %1793 = vmatpush1.msra.mxu0 0.0
  %1794 = vmatprep.subr.mxu0 0.0
  %1795 = vmatpush1.msra.mxu0 0.0
  %1796 = vmatprep.subr.mxu0 0.0
  %1797 = vmatpush1.msra.mxu0 0.0
  %1798 = vmatprep.subr.mxu0 0.0
  %1799 = vmatpush1.msra.mxu0 0.0
  %1800 = vmatprep.subr.mxu0 0.0
  %1801 = vmatpush1.msra.mxu0 0.0
  %1802 = vmatprep.subr.mxu0 0.0
  %1803 = vmatpush1.msra.mxu0 0.0
  %1804 = vmatprep.subr.mxu0 0.0
  %1805 = vmatpush1.msra.mxu0 0.0
  %1806 = vmatprep.subr.mxu0 0.0
  %1807 = vmatpush1.msra.mxu0 0.0
  %1808 = vmatprep.subr.mxu0 0.0
  %1809 = vmatpush1.msra.mxu0 0.0
  %1810 = vmatprep.subr.mxu0 0.0
  %1811 = vmatpush1.msra.mxu0 0.0
  %1812 = vmatprep.subr.mxu0 0.0
  %1813 = vmatpush1.msra.mxu0 0.0
  %1814 = vmatprep.subr.mxu0 0.0
  %1815 = vmatpush1.msra.mxu0 0.0
  %1816 = vmatprep.subr.mxu0 0.0
  %1817 = vmatpush1.msra.mxu0 0.0
  %1818 = vmatprep.subr.mxu0 0.0
  %1819 = vmatpush1.msra.mxu0 0.0
  %1820 = vmatprep.subr.mxu0 0.0
  %1821 = vmatpush1.msra.mxu0 0.0
  %1822 = vmatprep.subr.mxu0 0.0
  %1823 = vmatpush1.msra.mxu0 0.0
  %1824 = vmatprep.subr.mxu0 0.0
  %1825 = vmatpush1.msra.mxu0 0.0
  %1826 = vmatprep.subr.mxu0 0.0
  %1827 = vmatpush1.msra.mxu0 0.0
  %1828 = vmatprep.subr.mxu0 0.0
  %1829 = vmatpush1.msra.mxu0 0.0
  %1830 = vmatprep.subr.mxu0 0.0
  %1831 = vmatpush1.msra.mxu0 0.0
  %1832 = vmatprep.subr.mxu0 0.0
  %1833 = vmatpush1.msra.mxu0 0.0
  %1834 = vmatprep.subr.mxu0 0.0
  %1835 = vmatpush1.msra.mxu0 0.0
  %1836 = vmatprep.mubr.f32.mxu0 0.0
  %1837 = vmatmul.mubr.f32.gmra.mrb[0].mxu0 %v1770
  %v1838 = vpop.f32.mrb[0].mxu0
  %v1839 = vadd.f32 %v1118, %v1838
  %v1840 = vpop.f32.mrb[0].mxu0
  %1841 = vdwg.mxu0
  %v1843 = vrot.slane %v1839, 6
  %v1845 = vadd.f32 %v220, %v1843
  %v1846 = vxor.u32 %v1845, 2147483648
  %v1847 = vmul.f32 %v1846, 1.442695
  %v1848 = vpow.pop %v1847
  %v1849 = vadd.f32 %v1848, 1.0
  %v1850 = vrcp.pop %v1849
  %v1851 = vmul.f32 1.0, %v1850
  %1852 = vrot.lane.b32.xlu0 %v1843, 64
  %v1853 = vpop.permute.xlu0 %1852
  %v1855 = vmul.f32 %v1851, %v1853
  %1857 = vrot.lane.b32.xlu0 %v1855, 64
  %v1858 = vpop.permute.xlu0 %1857
  %v1860 = vadd.f32 %v220, %v1858
  %v1861 = vtanh.pop %v1860
  %v1862 = vsub.f32 1.0, %v1851
  %1864 = vrot.lane.b32.xlu0 %v1861, 96
  %v1865 = vpop.permute.xlu0 %1864
  %v1867 = vmul.f32 %v1862, %v1865
  %v1868 = vrot.slane %v1761, 2
  %v1870 = vmul.f32 %v1851, %v1868
  %v1871 = vadd.f32 %v1867, %v1870
  %1873 = vrot.lane.b32.xlu0 %v1871, 96
  %v1874 = vpop.permute.xlu0 %1873
  %1876 = vst.msk [vmem:[%s15] sm:$0xc] %vm456, %v1874
  %v1877 = vrot.slane %v1871, 2
  %1878 = vrot.lane.b32.xlu0 %v1877, 96
  %v1879 = vpop.permute.xlu0 %1878
  %v1880 = vsel %vm244, %v1879, 0
  %1882 = vmatprep.subr.mxu0 0.0
  %1883 = vmatpush1.msra.mxu0 %v233
  %1884 = vmatprep.subr.mxu0 0.0
  %1885 = vmatpush1.msra.mxu0 %v234
  %1886 = vmatprep.subr.mxu0 0.0
  %1887 = vmatpush1.msra.mxu0 %v235
  %1888 = vmatprep.subr.mxu0 0.0
  %1889 = vmatpush1.msra.mxu0 %v236
  %1890 = vmatprep.subr.mxu0 0.0
  %1891 = vmatpush1.msra.mxu0 0.0
  %1892 = vmatprep.subr.mxu0 0.0
  %1893 = vmatpush1.msra.mxu0 0.0
  %1894 = vmatprep.subr.mxu0 0.0
  %1895 = vmatpush1.msra.mxu0 0.0
  %1896 = vmatprep.subr.mxu0 0.0
  %1897 = vmatpush1.msra.mxu0 0.0
  %1898 = vmatprep.subr.mxu0 0.0
  %1899 = vmatpush1.msra.mxu0 0.0
  %1900 = vmatprep.subr.mxu0 0.0
  %1901 = vmatpush1.msra.mxu0 0.0
  %1902 = vmatprep.subr.mxu0 0.0
  %1903 = vmatpush1.msra.mxu0 0.0
  %1904 = vmatprep.subr.mxu0 0.0
  %1905 = vmatpush1.msra.mxu0 0.0
  %1906 = vmatprep.subr.mxu0 0.0
  %1907 = vmatpush1.msra.mxu0 0.0
  %1908 = vmatprep.subr.mxu0 0.0
  %1909 = vmatpush1.msra.mxu0 0.0
  %1910 = vmatprep.subr.mxu0 0.0
  %1911 = vmatpush1.msra.mxu0 0.0
  %1912 = vmatprep.subr.mxu0 0.0
  %1913 = vmatpush1.msra.mxu0 0.0
  %1914 = vmatprep.subr.mxu0 0.0
  %1915 = vmatpush1.msra.mxu0 0.0
  %1916 = vmatprep.subr.mxu0 0.0
  %1917 = vmatpush1.msra.mxu0 0.0
  %1918 = vmatprep.subr.mxu0 0.0
  %1919 = vmatpush1.msra.mxu0 0.0
  %1920 = vmatprep.subr.mxu0 0.0
  %1921 = vmatpush1.msra.mxu0 0.0
  %1922 = vmatprep.subr.mxu0 0.0
  %1923 = vmatpush1.msra.mxu0 0.0
  %1924 = vmatprep.subr.mxu0 0.0
  %1925 = vmatpush1.msra.mxu0 0.0
  %1926 = vmatprep.subr.mxu0 0.0
  %1927 = vmatpush1.msra.mxu0 0.0
  %1928 = vmatprep.subr.mxu0 0.0
  %1929 = vmatpush1.msra.mxu0 0.0
  %1930 = vmatprep.subr.mxu0 0.0
  %1931 = vmatpush1.msra.mxu0 0.0
  %1932 = vmatprep.subr.mxu0 0.0
  %1933 = vmatpush1.msra.mxu0 0.0
  %1934 = vmatprep.subr.mxu0 0.0
  %1935 = vmatpush1.msra.mxu0 0.0
  %1936 = vmatprep.subr.mxu0 0.0
  %1937 = vmatpush1.msra.mxu0 0.0
  %1938 = vmatprep.subr.mxu0 0.0
  %1939 = vmatpush1.msra.mxu0 0.0
  %1940 = vmatprep.subr.mxu0 0.0
  %1941 = vmatpush1.msra.mxu0 0.0
  %1942 = vmatprep.subr.mxu0 0.0
  %1943 = vmatpush1.msra.mxu0 0.0
  %1944 = vmatprep.subr.mxu0 0.0
  %1945 = vmatpush1.msra.mxu0 0.0
  %1946 = vmatprep.mubr.f32.mxu0 0.0
  %1947 = vmatmul.mubr.f32.gmra.mrb[0].mxu0 %v1880
  %v1948 = vpop.f32.mrb[0].mxu0
  %v1949 = vadd.f32 %v1118, %v1948
  %v1950 = vpop.f32.mrb[0].mxu0
  %1951 = vdwg.mxu0
  %v1952 = vadd.f32 %v220, %v1949
  %v1953 = vxor.u32 %v1952, 2147483648
  %v1954 = vmul.f32 %v1953, 1.442695
  %v1955 = vpow.pop %v1954
  %v1956 = vadd.f32 %v1955, 1.0
  %v1957 = vrcp.pop %v1956
  %v1958 = vmul.f32 1.0, %v1957
  %1960 = vrot.lane.b32.xlu0 %v1949, 64
  %v1961 = vpop.permute.xlu0 %1960
  %v1963 = vmul.f32 %v1958, %v1961
  %1965 = vrot.lane.b32.xlu0 %v1963, 64
  %v1966 = vpop.permute.xlu0 %1965
  %v1968 = vadd.f32 %v220, %v1966
  %v1969 = vtanh.pop %v1968
  %v1970 = vsub.f32 1.0, %v1958
  %1972 = vrot.lane.b32.xlu0 %v1969, 96
  %v1973 = vpop.permute.xlu0 %1972
  %v1975 = vmul.f32 %v1970, %v1973
  %v1977 = vmul.f32 %v1958, %v1877
  %v1978 = vadd.f32 %v1975, %v1977
  %1980 = vrot.lane.b32.xlu0 %v1978, 96
  %v1981 = vpop.permute.xlu0 %1980
  %1983 = vst.msk [vmem:[%s15] sm:$0x3] %vm348, %v1981
  %v1984 = vld [vmem:[%s14] sm:$0xff]
  %v1985 = vld [vmem:[%s14 + $0x8] sm:$0xff]
  %v1986 = vld [vmem:[%s12] sm:$0xff]
  %v1987 = vld [vmem:[%s12 + $0x8] sm:$0xff]
  %v1988 = vld [vmem:[%s12 + $0x10] sm:$0xff]
  %v1989 = vld [vmem:[%s12 + $0x18] sm:$0xff]
  %v1990 = vld [vmem:[%s15] sm:$0xff]
  %v1991 = vld [vmem:[%s15 + $0x8] sm:$0xff]
  %v1992 = vld [vmem:[%s13] sm:$0xff]
  %v1993 = vld [vmem:[%s13 + $0x8] sm:$0xff]
  %v1994 = vld [vmem:[%s13 + $0x10] sm:$0xff]
  %v1995 = vld [vmem:[%s13 + $0x18] sm:$0xff]
  %v1997 = vsel %vm244, %v1990, 0
  %v2000 = vsel %vm244, %v1991, 0
  %2002 = vmatprep.subr.mxu0 0.0
  %2003 = vmatpush1.msra.mxu0 %v1992
  %2004 = vmatprep.subr.mxu0 0.0
  %2005 = vmatpush1.msra.mxu0 %v1993
  %2006 = vmatprep.subr.mxu0 0.0
  %2007 = vmatpush1.msra.mxu0 %v1994
  %2008 = vmatprep.subr.mxu0 0.0
  %2009 = vmatpush1.msra.mxu0 %v1995
  %2010 = vmatprep.subr.mxu0 0.0
  %2011 = vmatpush1.msra.mxu0 0.0
  %2012 = vmatprep.subr.mxu0 0.0
  %2013 = vmatpush1.msra.mxu0 0.0
  %2014 = vmatprep.subr.mxu0 0.0
  %2015 = vmatpush1.msra.mxu0 0.0
  %2016 = vmatprep.subr.mxu0 0.0
  %2017 = vmatpush1.msra.mxu0 0.0
  %2018 = vmatprep.subr.mxu0 0.0
  %2019 = vmatpush1.msra.mxu0 0.0
  %2020 = vmatprep.subr.mxu0 0.0
  %2021 = vmatpush1.msra.mxu0 0.0
  %2022 = vmatprep.subr.mxu0 0.0
  %2023 = vmatpush1.msra.mxu0 0.0
  %2024 = vmatprep.subr.mxu0 0.0
  %2025 = vmatpush1.msra.mxu0 0.0
  %2026 = vmatprep.subr.mxu0 0.0
  %2027 = vmatpush1.msra.mxu0 0.0
  %2028 = vmatprep.subr.mxu0 0.0
  %2029 = vmatpush1.msra.mxu0 0.0
  %2030 = vmatprep.subr.mxu0 0.0
  %2031 = vmatpush1.msra.mxu0 0.0
  %2032 = vmatprep.subr.mxu0 0.0
  %2033 = vmatpush1.msra.mxu0 0.0
  %2034 = vmatprep.subr.mxu0 0.0
  %2035 = vmatpush1.msra.mxu0 0.0
  %2036 = vmatprep.subr.mxu0 0.0
  %2037 = vmatpush1.msra.mxu0 0.0
  %2038 = vmatprep.subr.mxu0 0.0
  %2039 = vmatpush1.msra.mxu0 0.0
  %2040 = vmatprep.subr.mxu0 0.0
  %2041 = vmatpush1.msra.mxu0 0.0
  %2042 = vmatprep.subr.mxu0 0.0
  %2043 = vmatpush1.msra.mxu0 0.0
  %2044 = vmatprep.subr.mxu0 0.0
  %2045 = vmatpush1.msra.mxu0 0.0
  %2046 = vmatprep.subr.mxu0 0.0
  %2047 = vmatpush1.msra.mxu0 0.0
  %2048 = vmatprep.subr.mxu0 0.0
  %2049 = vmatpush1.msra.mxu0 0.0
  %2050 = vmatprep.subr.mxu0 0.0
  %2051 = vmatpush1.msra.mxu0 0.0
  %2052 = vmatprep.subr.mxu0 0.0
  %2053 = vmatpush1.msra.mxu0 0.0
  %2054 = vmatprep.subr.mxu0 0.0
  %2055 = vmatpush1.msra.mxu0 0.0
  %2056 = vmatprep.subr.mxu0 0.0
  %2057 = vmatpush1.msra.mxu0 0.0
  %2058 = vmatprep.subr.mxu0 0.0
  %2059 = vmatpush1.msra.mxu0 0.0
  %2060 = vmatprep.subr.mxu0 0.0
  %2061 = vmatpush1.msra.mxu0 0.0
  %2062 = vmatprep.subr.mxu0 0.0
  %2063 = vmatpush1.msra.mxu0 0.0
  %2064 = vmatprep.subr.mxu0 0.0
  %2065 = vmatpush1.msra.mxu0 0.0
  %2066 = vmatprep.mubr.f32.mxu0 0.0
  %2067 = vmatmul.mubr.f32.gmra.mrb[0].mxu0 %v1997
  %v2068 = vpop.f32.mrb[0].mxu0
  %v2069 = vadd.f32 0.0, %v2068
  %v2070 = vpop.f32.mrb[0].mxu0
  %2071 = vmatprep.mubr.f32.mxu0 0.0
  %2072 = vmatmul.mubr.f32.gmra.mrb[0].mxu0 %v2000
  %v2073 = vpop.f32.mrb[0].mxu0
  %v2074 = vadd.f32 0.0, %v2073
  %v2075 = vpop.f32.mrb[0].mxu0
  %2076 = vdwg.mxu0
  %v2078 = vsel %vm244, %v1984, 0
  %v2081 = vsel %vm244, %v1985, 0
  %2083 = vmatprep.subr.mxu0 0.0
  %2084 = vmatpush1.msra.mxu0 %v1986
  %2085 = vmatprep.subr.mxu0 0.0
  %2086 = vmatpush1.msra.mxu0 %v1987
  %2087 = vmatprep.subr.mxu0 0.0
  %2088 = vmatpush1.msra.mxu0 %v1988
  %2089 = vmatprep.subr.mxu0 0.0
  %2090 = vmatpush1.msra.mxu0 %v1989
  %2091 = vmatprep.subr.mxu0 0.0
  %2092 = vmatpush1.msra.mxu0 0.0
  %2093 = vmatprep.subr.mxu0 0.0
  %2094 = vmatpush1.msra.mxu0 0.0
  %2095 = vmatprep.subr.mxu0 0.0
  %2096 = vmatpush1.msra.mxu0 0.0
  %2097 = vmatprep.subr.mxu0 0.0
  %2098 = vmatpush1.msra.mxu0 0.0
  %2099 = vmatprep.subr.mxu0 0.0
  %2100 = vmatpush1.msra.mxu0 0.0
  %2101 = vmatprep.subr.mxu0 0.0
  %2102 = vmatpush1.msra.mxu0 0.0
  %2103 = vmatprep.subr.mxu0 0.0
  %2104 = vmatpush1.msra.mxu0 0.0
  %2105 = vmatprep.subr.mxu0 0.0
  %2106 = vmatpush1.msra.mxu0 0.0
  %2107 = vmatprep.subr.mxu0 0.0
  %2108 = vmatpush1.msra.mxu0 0.0
  %2109 = vmatprep.subr.mxu0 0.0
  %2110 = vmatpush1.msra.mxu0 0.0
  %2111 = vmatprep.subr.mxu0 0.0
  %2112 = vmatpush1.msra.mxu0 0.0
  %2113 = vmatprep.subr.mxu0 0.0
  %2114 = vmatpush1.msra.mxu0 0.0
  %2115 = vmatprep.subr.mxu0 0.0
  %2116 = vmatpush1.msra.mxu0 0.0
  %2117 = vmatprep.subr.mxu0 0.0
  %2118 = vmatpush1.msra.mxu0 0.0
  %2119 = vmatprep.subr.mxu0 0.0
  %2120 = vmatpush1.msra.mxu0 0.0
  %2121 = vmatprep.subr.mxu0 0.0
  %2122 = vmatpush1.msra.mxu0 0.0
  %2123 = vmatprep.subr.mxu0 0.0
  %2124 = vmatpush1.msra.mxu0 0.0
  %2125 = vmatprep.subr.mxu0 0.0
  %2126 = vmatpush1.msra.mxu0 0.0
  %2127 = vmatprep.subr.mxu0 0.0
  %2128 = vmatpush1.msra.mxu0 0.0
  %2129 = vmatprep.subr.mxu0 0.0
  %2130 = vmatpush1.msra.mxu0 0.0
  %2131 = vmatprep.subr.mxu0 0.0
  %2132 = vmatpush1.msra.mxu0 0.0
  %2133 = vmatprep.subr.mxu0 0.0
  %2134 = vmatpush1.msra.mxu0 0.0
  %2135 = vmatprep.subr.mxu0 0.0
  %2136 = vmatpush1.msra.mxu0 0.0
  %2137 = vmatprep.subr.mxu0 0.0
  %2138 = vmatpush1.msra.mxu0 0.0
  %2139 = vmatprep.subr.mxu0 0.0
  %2140 = vmatpush1.msra.mxu0 0.0
  %2141 = vmatprep.subr.mxu0 0.0
  %2142 = vmatpush1.msra.mxu0 0.0
  %2143 = vmatprep.subr.mxu0 0.0
  %2144 = vmatpush1.msra.mxu0 0.0
  %2145 = vmatprep.subr.mxu0 0.0
  %2146 = vmatpush1.msra.mxu0 0.0
  %2147 = vmatprep.mubr.f32.mxu0 0.0
  %2148 = vmatmul.mubr.f32.gmra.mrb[0].mxu0 %v2078
  %v2149 = vpop.f32.mrb[0].mxu0
  %v2150 = vadd.f32 %v2069, %v2149
  %v2151 = vpop.f32.mrb[0].mxu0
  %2152 = vmatprep.mubr.f32.mxu0 0.0
  %2153 = vmatmul.mubr.f32.gmra.mrb[0].mxu0 %v2081
  %v2154 = vpop.f32.mrb[0].mxu0
  %v2155 = vadd.f32 %v2074, %v2154
  %v2156 = vpop.f32.mrb[0].mxu0
  %2157 = vdwg.mxu0
  %2158 = vst.msk [vmem:[%s16] sm:$0xff] %vm244, %v2150
  %2159 = vst.msk [vmem:[%s16 + $0x8] sm:$0xff] %vm244, %v2155
  %v2160 = vld [vmem:[%s9] sm:$0xff]
  %v2161 = vld [vmem:[%s9 + $0x8] sm:$0xff]
  %v2162 = vld [vmem:[%s9 + $0x10] sm:$0xff]
  %v2163 = vld [vmem:[%s9 + $0x18] sm:$0xff]
  %v2164 = vld [vmem:[%s10] sm:$0xff]
  %v2165 = vld [vmem:[%s10 + $0x8] sm:$0xff]
  %v2166 = vld [vmem:[%s10 + $0x10] sm:$0xff]
  %v2167 = vld [vmem:[%s10 + $0x18] sm:$0xff]
  %v2168 = vsel %vm244, %v1981, 0
  %2170 = vmatprep.subr.mxu0 0.0
  %2171 = vmatpush1.msra.mxu0 %v2164
  %2172 = vmatprep.subr.mxu0 0.0
  %2173 = vmatpush1.msra.mxu0 %v2165
  %2174 = vmatprep.subr.mxu0 0.0
  %2175 = vmatpush1.msra.mxu0 %v2166
  %2176 = vmatprep.subr.mxu0 0.0
  %2177 = vmatpush1.msra.mxu0 %v2167
  %2178 = vmatprep.subr.mxu0 0.0
  %2179 = vmatpush1.msra.mxu0 0.0
  %2180 = vmatprep.subr.mxu0 0.0
  %2181 = vmatpush1.msra.mxu0 0.0
  %2182 = vmatprep.subr.mxu0 0.0
  %2183 = vmatpush1.msra.mxu0 0.0
  %2184 = vmatprep.subr.mxu0 0.0
  %2185 = vmatpush1.msra.mxu0 0.0
  %2186 = vmatprep.subr.mxu0 0.0
  %2187 = vmatpush1.msra.mxu0 0.0
  %2188 = vmatprep.subr.mxu0 0.0
  %2189 = vmatpush1.msra.mxu0 0.0
  %2190 = vmatprep.subr.mxu0 0.0
  %2191 = vmatpush1.msra.mxu0 0.0
  %2192 = vmatprep.subr.mxu0 0.0
  %2193 = vmatpush1.msra.mxu0 0.0
  %2194 = vmatprep.subr.mxu0 0.0
  %2195 = vmatpush1.msra.mxu0 0.0
  %2196 = vmatprep.subr.mxu0 0.0
  %2197 = vmatpush1.msra.mxu0 0.0
  %2198 = vmatprep.subr.mxu0 0.0
  %2199 = vmatpush1.msra.mxu0 0.0
  %2200 = vmatprep.subr.mxu0 0.0
  %2201 = vmatpush1.msra.mxu0 0.0
  %2202 = vmatprep.subr.mxu0 0.0
  %2203 = vmatpush1.msra.mxu0 0.0
  %2204 = vmatprep.subr.mxu0 0.0
  %2205 = vmatpush1.msra.mxu0 0.0
  %2206 = vmatprep.subr.mxu0 0.0
  %2207 = vmatpush1.msra.mxu0 0.0
  %2208 = vmatprep.subr.mxu0 0.0
  %2209 = vmatpush1.msra.mxu0 0.0
  %2210 = vmatprep.subr.mxu0 0.0
  %2211 = vmatpush1.msra.mxu0 0.0
  %2212 = vmatprep.subr.mxu0 0.0
  %2213 = vmatpush1.msra.mxu0 0.0
  %2214 = vmatprep.subr.mxu0 0.0
  %2215 = vmatpush1.msra.mxu0 0.0
  %2216 = vmatprep.subr.mxu0 0.0
  %2217 = vmatpush1.msra.mxu0 0.0
  %2218 = vmatprep.subr.mxu0 0.0
  %2219 = vmatpush1.msra.mxu0 0.0
  %2220 = vmatprep.subr.mxu0 0.0
  %2221 = vmatpush1.msra.mxu0 0.0
  %2222 = vmatprep.subr.mxu0 0.0
  %2223 = vmatpush1.msra.mxu0 0.0
  %2224 = vmatprep.subr.mxu0 0.0
  %2225 = vmatpush1.msra.mxu0 0.0
  %2226 = vmatprep.subr.mxu0 0.0
  %2227 = vmatpush1.msra.mxu0 0.0
  %2228 = vmatprep.subr.mxu0 0.0
  %2229 = vmatpush1.msra.mxu0 0.0
  %2230 = vmatprep.subr.mxu0 0.0
  %2231 = vmatpush1.msra.mxu0 0.0
  %2232 = vmatprep.subr.mxu0 0.0
  %2233 = vmatpush1.msra.mxu0 0.0
  %2234 = vmatprep.mubr.f32.mxu0 0.0
  %2235 = vmatmul.mubr.f32.gmra.mrb[0].mxu0 %v2168
  %v2236 = vpop.f32.mrb[0].mxu0
  %v2237 = vadd.f32 0.0, %v2236
  %v2238 = vpop.f32.mrb[0].mxu0
  %2239 = vdwg.mxu0
  %v2240 = vrot.slane %v1108, 6
  %2241 = vrot.lane.b32.xlu0 %v2240, 96
  %v2242 = vpop.permute.xlu0 %2241
  %v2243 = vsel %vm244, %v2242, 0
  %2245 = vmatprep.subr.mxu0 0.0
  %2246 = vmatpush1.msra.mxu0 %v2160
  %2247 = vmatprep.subr.mxu0 0.0
  %2248 = vmatpush1.msra.mxu0 %v2161
  %2249 = vmatprep.subr.mxu0 0.0
  %2250 = vmatpush1.msra.mxu0 %v2162
  %2251 = vmatprep.subr.mxu0 0.0
  %2252 = vmatpush1.msra.mxu0 %v2163
  %2253 = vmatprep.subr.mxu0 0.0
  %2254 = vmatpush1.msra.mxu0 0.0
  %2255 = vmatprep.subr.mxu0 0.0
  %2256 = vmatpush1.msra.mxu0 0.0
  %2257 = vmatprep.subr.mxu0 0.0
  %2258 = vmatpush1.msra.mxu0 0.0
  %2259 = vmatprep.subr.mxu0 0.0
  %2260 = vmatpush1.msra.mxu0 0.0
  %2261 = vmatprep.subr.mxu0 0.0
  %2262 = vmatpush1.msra.mxu0 0.0
  %2263 = vmatprep.subr.mxu0 0.0
  %2264 = vmatpush1.msra.mxu0 0.0
  %2265 = vmatprep.subr.mxu0 0.0
  %2266 = vmatpush1.msra.mxu0 0.0
  %2267 = vmatprep.subr.mxu0 0.0
  %2268 = vmatpush1.msra.mxu0 0.0
  %2269 = vmatprep.subr.mxu0 0.0
  %2270 = vmatpush1.msra.mxu0 0.0
  %2271 = vmatprep.subr.mxu0 0.0
  %2272 = vmatpush1.msra.mxu0 0.0
  %2273 = vmatprep.subr.mxu0 0.0
  %2274 = vmatpush1.msra.mxu0 0.0
  %2275 = vmatprep.subr.mxu0 0.0
  %2276 = vmatpush1.msra.mxu0 0.0
  %2277 = vmatprep.subr.mxu0 0.0
  %2278 = vmatpush1.msra.mxu0 0.0
  %2279 = vmatprep.subr.mxu0 0.0
  %2280 = vmatpush1.msra.mxu0 0.0
  %2281 = vmatprep.subr.mxu0 0.0
  %2282 = vmatpush1.msra.mxu0 0.0
  %2283 = vmatprep.subr.mxu0 0.0
  %2284 = vmatpush1.msra.mxu0 0.0
  %2285 = vmatprep.subr.mxu0 0.0
  %2286 = vmatpush1.msra.mxu0 0.0
  %2287 = vmatprep.subr.mxu0 0.0
  %2288 = vmatpush1.msra.mxu0 0.0
  %2289 = vmatprep.subr.mxu0 0.0
  %2290 = vmatpush1.msra.mxu0 0.0
  %2291 = vmatprep.subr.mxu0 0.0
  %2292 = vmatpush1.msra.mxu0 0.0
  %2293 = vmatprep.subr.mxu0 0.0
  %2294 = vmatpush1.msra.mxu0 0.0
  %2295 = vmatprep.subr.mxu0 0.0
  %2296 = vmatpush1.msra.mxu0 0.0
  %2297 = vmatprep.subr.mxu0 0.0
  %2298 = vmatpush1.msra.mxu0 0.0
  %2299 = vmatprep.subr.mxu0 0.0
  %2300 = vmatpush1.msra.mxu0 0.0
  %2301 = vmatprep.subr.mxu0 0.0
  %2302 = vmatpush1.msra.mxu0 0.0
  %2303 = vmatprep.subr.mxu0 0.0
  %2304 = vmatpush1.msra.mxu0 0.0
  %2305 = vmatprep.subr.mxu0 0.0
  %2306 = vmatpush1.msra.mxu0 0.0
  %2307 = vmatprep.subr.mxu0 0.0
  %2308 = vmatpush1.msra.mxu0 0.0
  %2309 = vmatprep.mubr.f32.mxu0 0.0
  %2310 = vmatmul.mubr.f32.gmra.mrb[0].mxu0 %v2243
  %v2311 = vpop.f32.mrb[0].mxu0
  %v2312 = vadd.f32 %v2237, %v2311
  %v2313 = vpop.f32.mrb[0].mxu0
  %2314 = vdwg.mxu0
  %v2315 = vld [vmem:[%s11] sm:$0x1]
  %v2317 = vlaneseq
  %v2318 = vshrl.u32 %v2317, 7
  %v2319 = vsub.s32 0, %v2318
  %v2320 = vrot.slane %v2315, %v2319
  %v2322 = vadd.f32 %v2312, %v2320
  %v2323 = vtanh.pop %v2322
  %2324 = vst.msk [vmem:[%s17] sm:$0x3] %vm348, %v2323
  // Predicated region
  $region58: #{_seq2seq_forward.2} parent=0 // pred_check
    _
  $region59: #{_seq2seq_forward.2} parent=0 // pred_check_branch
    %2326 = sbr.rel (0) target = $region61
  $region60: #{_seq2seq_forward.2} parent=0 // pred_region
    _
  $region61: #{_seq2seq_forward.2} parent=0 // pred_fallthru
    _
  // Predicated region
  $region62: #{_seq2seq_forward.2} parent=0 // pred_check
    _
  $region63: #{_seq2seq_forward.2} parent=0 // pred_check_branch
    %2328 = sbr.rel (0) target = $region65
  $region64: #{_seq2seq_forward.2} parent=0 // pred_region
    _
  $region65: #{_seq2seq_forward.2} parent=0 // pred_fallthru
    _
  // Predicated region
  $region66: #{_seq2seq_forward.2} parent=0 // pred_check
    _
  $region67: #{_seq2seq_forward.2} parent=0 // pred_check_branch
    %2330 = sbr.rel (0) target = $region69
  $region68: #{_seq2seq_forward.2} parent=0 // pred_region
    _
  $region69: #{_seq2seq_forward.2} parent=0 // pred_fallthru
    _
  // Predicated region
  $region70: #{_seq2seq_forward.2} parent=0 // pred_check
    _
  $region71: #{_seq2seq_forward.2} parent=0 // pred_check_branch
    %2332 = sbr.rel (0) target = $region73
  $region72: #{_seq2seq_forward.2} parent=0 // pred_region
    _
  $region73: #{_seq2seq_forward.2} parent=0 // pred_fallthru
    _
  // Predicated region
  $region74: #{_seq2seq_forward.2} parent=0 // pred_check
    _
  $region75: #{_seq2seq_forward.2} parent=0 // pred_check_branch
    %2334 = sbr.rel (0) target = $region77
  $region76: #{_seq2seq_forward.2} parent=0 // pred_region
    _
  $region77: #{_seq2seq_forward.2} parent=0 // pred_fallthru
    _
  // Predicated region
  $region78: #{_seq2seq_forward.2} parent=0 // pred_check
    _
  $region79: #{_seq2seq_forward.2} parent=0 // pred_check_branch
    %2336 = sbr.rel (0) target = $region81
  $region80: #{_seq2seq_forward.2} parent=0 // pred_region
    _
  $region81: #{_seq2seq_forward.2} parent=0 // pred_fallthru
    _
  // Predicated region
  $region82: #{_seq2seq_forward.2} parent=0 // pred_check
    _
  $region83: #{_seq2seq_forward.2} parent=0 // pred_check_branch
    %2338 = sbr.rel (0) target = $region85
  $region84: #{_seq2seq_forward.2} parent=0 // pred_region
    _
  $region85: #{_seq2seq_forward.2} parent=0 // pred_fallthru
    _
  // Predicated region
  $region86: #{_seq2seq_forward.2} parent=0 // pred_check
    _
  $region87: #{_seq2seq_forward.2} parent=0 // pred_check_branch
    %2340 = sbr.rel (0) target = $region89
  $region88: #{_seq2seq_forward.2} parent=0 // pred_region
    _
  $region89: #{_seq2seq_forward.2} parent=0 // pred_fallthru
    _

</llo_original>
